<compile_context>
chip_gen: v5e
topology: v5e:2x2
jax: 0.10.0
libtpu: 0.0.40
codegen_flags: <defaults>
</compile_context>

<pallas_src>
import jax
import jax.numpy as jnp
from jax.experimental import pallas as pl
from jax.experimental.pallas import tpu as pltpu


def _round_up(v, m):
    return -(-v // m) * m


def _deconv_kernel(x_ref, c_ref, b_ref, o_ref):
    """One (batch, row-group-tile) grid step.

    x_ref: (Cin, TR, gW)        VMEM  lane-dense input tile (g rows folded into lanes)
    c_ref: (Cin, gW, Cout*g4W)  VMEM  weight-fused block-diagonal scatter matrices
                                      (resident: constant index_map)
    b_ref: (Cout,)              SMEM  bias
    o_ref: (Cout, TR, g4W)      VMEM  lane-dense output tile, already 2x2-interleaved
    """
    cin = x_ref.shape[0]
    cout, _, g4w = o_ref.shape

    # Cin contraction + 2x2 tap scatter fused into K=gW (==128) MXU matmuls.
    acc = jnp.dot(x_ref[0], c_ref[0], preferred_element_type=jnp.float32)
    for ci in range(1, cin):
        acc = acc + jnp.dot(x_ref[ci], c_ref[ci], preferred_element_type=jnp.float32)

    for co in range(cout):
        o_ref[co] = (acc[:, co * g4w:(co + 1) * g4w] + b_ref[co]).astype(o_ref.dtype)


def _vmem_capacity_bytes():
    try:
        return int(pltpu.get_tpu_info().vmem_capacity_bytes)
    except Exception:
        return 64 << 20  # conservative (v7x-sized) fallback


def _pick_group(rows, w):
    """Largest divisor g of rows with g*W <= 128 (lane-dense fold)."""
    target = max(1, 128 // w)
    g = 1
    for cand in range(1, min(target, rows) + 1):
        if rows % cand == 0:
            g = cand
    return g


def _pick_row_group_tile(n, n_groups, gw, g4w, cin, cout, x_itemsize, out_itemsize,
                         resident_bytes, budget_bytes):
    """Largest legal row-group tile fitting the budget; keeps >= 2 parallel grid
    steps (v7x has 2 TensorCores sharded over the 'parallel' axes)."""
    lanes_in = _round_up(gw, 128)
    lanes_out = _round_up(g4w, 128)
    lanes_acc = _round_up(cout * g4w, 128)

    def usage(tr):
        trp = _round_up(tr, 8)
        blocks = (2 * cin * trp * lanes_in * x_itemsize          # double-buffered in
                  + 2 * cout * trp * lanes_out * out_itemsize)   # double-buffered out
        temps = 3 * trp * lanes_acc * 4                          # acc + partial + staging
        return resident_bytes + blocks + temps

    cands = sorted({t for t in range(8, n_groups, 8) if n_groups % t == 0} | {n_groups})
    fitting = [t for t in cands if usage(t) <= budget_bytes]
    if not fitting:
        return None, usage(min(cands))
    best = max(fitting)
    if n * (n_groups // best) < 2:
        par = [t for t in fitting if n * (n_groups // t) >= 2]
        if par:
            best = max(par)
    return best, usage(best)


def single_deconv2d_block(x, weight, bias):
    """ConvTranspose3d(kernel=(1,2,2), stride=(1,2,2), padding=0).

    x:      (N, Cin, D, H, W)
    weight: (Cin, Cout, 1, 2, 2)   (PyTorch ConvTranspose3d layout)
    bias:   (Cout,)
    returns (N, Cout, D, 2H, 2W), dtype of x.
    """
    n, cin, d, h, w = x.shape
    cout = weight.shape[1]
    rows = d * h                      # kernel depth 1, stride_d 1 -> rows are interchangeable
    g = _pick_group(rows, w)
    gw = g * w
    g4w = 4 * gw
    n_groups = rows // g

    mat_dtype = jnp.bfloat16 if x.dtype == jnp.bfloat16 else jnp.float32
    mat_itemsize = jnp.dtype(mat_dtype).itemsize

    # Weight-fused block-diagonal scatter matrices, built once in the wrapper:
    #   C[ci][r*W+j, co*g4W + (4W*r + 2W*kh + 2j + kw)] = weight[ci, co, 0, kh, kw]
    lane_in = jnp.arange(gw)
    lane_out = jnp.arange(g4w)
    r_idx = lane_in // w
    j_idx = lane_in % w
    taps = []
    for kh in range(2):
        for kw in range(2):
            tgt = 4 * w * r_idx + 2 * w * kh + 2 * j_idx + kw
            taps.append((lane_out[None, :] == tgt[:, None]).astype(jnp.float32))
    scat = jnp.stack(taps, axis=0).reshape(2, 2, gw, g4w)         # [kh, kw, l, m]
    w2 = weight[:, :, 0].astype(jnp.float32)                       # (Cin, Cout, 2, 2)
    cmat = jnp.einsum("copq,pqlm->clom", w2, scat)                  # (Cin, gW, Cout, g4W)
    cmat = cmat.reshape(cin, gw, cout * g4w).astype(mat_dtype)
    b_flat = bias.astype(jnp.float32)

    # Generation-aware VMEM budget (v7x: 64 MiB physical; v5e/v6e: 128 MiB).
    cap = _vmem_capacity_bytes()
    budget = min(48 << 20, (3 * cap) // 8)
    resident = 2 * cin * _round_up(gw, 8) * _round_up(cout * g4w, 128) * mat_itemsize

    itemsize = jnp.dtype(x.dtype).itemsize
    tr, est = _pick_row_group_tile(n, n_groups, gw, g4w, cin, cout,
                                   itemsize, itemsize, resident, budget)
    if tr is None:
        # TODO(synk): add an MXU channel-contraction path (weights as a (Cin, Cout*4)
        # VMEM operand) for channel counts where the fused scatter matrices no longer
        # fit VMEM; this fused path targets the decoder's small-channel regime.
        raise NotImplementedError(
            f"single_deconv2d_block: fused-scatter path does not fit VMEM for "
            f"Cin={cin}, Cout={cout}, W={w}")

    # Metadata-only reshape; no HBM layout passes.
    x_g = x.reshape(n, cin, n_groups, gw)

    vmem_limit = int(min(cap - (4 << 20), max(est + (8 << 20), 32 << 20)))
    flops = 2 * n * cin * cout * rows * w * 4
    out_nbytes = n * cout * rows * 4 * w * itemsize
    in_nbytes = (n * cin * rows * w * itemsize
                 + cin * gw * cout * g4w * mat_itemsize + cout * 4)
    cost = pl.CostEstimate(flops=int(flops), transcendentals=0,
                           bytes_accessed=int(in_nbytes + out_nbytes))

    out = pl.pallas_call(
        _deconv_kernel,
        out_shape=jax.ShapeDtypeStruct((n, cout, n_groups, g4w), x.dtype),
        grid=(n, n_groups // tr),
        in_specs=[
            pl.BlockSpec((None, cin, tr, gw), lambda i, q: (i, 0, q, 0)),
            pl.BlockSpec((cin, gw, cout * g4w), lambda i, q: (0, 0, 0)),  # resident
            pl.BlockSpec(memory_space=pltpu.MemorySpace.SMEM),
        ],
        out_specs=pl.BlockSpec((None, cout, tr, g4w), lambda i, q: (i, 0, q, 0)),
        compiler_params=pltpu.CompilerParams(
            dimension_semantics=("parallel", "parallel"),
            vmem_limit_bytes=vmem_limit),
        cost_estimate=cost,
    )(x_g, cmat, b_flat)

    # (N, Cout, rows/g, g*4W) row-major == (N, Cout, D, 2H, 2W) row-major (free reshape).
    return out.reshape(n, cout, d, 2 * h, 2 * w)


def _reference(x, weight, bias):
    """Pure-JAX (XLA) reference of the same ConvTranspose3d."""
    n, cin, d, h, w = x.shape
    cout = weight.shape[1]
    w2 = weight[:, :, 0]  # (Cin, Cout, 2, 2)
    y = jnp.einsum("ncdhw,copq->nodhpwq", x, w2)
    y = y + bias[None, :, None, None, None, None, None]
    return y.reshape(n, cout, d, 2 * h, 2 * w)


if __name__ == "__main__":
    key = jax.random.PRNGKey(0)
    k_x, k_w, k_b = jax.random.split(key, 3)

    N, Cin, Cout, D, H, W = 2, 4, 8, 4, 8, 8
    x = jax.random.normal(k_x, (N, Cin, D, H, W), dtype=jnp.float32)
    weight = jax.random.normal(k_w, (Cin, Cout, 1, 2, 2), dtype=jnp.float32) * 0.1
    bias = jax.random.normal(k_b, (Cout,), dtype=jnp.float32) * 0.1

    out = jax.jit(single_deconv2d_block)(x, weight, bias)
    out = jax.block_until_ready(out)

    ref = _reference(x, weight, bias)
    assert out.shape == (N, Cout, D, 2 * H, 2 * W), out.shape
    err = float(jnp.max(jnp.abs(out - ref)))
    assert jnp.allclose(out, ref, atol=1e-4, rtol=1e-4), err

    print("KERNEL_OK")
</pallas_src>

<mosaic_0001>
module attributes {stable_mosaic.version = 11 : i64} {
  func.func @_deconv_kernel(%arg0: i32, %arg1: i32, %arg2: memref<1x4x2x128xf32, #tpu.memory_space<vmem>>, %arg3: memref<4x128x4096xf32, #tpu.memory_space<vmem>>, %arg4: memref<8xf32, #tpu.memory_space<smem>>, %arg5: memref<1x8x2x512xf32, #tpu.memory_space<vmem>>) attributes {dimension_semantics = [#tpu.dimension_semantics<parallel>, #tpu.dimension_semantics<parallel>], iteration_bounds = array<i64: 2, 1>, scalar_prefetch = 0 : i64, scratch_operands = 0 : i64, tpu.core_type = #tpu.core_type<tc>, window_params = [{transform_indices = @transform_0, window_bounds = array<i64: 1, 4, 2, 128>}, {pipeline_mode = #tpu.pipeline_mode<synchronous>, transform_indices = @transform_1, window_bounds = array<i64: 4, 128, 4096>}, {transform_indices = @transform_2, window_bounds = array<i64: 8>}, {transform_indices = @transform_3, window_bounds = array<i64: 1, 8, 2, 512>}]} {
    %c0 = arith.constant 0 : index
    %c0_0 = arith.constant 0 : index
    %c0_1 = arith.constant 0 : index
    %c0_2 = arith.constant 0 : index
    %0 = vector.load %arg2[%c0, %c0_0, %c0_1, %c0_2] : memref<1x4x2x128xf32, #tpu.memory_space<vmem>>, vector<1x1x2x128xf32>
    %1 = vector.shape_cast %0 : vector<1x1x2x128xf32> to vector<2x128xf32>
    %c0_3 = arith.constant 0 : index
    %c0_4 = arith.constant 0 : index
    %c0_5 = arith.constant 0 : index
    %2 = vector.load %arg3[%c0_3, %c0_4, %c0_5] : memref<4x128x4096xf32, #tpu.memory_space<vmem>>, vector<1x128x4096xf32>
    %3 = vector.shape_cast %2 : vector<1x128x4096xf32> to vector<128x4096xf32>
    %cst = arith.constant dense<0.000000e+00> : vector<2x4096xf32>
    %4 = tpu.matmul %1, %3, %cst {dimension_numbers = #tpu.dot_dimension_numbers<[1], [0], [0], [1], [0, 0, 1, 1], [], []>} : vector<2x128xf32>, vector<128x4096xf32>, vector<2x4096xf32> -> vector<2x4096xf32>
    %c0_6 = arith.constant 0 : index
    %c1 = arith.constant 1 : index
    %c0_7 = arith.constant 0 : index
    %c0_8 = arith.constant 0 : index
    %5 = vector.load %arg2[%c0_6, %c1, %c0_7, %c0_8] : memref<1x4x2x128xf32, #tpu.memory_space<vmem>>, vector<1x1x2x128xf32>
    %6 = vector.shape_cast %5 : vector<1x1x2x128xf32> to vector<2x128xf32>
    %c1_9 = arith.constant 1 : index
    %c0_10 = arith.constant 0 : index
    %c0_11 = arith.constant 0 : index
    %7 = vector.load %arg3[%c1_9, %c0_10, %c0_11] : memref<4x128x4096xf32, #tpu.memory_space<vmem>>, vector<1x128x4096xf32>
    %8 = vector.shape_cast %7 : vector<1x128x4096xf32> to vector<128x4096xf32>
    %cst_12 = arith.constant dense<0.000000e+00> : vector<2x4096xf32>
    %9 = tpu.matmul %6, %8, %cst_12 {dimension_numbers = #tpu.dot_dimension_numbers<[1], [0], [0], [1], [0, 0, 1, 1], [], []>} : vector<2x128xf32>, vector<128x4096xf32>, vector<2x4096xf32> -> vector<2x4096xf32>
    %10 = arith.addf %4, %9 : vector<2x4096xf32>
    %c0_13 = arith.constant 0 : index
    %c2 = arith.constant 2 : index
    %c0_14 = arith.constant 0 : index
    %c0_15 = arith.constant 0 : index
    %11 = vector.load %arg2[%c0_13, %c2, %c0_14, %c0_15] : memref<1x4x2x128xf32, #tpu.memory_space<vmem>>, vector<1x1x2x128xf32>
    %12 = vector.shape_cast %11 : vector<1x1x2x128xf32> to vector<2x128xf32>
    %c2_16 = arith.constant 2 : index
    %c0_17 = arith.constant 0 : index
    %c0_18 = arith.constant 0 : index
    %13 = vector.load %arg3[%c2_16, %c0_17, %c0_18] : memref<4x128x4096xf32, #tpu.memory_space<vmem>>, vector<1x128x4096xf32>
    %14 = vector.shape_cast %13 : vector<1x128x4096xf32> to vector<128x4096xf32>
    %cst_19 = arith.constant dense<0.000000e+00> : vector<2x4096xf32>
    %15 = tpu.matmul %12, %14, %cst_19 {dimension_numbers = #tpu.dot_dimension_numbers<[1], [0], [0], [1], [0, 0, 1, 1], [], []>} : vector<2x128xf32>, vector<128x4096xf32>, vector<2x4096xf32> -> vector<2x4096xf32>
    %16 = arith.addf %10, %15 : vector<2x4096xf32>
    %c0_20 = arith.constant 0 : index
    %c3 = arith.constant 3 : index
    %c0_21 = arith.constant 0 : index
    %c0_22 = arith.constant 0 : index
    %17 = vector.load %arg2[%c0_20, %c3, %c0_21, %c0_22] : memref<1x4x2x128xf32, #tpu.memory_space<vmem>>, vector<1x1x2x128xf32>
    %18 = vector.shape_cast %17 : vector<1x1x2x128xf32> to vector<2x128xf32>
    %c3_23 = arith.constant 3 : index
    %c0_24 = arith.constant 0 : index
    %c0_25 = arith.constant 0 : index
    %19 = vector.load %arg3[%c3_23, %c0_24, %c0_25] : memref<4x128x4096xf32, #tpu.memory_space<vmem>>, vector<1x128x4096xf32>
    %20 = vector.shape_cast %19 : vector<1x128x4096xf32> to vector<128x4096xf32>
    %cst_26 = arith.constant dense<0.000000e+00> : vector<2x4096xf32>
    %21 = tpu.matmul %18, %20, %cst_26 {dimension_numbers = #tpu.dot_dimension_numbers<[1], [0], [0], [1], [0, 0, 1, 1], [], []>} : vector<2x128xf32>, vector<128x4096xf32>, vector<2x4096xf32> -> vector<2x4096xf32>
    %22 = arith.addf %16, %21 : vector<2x4096xf32>
    %23 = vector.extract_strided_slice %22 {offsets = [0, 0], sizes = [2, 512], strides = [1, 1]} : vector<2x4096xf32> to vector<2x512xf32>
    %c0_27 = arith.constant 0 : index
    %24 = memref.load %arg4[%c0_27] : memref<8xf32, #tpu.memory_space<smem>>
    %25 = vector.broadcast %24 : f32 to vector<2x512xf32>
    %26 = arith.addf %23, %25 : vector<2x512xf32>
    %c0_28 = arith.constant 0 : index
    %c0_29 = arith.constant 0 : index
    %c0_30 = arith.constant 0 : index
    %c0_31 = arith.constant 0 : index
    %27 = vector.load %arg5[%c0_28, %c0_29, %c0_30, %c0_31] : memref<1x8x2x512xf32, #tpu.memory_space<vmem>>, vector<1x1x2x512xf32>
    %28 = vector.shape_cast %27 : vector<1x1x2x512xf32> to vector<2x512xf32>
    %29 = vector.shape_cast %26 : vector<2x512xf32> to vector<1x1x2x512xf32>
    tpu.vector_store %arg5[%c0_28, %c0_29, %c0_30, %c0_31], %29 {strides = array<i32>} : memref<1x8x2x512xf32, #tpu.memory_space<vmem>>, vector<1x1x2x512xf32>,
    %30 = vector.extract_strided_slice %22 {offsets = [0, 512], sizes = [2, 512], strides = [1, 1]} : vector<2x4096xf32> to vector<2x512xf32>
    %c1_32 = arith.constant 1 : index
    %31 = memref.load %arg4[%c1_32] : memref<8xf32, #tpu.memory_space<smem>>
    %32 = vector.broadcast %31 : f32 to vector<2x512xf32>
    %33 = arith.addf %30, %32 : vector<2x512xf32>
    %c0_33 = arith.constant 0 : index
    %c1_34 = arith.constant 1 : index
    %c0_35 = arith.constant 0 : index
    %c0_36 = arith.constant 0 : index
    %34 = vector.load %arg5[%c0_33, %c1_34, %c0_35, %c0_36] : memref<1x8x2x512xf32, #tpu.memory_space<vmem>>, vector<1x1x2x512xf32>
    %35 = vector.shape_cast %34 : vector<1x1x2x512xf32> to vector<2x512xf32>
    %36 = vector.shape_cast %33 : vector<2x512xf32> to vector<1x1x2x512xf32>
    tpu.vector_store %arg5[%c0_33, %c1_34, %c0_35, %c0_36], %36 {strides = array<i32>} : memref<1x8x2x512xf32, #tpu.memory_space<vmem>>, vector<1x1x2x512xf32>,
    %37 = vector.extract_strided_slice %22 {offsets = [0, 1024], sizes = [2, 512], strides = [1, 1]} : vector<2x4096xf32> to vector<2x512xf32>
    %c2_37 = arith.constant 2 : index
    %38 = memref.load %arg4[%c2_37] : memref<8xf32, #tpu.memory_space<smem>>
    %39 = vector.broadcast %38 : f32 to vector<2x512xf32>
    %40 = arith.addf %37, %39 : vector<2x512xf32>
    %c0_38 = arith.constant 0 : index
    %c2_39 = arith.constant 2 : index
    %c0_40 = arith.constant 0 : index
    %c0_41 = arith.constant 0 : index
    %41 = vector.load %arg5[%c0_38, %c2_39, %c0_40, %c0_41] : memref<1x8x2x512xf32, #tpu.memory_space<vmem>>, vector<1x1x2x512xf32>
    %42 = vector.shape_cast %41 : vector<1x1x2x512xf32> to vector<2x512xf32>
    %43 = vector.shape_cast %40 : vector<2x512xf32> to vector<1x1x2x512xf32>
    tpu.vector_store %arg5[%c0_38, %c2_39, %c0_40, %c0_41], %43 {strides = array<i32>} : memref<1x8x2x512xf32, #tpu.memory_space<vmem>>, vector<1x1x2x512xf32>,
    %44 = vector.extract_strided_slice %22 {offsets = [0, 1536], sizes = [2, 512], strides = [1, 1]} : vector<2x4096xf32> to vector<2x512xf32>
    %c3_42 = arith.constant 3 : index
    %45 = memref.load %arg4[%c3_42] : memref<8xf32, #tpu.memory_space<smem>>
    %46 = vector.broadcast %45 : f32 to vector<2x512xf32>
    %47 = arith.addf %44, %46 : vector<2x512xf32>
    %c0_43 = arith.constant 0 : index
    %c3_44 = arith.constant 3 : index
    %c0_45 = arith.constant 0 : index
    %c0_46 = arith.constant 0 : index
    %48 = vector.load %arg5[%c0_43, %c3_44, %c0_45, %c0_46] : memref<1x8x2x512xf32, #tpu.memory_space<vmem>>, vector<1x1x2x512xf32>
    %49 = vector.shape_cast %48 : vector<1x1x2x512xf32> to vector<2x512xf32>
    %50 = vector.shape_cast %47 : vector<2x512xf32> to vector<1x1x2x512xf32>
    tpu.vector_store %arg5[%c0_43, %c3_44, %c0_45, %c0_46], %50 {strides = array<i32>} : memref<1x8x2x512xf32, #tpu.memory_space<vmem>>, vector<1x1x2x512xf32>,
    %51 = vector.extract_strided_slice %22 {offsets = [0, 2048], sizes = [2, 512], strides = [1, 1]} : vector<2x4096xf32> to vector<2x512xf32>
    %c4 = arith.constant 4 : index
    %52 = memref.load %arg4[%c4] : memref<8xf32, #tpu.memory_space<smem>>
    %53 = vector.broadcast %52 : f32 to vector<2x512xf32>
    %54 = arith.addf %51, %53 : vector<2x512xf32>
    %c0_47 = arith.constant 0 : index
    %c4_48 = arith.constant 4 : index
    %c0_49 = arith.constant 0 : index
    %c0_50 = arith.constant 0 : index
    %55 = vector.load %arg5[%c0_47, %c4_48, %c0_49, %c0_50] : memref<1x8x2x512xf32, #tpu.memory_space<vmem>>, vector<1x1x2x512xf32>
    %56 = vector.shape_cast %55 : vector<1x1x2x512xf32> to vector<2x512xf32>
    %57 = vector.shape_cast %54 : vector<2x512xf32> to vector<1x1x2x512xf32>
    tpu.vector_store %arg5[%c0_47, %c4_48, %c0_49, %c0_50], %57 {strides = array<i32>} : memref<1x8x2x512xf32, #tpu.memory_space<vmem>>, vector<1x1x2x512xf32>,
    %58 = vector.extract_strided_slice %22 {offsets = [0, 2560], sizes = [2, 512], strides = [1, 1]} : vector<2x4096xf32> to vector<2x512xf32>
    %c5 = arith.constant 5 : index
    %59 = memref.load %arg4[%c5] : memref<8xf32, #tpu.memory_space<smem>>
    %60 = vector.broadcast %59 : f32 to vector<2x512xf32>
    %61 = arith.addf %58, %60 : vector<2x512xf32>
    %c0_51 = arith.constant 0 : index
    %c5_52 = arith.constant 5 : index
    %c0_53 = arith.constant 0 : index
    %c0_54 = arith.constant 0 : index
    %62 = vector.load %arg5[%c0_51, %c5_52, %c0_53, %c0_54] : memref<1x8x2x512xf32, #tpu.memory_space<vmem>>, vector<1x1x2x512xf32>
    %63 = vector.shape_cast %62 : vector<1x1x2x512xf32> to vector<2x512xf32>
    %64 = vector.shape_cast %61 : vector<2x512xf32> to vector<1x1x2x512xf32>
    tpu.vector_store %arg5[%c0_51, %c5_52, %c0_53, %c0_54], %64 {strides = array<i32>} : memref<1x8x2x512xf32, #tpu.memory_space<vmem>>, vector<1x1x2x512xf32>,
    %65 = vector.extract_strided_slice %22 {offsets = [0, 3072], sizes = [2, 512], strides = [1, 1]} : vector<2x4096xf32> to vector<2x512xf32>
    %c6 = arith.constant 6 : index
    %66 = memref.load %arg4[%c6] : memref<8xf32, #tpu.memory_space<smem>>
    %67 = vector.broadcast %66 : f32 to vector<2x512xf32>
    %68 = arith.addf %65, %67 : vector<2x512xf32>
    %c0_55 = arith.constant 0 : index
    %c6_56 = arith.constant 6 : index
    %c0_57 = arith.constant 0 : index
    %c0_58 = arith.constant 0 : index
    %69 = vector.load %arg5[%c0_55, %c6_56, %c0_57, %c0_58] : memref<1x8x2x512xf32, #tpu.memory_space<vmem>>, vector<1x1x2x512xf32>
    %70 = vector.shape_cast %69 : vector<1x1x2x512xf32> to vector<2x512xf32>
    %71 = vector.shape_cast %68 : vector<2x512xf32> to vector<1x1x2x512xf32>
    tpu.vector_store %arg5[%c0_55, %c6_56, %c0_57, %c0_58], %71 {strides = array<i32>} : memref<1x8x2x512xf32, #tpu.memory_space<vmem>>, vector<1x1x2x512xf32>,
    %72 = vector.extract_strided_slice %22 {offsets = [0, 3584], sizes = [2, 512], strides = [1, 1]} : vector<2x4096xf32> to vector<2x512xf32>
    %c7 = arith.constant 7 : index
    %73 = memref.load %arg4[%c7] : memref<8xf32, #tpu.memory_space<smem>>
    %74 = vector.broadcast %73 : f32 to vector<2x512xf32>
    %75 = arith.addf %72, %74 : vector<2x512xf32>
    %c0_59 = arith.constant 0 : index
    %c7_60 = arith.constant 7 : index
    %c0_61 = arith.constant 0 : index
    %c0_62 = arith.constant 0 : index
    %76 = vector.load %arg5[%c0_59, %c7_60, %c0_61, %c0_62] : memref<1x8x2x512xf32, #tpu.memory_space<vmem>>, vector<1x1x2x512xf32>
    %77 = vector.shape_cast %76 : vector<1x1x2x512xf32> to vector<2x512xf32>
    %78 = vector.shape_cast %75 : vector<2x512xf32> to vector<1x1x2x512xf32>
    tpu.vector_store %arg5[%c0_59, %c7_60, %c0_61, %c0_62], %78 {strides = array<i32>} : memref<1x8x2x512xf32, #tpu.memory_space<vmem>>, vector<1x1x2x512xf32>,
    return
  }
  func.func @transform_0(%arg0: i32, %arg1: i32) -> (i32, i32, i32, i32) {
    %c0_i32 = arith.constant 0 : i32
    %c0_i32_0 = arith.constant 0 : i32
    %c0_i32_1 = arith.constant 0 : i32
    return %arg0, %c0_i32, %arg1, %c0_i32_0 : i32, i32, i32, i32
  }
  func.func @transform_1(%arg0: i32, %arg1: i32) -> (i32, i32, i32) {
    %c0_i32 = arith.constant 0 : i32
    %c0_i32_0 = arith.constant 0 : i32
    %c0_i32_1 = arith.constant 0 : i32
    %c0_i32_2 = arith.constant 0 : i32
    return %c0_i32, %c0_i32_0, %c0_i32_1 : i32, i32, i32
  }
  func.func @transform_2(%arg0: i32, %arg1: i32) -> i32 {
    %c0_i32 = arith.constant 0 : i32
    %c0_i32_0 = arith.constant 0 : i32
    return %c0_i32 : i32
  }
  func.func @transform_3(%arg0: i32, %arg1: i32) -> (i32, i32, i32, i32) {
    %c0_i32 = arith.constant 0 : i32
    %c0_i32_0 = arith.constant 0 : i32
    %c0_i32_1 = arith.constant 0 : i32
    return %arg0, %c0_i32, %arg1, %c0_i32_0 : i32, i32, i32, i32
  }
}

</mosaic_0001>

<llo_original>
// kernel: single_deconv2d_block.1
$region0: #{single_deconv2d_block.1}
  #allocation0 [shape = 'u32[]', space=smem, size = 0x4, offset = 0x4, fixed_abs, tag = 'smem constant byte address 0x4 - core index']
  #allocation1 [shape = 'u32[72,128]{1,0:T(1,128)}', space=vmem, size = 0x9000, scoped, tag = 'internal scratch']
  %s0 = inlined_call_operand.vmem [shape: f32[2,4,2,128], index: 0, kind: input, shape index: {}]
  %s1 = inlined_call_operand.vmem [shape: f32[4,128,4096], index: 1, kind: input, shape index: {}]
  %s2 = inlined_call_operand.vmem [shape: f32[8], index: 2, kind: input, shape index: {}]
  %s3 = inlined_call_operand.vmem [shape: f32[2,8,2,512], index: 3, kind: output, shape index: {}]
  %s4 = sld [smem:[#allocation0]]
  $region49: #{single_deconv2d_block.1} parent=0
    _
  %s6 = ssub.s32 1, %s4
  %s7 = scalar_select 0, %s6, %s4
  $region1: #{single_deconv2d_block.1} parent=0
    #allocation2 [shape = 'u8[512]{0}', space=smem, size = 0x200, scoped, tag = 'input window, operand 2, single buffered']
    #allocation3 [shape = 's32[2]{0}', space=sflag, size = 0x8, scoped, tag = 'scoped memory for single_deconv2d_block.1']
    %8 = vsyncpa [#allocation3], 0
    loop: start=0, step=1, limit=4
    $region2: #{single_deconv2d_block.1} parent=1 // loop_pre_header
      _
    $region3: #{single_deconv2d_block.1} parent=1 // loop_header
      %s10 = sphi 0, %s14
      %p11 = scmp.ge.s32.totalorder %s10, 4
      %s17 = sphi 0, %s29
      %s18 = sphi 0, %s25
      %s19 = sphi 0, %s17
      %s20 = sphi 0, %s18
      %s21 = sphi 0, %s19
      %s22 = sphi 0, %s20
      %s34 = sphi 0, %s36
      %s37 = sphi 0, %s34
      %s38 = sphi 0, %s37
      %s54 = sphi 0, %s38
      %s58 = sphi 0, %s58
      %s60 = sphi 0, %s58
      %s61 = sphi 0, %s60
      %s75 = sphi 0, %s61
      %s79 = sphi 0, %s79
      %s81 = sphi 0, %s79
      %s82 = sphi 0, %s81
      %s96 = sphi 0, %s82
      %s104 = sphi 0, %s106
      %s107 = sphi 0, %s104
      %s108 = sphi 0, %s107
      %s124 = sphi 0, %s108
    $region4: #{single_deconv2d_block.1} parent=1 // loop_header_branch
      %13 = sbr.rel (%p11) target = $region8
    $region5: #{single_deconv2d_block.1} parent=1 // loop_body
      %s15 = ssub.s32 %s10, 1
      %s16 = ssub.s32 %s10, 2
      %s23 = sadd.s32 1, %s18
      %p24 = scmp.ge.s32.totalorder %s23, 1
      %s25 = scalar_select %p24, 0, %s23
      %s26 = sadd.s32 1, %s17
      %s27 = scalar_select %p24, %s26, %s17
      %p28 = scmp.ge.s32.totalorder %s27, 2
      %s29 = scalar_select %p28, 0, %s27
      %s30 = ssub.s32 %s17, %s29
      %s31 = ssub.s32 %s18, %s25
      %s32 = sor.u32 %s30, %s31
      %p33 = scmp.eq.s32.totalorder %s32, 0
      %s35 = sadd.s32 %s34, 1
      %s36 = scalar_select %p33, %s34, %s35
      %p39 = pneg %p33
      %p40 = scmp.eq.s32.totalorder %s10, 1
      %p41 = por %p39, %p40
      %p42 = scmp.ne.s32.totalorder %s34, %s37
      %p43 = scmp.eq.s32.totalorder %s10, 0
      %p44 = por %p42, %p43
      %p45 = scmp.ne.s32.totalorder %s34, %s37
      %p46 = scmp.eq.s32.totalorder %s15, 1
      %p47 = por %p45, %p46
      %p48 = scmp.ne.s32.totalorder %s37, %s38
      %p49 = scmp.eq.s32.totalorder %s15, 0
      %p50 = por %p48, %p49
      %p51 = scmp.ne.s32.totalorder %s37, %s38
      %p52 = scmp.eq.s32.totalorder %s16, 1
      %p53 = por %p51, %p52
      %p55 = scmp.ne.s32.totalorder %s38, %s54
      %p56 = scmp.eq.s32.totalorder %s16, 0
      %p57 = por %p55, %p56
      %s59 = sadd.s32 %s58, 1
      %p62 = scmp.eq.s32.totalorder %s10, 1
      %p63 = scmp.ne.s32.totalorder %s58, %s60
      %p64 = scmp.eq.s32.totalorder %s10, 0
      %p65 = por %p63, %p64
      %p66 = scmp.ne.s32.totalorder %s58, %s60
      %p67 = scmp.eq.s32.totalorder %s15, 1
      %p68 = por %p66, %p67
      %p69 = scmp.ne.s32.totalorder %s60, %s61
      %p70 = scmp.eq.s32.totalorder %s15, 0
      %p71 = por %p69, %p70
      %p72 = scmp.ne.s32.totalorder %s60, %s61
      %p73 = scmp.eq.s32.totalorder %s16, 1
      %p74 = por %p72, %p73
      %p76 = scmp.ne.s32.totalorder %s61, %s75
      %p77 = scmp.eq.s32.totalorder %s16, 0
      %p78 = por %p76, %p77
      %s80 = sadd.s32 %s79, 1
      %p83 = scmp.eq.s32.totalorder %s10, 1
      %p84 = scmp.ne.s32.totalorder %s79, %s81
      %p85 = scmp.eq.s32.totalorder %s10, 0
      %p86 = por %p84, %p85
      %p87 = scmp.ne.s32.totalorder %s79, %s81
      %p88 = scmp.eq.s32.totalorder %s15, 1
      %p89 = por %p87, %p88
      %p90 = scmp.ne.s32.totalorder %s81, %s82
      %p91 = scmp.eq.s32.totalorder %s15, 0
      %p92 = por %p90, %p91
      %p93 = scmp.ne.s32.totalorder %s81, %s82
      %p94 = scmp.eq.s32.totalorder %s16, 1
      %p95 = por %p93, %p94
      %p97 = scmp.ne.s32.totalorder %s82, %s96
      %p98 = scmp.eq.s32.totalorder %s16, 0
      %p99 = por %p97, %p98
      %s100 = ssub.s32 %s17, %s29
      %s101 = ssub.s32 %s18, %s25
      %s102 = sor.u32 %s100, %s101
      %p103 = scmp.eq.s32.totalorder %s102, 0
      %s105 = sadd.s32 %s104, 1
      %s106 = scalar_select %p103, %s104, %s105
      %p109 = pneg %p103
      %p110 = scmp.eq.s32.totalorder %s10, 1
      %p111 = por %p109, %p110
      %p112 = scmp.ne.s32.totalorder %s104, %s107
      %p113 = scmp.eq.s32.totalorder %s10, 0
      %p114 = por %p112, %p113
      %p115 = scmp.ne.s32.totalorder %s104, %s107
      %p116 = scmp.eq.s32.totalorder %s15, 1
      %p117 = por %p115, %p116
      %p118 = scmp.ne.s32.totalorder %s107, %s108
      %p119 = scmp.eq.s32.totalorder %s15, 0
      %p120 = por %p118, %p119
      %p121 = scmp.ne.s32.totalorder %s107, %s108
      %p122 = scmp.eq.s32.totalorder %s16, 1
      %p123 = por %p121, %p122
      %p125 = scmp.ne.s32.totalorder %s108, %s124
      %p126 = scmp.eq.s32.totalorder %s16, 0
      %p127 = por %p125, %p126
      %p128 = scmp.le.s32.totalorder 1, %s10
      %p129 = scmp.lt.s32.totalorder %s10, 3
      %p130 = pnand %p128, %p129
      %p131 = pneg %p130
      // Predicated region
      $region9: #{single_deconv2d_block.1} parent=5 // pred_check
        _
      $region10: #{single_deconv2d_block.1} parent=5 // pred_check_branch
        %133 = sbr.rel (%p130) target = $region12
      $region11: #{single_deconv2d_block.1} parent=5 // pred_region
        %s134 = ssub.s32 %s10, 1
        // Predicated region
        $region13: #{single_deconv2d_block.1} parent=11 // pred_check
          %p135 = pneg %p71
        $region14: #{single_deconv2d_block.1} parent=11 // pred_check_branch
          %137 = sbr.rel (%p135) target = $region16
        $region15: #{single_deconv2d_block.1} parent=11 // pred_region
          _
        $region16: #{single_deconv2d_block.1} parent=11 // pred_fallthru
          _
        // Predicated region
        $region17: #{single_deconv2d_block.1} parent=11 // pred_check
          %p138 = pneg %p92
        $region18: #{single_deconv2d_block.1} parent=11 // pred_check_branch
          %140 = sbr.rel (%p138) target = $region20
        $region19: #{single_deconv2d_block.1} parent=11 // pred_region
          %142 = vsyncadd [#allocation3], 0
          %s144 = sshll.u32 %s2, 4
          %s145 = int_to_ptr.vmem [resolvable:$true] %s144
          %147 = dma.vmem_to_smem %s145, 16, [#allocation2], [#allocation3]
        $region20: #{single_deconv2d_block.1} parent=11 // pred_fallthru
          _
      $region12: #{single_deconv2d_block.1} parent=5 // pred_fallthru
        _
      %p148 = scmp.lt.s32.totalorder %s10, 2
      // Predicated region
      $region21: #{single_deconv2d_block.1} parent=5 // pred_check
        %p149 = pneg %p148
      $region22: #{single_deconv2d_block.1} parent=5 // pred_check_branch
        %151 = sbr.rel (%p149) target = $region24
      $region23: #{single_deconv2d_block.1} parent=5 // pred_region
        // Predicated region
        $region25: #{single_deconv2d_block.1} parent=23 // pred_check
          %p152 = pneg %p44
        $region26: #{single_deconv2d_block.1} parent=23 // pred_check_branch
          %154 = sbr.rel (%p152) target = $region28
        $region27: #{single_deconv2d_block.1} parent=23 // pred_region
          %p155 = scmp.lt.s32.totalorder %s17, 1
          %s156 = scalar_select %p155, %s17, 1
          %p157 = scmp.lt.s32.totalorder %s18, 0
          %s158 = scalar_select %p157, %s18, 0
          %s159 = smul.addr %s156, 4
          %s160 = sadd.s32 %s158, %s159
          %s161 = smul.addr %s160, 2
          %s162 = scalar_lea.vmem %s0, %s161
        $region28: #{single_deconv2d_block.1} parent=23 // pred_fallthru
          _
      $region24: #{single_deconv2d_block.1} parent=5 // pred_fallthru
        _
      %p163 = scmp.le.s32.totalorder 1, %s10
      %p164 = scmp.lt.s32.totalorder %s10, 3
      %p165 = pnand %p163, %p164
      %p166 = pneg %p165
      // Predicated region
      $region29: #{single_deconv2d_block.1} parent=5 // pred_check
        _
      $region30: #{single_deconv2d_block.1} parent=5 // pred_check_branch
        %168 = sbr.rel (%p165) target = $region32
      $region31: #{single_deconv2d_block.1} parent=5 // pred_region
        %s169 = ssub.s32 %s10, 1
        // Predicated region
        $region33: #{single_deconv2d_block.1} parent=31 // pred_check
          %p170 = pneg %p92
        $region34: #{single_deconv2d_block.1} parent=31 // pred_check_branch
          %172 = sbr.rel (%p170) target = $region36
        $region35: #{single_deconv2d_block.1} parent=31 // pred_region
          %174 = dma.done [#allocation3], 16
        $region36: #{single_deconv2d_block.1} parent=31 // pred_fallthru
          _
        %175 = sfence
        %p176 = scmp.lt.s32.totalorder %s19, 1
        %s177 = scalar_select %p176, %s19, 1
        %p178 = scmp.lt.s32.totalorder %s20, 0
        %s179 = scalar_select %p178, %s20, 0
        %s180 = smul.addr %s177, 4
        %s181 = sadd.s32 %s179, %s180
        %s182 = smul.addr %s181, 2
        %s183 = scalar_lea.vmem %s0, %s182
        %p184 = pneg %p50
        %p185 = pneg %p47
        %p186 = pneg %p71
        %p187 = pneg %p68
        %p188 = pneg %p92
        %p189 = pneg %p89
        %p190 = pneg %p120
        %p191 = pneg %p117
        %p192 = scmp.lt.s32.totalorder %s19, 1
        %s193 = scalar_select %p192, %s19, 1
        %p194 = scmp.lt.s32.totalorder %s20, 0
        %s195 = scalar_select %p194, %s20, 0
        %s196 = smul.addr %s195, 4
        %s197 = smul.addr %s193, 32
        %s198 = sadd.s32 %s196, %s197
        %s199 = smul.addr %s198, 2
        %s200 = scalar_lea.vmem %s3, %s199
        %p201 = scmp.lt.s32.totalorder %s19, 1
        %s202 = scalar_select %p201, %s19, 1
        %p203 = scmp.lt.s32.totalorder %s20, 0
        %s204 = scalar_select %p203, %s20, 0
        %s205 = smul.addr %s202, 4
        %s206 = sadd.s32 %s204, %s205
        %s207 = smul.addr %s206, 2
        %s208 = scalar_lea.vmem %s0, %s207
        %p209 = scmp.lt.s32.totalorder %s19, 1
        %s210 = scalar_select %p209, %s19, 1
        %p211 = scmp.lt.s32.totalorder %s20, 0
        %s212 = scalar_select %p211, %s20, 0
        %s213 = smul.addr %s212, 4
        %s214 = smul.addr %s210, 32
        %s215 = sadd.s32 %s213, %s214
        %s216 = smul.addr %s215, 2
        %s217 = scalar_lea.vmem %s3, %s216
        %v218 = vld [vmem:[%s208] sm:$0x3]
        %v219 = vld [vmem:[%s1] sm:$0xff]
        %v220 = vld [vmem:[%s1 + $0x8] sm:$0xff]
        %v221 = vld [vmem:[%s1 + $0x10] sm:$0xff]
        %v222 = vld [vmem:[%s1 + $0x18] sm:$0xff]
        %v223 = vld [vmem:[%s1 + $0x20] sm:$0xff]
        %v224 = vld [vmem:[%s1 + $0x28] sm:$0xff]
        %v225 = vld [vmem:[%s1 + $0x30] sm:$0xff]
        %v226 = vld [vmem:[%s1 + $0x38] sm:$0xff]
        %v227 = vld [vmem:[%s1 + $0x40] sm:$0xff]
        %v228 = vld [vmem:[%s1 + $0x48] sm:$0xff]
        %v229 = vld [vmem:[%s1 + $0x50] sm:$0xff]
        %v230 = vld [vmem:[%s1 + $0x58] sm:$0xff]
        %v231 = vld [vmem:[%s1 + $0x60] sm:$0xff]
        %v232 = vld [vmem:[%s1 + $0x68] sm:$0xff]
        %v233 = vld [vmem:[%s1 + $0x70] sm:$0xff]
        %v234 = vld [vmem:[%s1 + $0x78] sm:$0xff]
        %v235 = vld [vmem:[%s1 + $0x80] sm:$0xff]
        %v236 = vld [vmem:[%s1 + $0x88] sm:$0xff]
        %v237 = vld [vmem:[%s1 + $0x90] sm:$0xff]
        %v238 = vld [vmem:[%s1 + $0x98] sm:$0xff]
        %v239 = vld [vmem:[%s1 + $0xa0] sm:$0xff]
        %v240 = vld [vmem:[%s1 + $0xa8] sm:$0xff]
        %v241 = vld [vmem:[%s1 + $0xb0] sm:$0xff]
        %v242 = vld [vmem:[%s1 + $0xb8] sm:$0xff]
        %v243 = vld [vmem:[%s1 + $0xc0] sm:$0xff]
        %v244 = vld [vmem:[%s1 + $0xc8] sm:$0xff]
        %v245 = vld [vmem:[%s1 + $0xd0] sm:$0xff]
        %v246 = vld [vmem:[%s1 + $0xd8] sm:$0xff]
        %v247 = vld [vmem:[%s1 + $0xe0] sm:$0xff]
        %v248 = vld [vmem:[%s1 + $0xe8] sm:$0xff]
        %v249 = vld [vmem:[%s1 + $0xf0] sm:$0xff]
        %v250 = vld [vmem:[%s1 + $0xf8] sm:$0xff]
        %v251 = vld [vmem:[%s1 + $0x100] sm:$0xff]
        %v252 = vld [vmem:[%s1 + $0x108] sm:$0xff]
        %v253 = vld [vmem:[%s1 + $0x110] sm:$0xff]
        %v254 = vld [vmem:[%s1 + $0x118] sm:$0xff]
        %v255 = vld [vmem:[%s1 + $0x120] sm:$0xff]
        %v256 = vld [vmem:[%s1 + $0x128] sm:$0xff]
        %v257 = vld [vmem:[%s1 + $0x130] sm:$0xff]
        %v258 = vld [vmem:[%s1 + $0x138] sm:$0xff]
        %v259 = vld [vmem:[%s1 + $0x140] sm:$0xff]
        %v260 = vld [vmem:[%s1 + $0x148] sm:$0xff]
        %v261 = vld [vmem:[%s1 + $0x150] sm:$0xff]
        %v262 = vld [vmem:[%s1 + $0x158] sm:$0xff]
        %v263 = vld [vmem:[%s1 + $0x160] sm:$0xff]
        %v264 = vld [vmem:[%s1 + $0x168] sm:$0xff]
        %v265 = vld [vmem:[%s1 + $0x170] sm:$0xff]
        %v266 = vld [vmem:[%s1 + $0x178] sm:$0xff]
        %v267 = vld [vmem:[%s1 + $0x180] sm:$0xff]
        %v268 = vld [vmem:[%s1 + $0x188] sm:$0xff]
        %v269 = vld [vmem:[%s1 + $0x190] sm:$0xff]
        %v270 = vld [vmem:[%s1 + $0x198] sm:$0xff]
        %v271 = vld [vmem:[%s1 + $0x1a0] sm:$0xff]
        %v272 = vld [vmem:[%s1 + $0x1a8] sm:$0xff]
        %v273 = vld [vmem:[%s1 + $0x1b0] sm:$0xff]
        %v274 = vld [vmem:[%s1 + $0x1b8] sm:$0xff]
        %v275 = vld [vmem:[%s1 + $0x1c0] sm:$0xff]
        %v276 = vld [vmem:[%s1 + $0x1c8] sm:$0xff]
        %v277 = vld [vmem:[%s1 + $0x1d0] sm:$0xff]
        %v278 = vld [vmem:[%s1 + $0x1d8] sm:$0xff]
        %v279 = vld [vmem:[%s1 + $0x1e0] sm:$0xff]
        %v280 = vld [vmem:[%s1 + $0x1e8] sm:$0xff]
        %v281 = vld [vmem:[%s1 + $0x1f0] sm:$0xff]
        %v282 = vld [vmem:[%s1 + $0x1f8] sm:$0xff]
        %v283 = vld [vmem:[%s1 + $0x200] sm:$0xff]
        %v284 = vld [vmem:[%s1 + $0x208] sm:$0xff]
        %v285 = vld [vmem:[%s1 + $0x210] sm:$0xff]
        %v286 = vld [vmem:[%s1 + $0x218] sm:$0xff]
        %v287 = vld [vmem:[%s1 + $0x220] sm:$0xff]
        %v288 = vld [vmem:[%s1 + $0x228] sm:$0xff]
        %v289 = vld [vmem:[%s1 + $0x230] sm:$0xff]
        %v290 = vld [vmem:[%s1 + $0x238] sm:$0xff]
        %v291 = vld [vmem:[%s1 + $0x240] sm:$0xff]
        %v292 = vld [vmem:[%s1 + $0x248] sm:$0xff]
        %v293 = vld [vmem:[%s1 + $0x250] sm:$0xff]
        %v294 = vld [vmem:[%s1 + $0x258] sm:$0xff]
        %v295 = vld [vmem:[%s1 + $0x260] sm:$0xff]
        %v296 = vld [vmem:[%s1 + $0x268] sm:$0xff]
        %v297 = vld [vmem:[%s1 + $0x270] sm:$0xff]
        %v298 = vld [vmem:[%s1 + $0x278] sm:$0xff]
        %v299 = vld [vmem:[%s1 + $0x280] sm:$0xff]
        %v300 = vld [vmem:[%s1 + $0x288] sm:$0xff]
        %v301 = vld [vmem:[%s1 + $0x290] sm:$0xff]
        %v302 = vld [vmem:[%s1 + $0x298] sm:$0xff]
        %v303 = vld [vmem:[%s1 + $0x2a0] sm:$0xff]
        %v304 = vld [vmem:[%s1 + $0x2a8] sm:$0xff]
        %v305 = vld [vmem:[%s1 + $0x2b0] sm:$0xff]
        %v306 = vld [vmem:[%s1 + $0x2b8] sm:$0xff]
        %v307 = vld [vmem:[%s1 + $0x2c0] sm:$0xff]
        %v308 = vld [vmem:[%s1 + $0x2c8] sm:$0xff]
        %v309 = vld [vmem:[%s1 + $0x2d0] sm:$0xff]
        %v310 = vld [vmem:[%s1 + $0x2d8] sm:$0xff]
        %v311 = vld [vmem:[%s1 + $0x2e0] sm:$0xff]
        %v312 = vld [vmem:[%s1 + $0x2e8] sm:$0xff]
        %v313 = vld [vmem:[%s1 + $0x2f0] sm:$0xff]
        %v314 = vld [vmem:[%s1 + $0x2f8] sm:$0xff]
        %v315 = vld [vmem:[%s1 + $0x300] sm:$0xff]
        %v316 = vld [vmem:[%s1 + $0x308] sm:$0xff]
        %v317 = vld [vmem:[%s1 + $0x310] sm:$0xff]
        %v318 = vld [vmem:[%s1 + $0x318] sm:$0xff]
        %v319 = vld [vmem:[%s1 + $0x320] sm:$0xff]
        %v320 = vld [vmem:[%s1 + $0x328] sm:$0xff]
        %v321 = vld [vmem:[%s1 + $0x330] sm:$0xff]
        %v322 = vld [vmem:[%s1 + $0x338] sm:$0xff]
        %v323 = vld [vmem:[%s1 + $0x340] sm:$0xff]
        %v324 = vld [vmem:[%s1 + $0x348] sm:$0xff]
        %v325 = vld [vmem:[%s1 + $0x350] sm:$0xff]
        %v326 = vld [vmem:[%s1 + $0x358] sm:$0xff]
        %v327 = vld [vmem:[%s1 + $0x360] sm:$0xff]
        %v328 = vld [vmem:[%s1 + $0x368] sm:$0xff]
        %v329 = vld [vmem:[%s1 + $0x370] sm:$0xff]
        %v330 = vld [vmem:[%s1 + $0x378] sm:$0xff]
        %v331 = vld [vmem:[%s1 + $0x380] sm:$0xff]
        %v332 = vld [vmem:[%s1 + $0x388] sm:$0xff]
        %v333 = vld [vmem:[%s1 + $0x390] sm:$0xff]
        %v334 = vld [vmem:[%s1 + $0x398] sm:$0xff]
        %v335 = vld [vmem:[%s1 + $0x3a0] sm:$0xff]
        %v336 = vld [vmem:[%s1 + $0x3a8] sm:$0xff]
        %v337 = vld [vmem:[%s1 + $0x3b0] sm:$0xff]
        %v338 = vld [vmem:[%s1 + $0x3b8] sm:$0xff]
        %v339 = vld [vmem:[%s1 + $0x3c0] sm:$0xff]
        %v340 = vld [vmem:[%s1 + $0x3c8] sm:$0xff]
        %v341 = vld [vmem:[%s1 + $0x3d0] sm:$0xff]
        %v342 = vld [vmem:[%s1 + $0x3d8] sm:$0xff]
        %v343 = vld [vmem:[%s1 + $0x3e0] sm:$0xff]
        %v344 = vld [vmem:[%s1 + $0x3e8] sm:$0xff]
        %v345 = vld [vmem:[%s1 + $0x3f0] sm:$0xff]
        %v346 = vld [vmem:[%s1 + $0x3f8] sm:$0xff]
        %v347 = vld [vmem:[%s1 + $0x400] sm:$0xff]
        %v348 = vld [vmem:[%s1 + $0x408] sm:$0xff]
        %v349 = vld [vmem:[%s1 + $0x410] sm:$0xff]
        %v350 = vld [vmem:[%s1 + $0x418] sm:$0xff]
        %v351 = vld [vmem:[%s1 + $0x420] sm:$0xff]
        %v352 = vld [vmem:[%s1 + $0x428] sm:$0xff]
        %v353 = vld [vmem:[%s1 + $0x430] sm:$0xff]
        %v354 = vld [vmem:[%s1 + $0x438] sm:$0xff]
        %v355 = vld [vmem:[%s1 + $0x440] sm:$0xff]
        %v356 = vld [vmem:[%s1 + $0x448] sm:$0xff]
        %v357 = vld [vmem:[%s1 + $0x450] sm:$0xff]
        %v358 = vld [vmem:[%s1 + $0x458] sm:$0xff]
        %v359 = vld [vmem:[%s1 + $0x460] sm:$0xff]
        %v360 = vld [vmem:[%s1 + $0x468] sm:$0xff]
        %v361 = vld [vmem:[%s1 + $0x470] sm:$0xff]
        %v362 = vld [vmem:[%s1 + $0x478] sm:$0xff]
        %v363 = vld [vmem:[%s1 + $0x480] sm:$0xff]
        %v364 = vld [vmem:[%s1 + $0x488] sm:$0xff]
        %v365 = vld [vmem:[%s1 + $0x490] sm:$0xff]
        %v366 = vld [vmem:[%s1 + $0x498] sm:$0xff]
        %v367 = vld [vmem:[%s1 + $0x4a0] sm:$0xff]
        %v368 = vld [vmem:[%s1 + $0x4a8] sm:$0xff]
        %v369 = vld [vmem:[%s1 + $0x4b0] sm:$0xff]
        %v370 = vld [vmem:[%s1 + $0x4b8] sm:$0xff]
        %v371 = vld [vmem:[%s1 + $0x4c0] sm:$0xff]
        %v372 = vld [vmem:[%s1 + $0x4c8] sm:$0xff]
        %v373 = vld [vmem:[%s1 + $0x4d0] sm:$0xff]
        %v374 = vld [vmem:[%s1 + $0x4d8] sm:$0xff]
        %v375 = vld [vmem:[%s1 + $0x4e0] sm:$0xff]
        %v376 = vld [vmem:[%s1 + $0x4e8] sm:$0xff]
        %v377 = vld [vmem:[%s1 + $0x4f0] sm:$0xff]
        %v378 = vld [vmem:[%s1 + $0x4f8] sm:$0xff]
        %v379 = vld [vmem:[%s1 + $0x500] sm:$0xff]
        %v380 = vld [vmem:[%s1 + $0x508] sm:$0xff]
        %v381 = vld [vmem:[%s1 + $0x510] sm:$0xff]
        %v382 = vld [vmem:[%s1 + $0x518] sm:$0xff]
        %v383 = vld [vmem:[%s1 + $0x520] sm:$0xff]
        %v384 = vld [vmem:[%s1 + $0x528] sm:$0xff]
        %v385 = vld [vmem:[%s1 + $0x530] sm:$0xff]
        %v386 = vld [vmem:[%s1 + $0x538] sm:$0xff]
        %v387 = vld [vmem:[%s1 + $0x540] sm:$0xff]
        %v388 = vld [vmem:[%s1 + $0x548] sm:$0xff]
        %v389 = vld [vmem:[%s1 + $0x550] sm:$0xff]
        %v390 = vld [vmem:[%s1 + $0x558] sm:$0xff]
        %v391 = vld [vmem:[%s1 + $0x560] sm:$0xff]
        %v392 = vld [vmem:[%s1 + $0x568] sm:$0xff]
        %v393 = vld [vmem:[%s1 + $0x570] sm:$0xff]
        %v394 = vld [vmem:[%s1 + $0x578] sm:$0xff]
        %v395 = vld [vmem:[%s1 + $0x580] sm:$0xff]
        %v396 = vld [vmem:[%s1 + $0x588] sm:$0xff]
        %v397 = vld [vmem:[%s1 + $0x590] sm:$0xff]
        %v398 = vld [vmem:[%s1 + $0x598] sm:$0xff]
        %v399 = vld [vmem:[%s1 + $0x5a0] sm:$0xff]
        %v400 = vld [vmem:[%s1 + $0x5a8] sm:$0xff]
        %v401 = vld [vmem:[%s1 + $0x5b0] sm:$0xff]
        %v402 = vld [vmem:[%s1 + $0x5b8] sm:$0xff]
        %v403 = vld [vmem:[%s1 + $0x5c0] sm:$0xff]
        %v404 = vld [vmem:[%s1 + $0x5c8] sm:$0xff]
        %v405 = vld [vmem:[%s1 + $0x5d0] sm:$0xff]
        %v406 = vld [vmem:[%s1 + $0x5d8] sm:$0xff]
        %v407 = vld [vmem:[%s1 + $0x5e0] sm:$0xff]
        %v408 = vld [vmem:[%s1 + $0x5e8] sm:$0xff]
        %v409 = vld [vmem:[%s1 + $0x5f0] sm:$0xff]
        %v410 = vld [vmem:[%s1 + $0x5f8] sm:$0xff]
        %v411 = vld [vmem:[%s1 + $0x600] sm:$0xff]
        %v412 = vld [vmem:[%s1 + $0x608] sm:$0xff]
        %v413 = vld [vmem:[%s1 + $0x610] sm:$0xff]
        %v414 = vld [vmem:[%s1 + $0x618] sm:$0xff]
        %v415 = vld [vmem:[%s1 + $0x620] sm:$0xff]
        %v416 = vld [vmem:[%s1 + $0x628] sm:$0xff]
        %v417 = vld [vmem:[%s1 + $0x630] sm:$0xff]
        %v418 = vld [vmem:[%s1 + $0x638] sm:$0xff]
        %v419 = vld [vmem:[%s1 + $0x640] sm:$0xff]
        %v420 = vld [vmem:[%s1 + $0x648] sm:$0xff]
        %v421 = vld [vmem:[%s1 + $0x650] sm:$0xff]
        %v422 = vld [vmem:[%s1 + $0x658] sm:$0xff]
        %v423 = vld [vmem:[%s1 + $0x660] sm:$0xff]
        %v424 = vld [vmem:[%s1 + $0x668] sm:$0xff]
        %v425 = vld [vmem:[%s1 + $0x670] sm:$0xff]
        %v426 = vld [vmem:[%s1 + $0x678] sm:$0xff]
        %v427 = vld [vmem:[%s1 + $0x680] sm:$0xff]
        %v428 = vld [vmem:[%s1 + $0x688] sm:$0xff]
        %v429 = vld [vmem:[%s1 + $0x690] sm:$0xff]
        %v430 = vld [vmem:[%s1 + $0x698] sm:$0xff]
        %v431 = vld [vmem:[%s1 + $0x6a0] sm:$0xff]
        %v432 = vld [vmem:[%s1 + $0x6a8] sm:$0xff]
        %v433 = vld [vmem:[%s1 + $0x6b0] sm:$0xff]
        %v434 = vld [vmem:[%s1 + $0x6b8] sm:$0xff]
        %v435 = vld [vmem:[%s1 + $0x6c0] sm:$0xff]
        %v436 = vld [vmem:[%s1 + $0x6c8] sm:$0xff]
        %v437 = vld [vmem:[%s1 + $0x6d0] sm:$0xff]
        %v438 = vld [vmem:[%s1 + $0x6d8] sm:$0xff]
        %v439 = vld [vmem:[%s1 + $0x6e0] sm:$0xff]
        %v440 = vld [vmem:[%s1 + $0x6e8] sm:$0xff]
        %v441 = vld [vmem:[%s1 + $0x6f0] sm:$0xff]
        %v442 = vld [vmem:[%s1 + $0x6f8] sm:$0xff]
        %v443 = vld [vmem:[%s1 + $0x700] sm:$0xff]
        %v444 = vld [vmem:[%s1 + $0x708] sm:$0xff]
        %v445 = vld [vmem:[%s1 + $0x710] sm:$0xff]
        %v446 = vld [vmem:[%s1 + $0x718] sm:$0xff]
        %v447 = vld [vmem:[%s1 + $0x720] sm:$0xff]
        %v448 = vld [vmem:[%s1 + $0x728] sm:$0xff]
        %v449 = vld [vmem:[%s1 + $0x730] sm:$0xff]
        %v450 = vld [vmem:[%s1 + $0x738] sm:$0xff]
        %v451 = vld [vmem:[%s1 + $0x740] sm:$0xff]
        %v452 = vld [vmem:[%s1 + $0x748] sm:$0xff]
        %v453 = vld [vmem:[%s1 + $0x750] sm:$0xff]
        %v454 = vld [vmem:[%s1 + $0x758] sm:$0xff]
        %v455 = vld [vmem:[%s1 + $0x760] sm:$0xff]
        %v456 = vld [vmem:[%s1 + $0x768] sm:$0xff]
        %v457 = vld [vmem:[%s1 + $0x770] sm:$0xff]
        %v458 = vld [vmem:[%s1 + $0x778] sm:$0xff]
        %v459 = vld [vmem:[%s1 + $0x780] sm:$0xff]
        %v460 = vld [vmem:[%s1 + $0x788] sm:$0xff]
        %v461 = vld [vmem:[%s1 + $0x790] sm:$0xff]
        %v462 = vld [vmem:[%s1 + $0x798] sm:$0xff]
        %v463 = vld [vmem:[%s1 + $0x7a0] sm:$0xff]
        %v464 = vld [vmem:[%s1 + $0x7a8] sm:$0xff]
        %v465 = vld [vmem:[%s1 + $0x7b0] sm:$0xff]
        %v466 = vld [vmem:[%s1 + $0x7b8] sm:$0xff]
        %v467 = vld [vmem:[%s1 + $0x7c0] sm:$0xff]
        %v468 = vld [vmem:[%s1 + $0x7c8] sm:$0xff]
        %v469 = vld [vmem:[%s1 + $0x7d0] sm:$0xff]
        %v470 = vld [vmem:[%s1 + $0x7d8] sm:$0xff]
        %v471 = vld [vmem:[%s1 + $0x7e0] sm:$0xff]
        %v472 = vld [vmem:[%s1 + $0x7e8] sm:$0xff]
        %v473 = vld [vmem:[%s1 + $0x7f0] sm:$0xff]
        %v474 = vld [vmem:[%s1 + $0x7f8] sm:$0xff]
        %v475 = vld [vmem:[%s1 + $0x800] sm:$0xff]
        %v476 = vld [vmem:[%s1 + $0x808] sm:$0xff]
        %v477 = vld [vmem:[%s1 + $0x810] sm:$0xff]
        %v478 = vld [vmem:[%s1 + $0x818] sm:$0xff]
        %v479 = vld [vmem:[%s1 + $0x820] sm:$0xff]
        %v480 = vld [vmem:[%s1 + $0x828] sm:$0xff]
        %v481 = vld [vmem:[%s1 + $0x830] sm:$0xff]
        %v482 = vld [vmem:[%s1 + $0x838] sm:$0xff]
        %v483 = vld [vmem:[%s1 + $0x840] sm:$0xff]
        %v484 = vld [vmem:[%s1 + $0x848] sm:$0xff]
        %v485 = vld [vmem:[%s1 + $0x850] sm:$0xff]
        %v486 = vld [vmem:[%s1 + $0x858] sm:$0xff]
        %v487 = vld [vmem:[%s1 + $0x860] sm:$0xff]
        %v488 = vld [vmem:[%s1 + $0x868] sm:$0xff]
        %v489 = vld [vmem:[%s1 + $0x870] sm:$0xff]
        %v490 = vld [vmem:[%s1 + $0x878] sm:$0xff]
        %v491 = vld [vmem:[%s1 + $0x880] sm:$0xff]
        %v492 = vld [vmem:[%s1 + $0x888] sm:$0xff]
        %v493 = vld [vmem:[%s1 + $0x890] sm:$0xff]
        %v494 = vld [vmem:[%s1 + $0x898] sm:$0xff]
        %v495 = vld [vmem:[%s1 + $0x8a0] sm:$0xff]
        %v496 = vld [vmem:[%s1 + $0x8a8] sm:$0xff]
        %v497 = vld [vmem:[%s1 + $0x8b0] sm:$0xff]
        %v498 = vld [vmem:[%s1 + $0x8b8] sm:$0xff]
        %v499 = vld [vmem:[%s1 + $0x8c0] sm:$0xff]
        %v500 = vld [vmem:[%s1 + $0x8c8] sm:$0xff]
        %v501 = vld [vmem:[%s1 + $0x8d0] sm:$0xff]
        %v502 = vld [vmem:[%s1 + $0x8d8] sm:$0xff]
        %v503 = vld [vmem:[%s1 + $0x8e0] sm:$0xff]
        %v504 = vld [vmem:[%s1 + $0x8e8] sm:$0xff]
        %v505 = vld [vmem:[%s1 + $0x8f0] sm:$0xff]
        %v506 = vld [vmem:[%s1 + $0x8f8] sm:$0xff]
        %v507 = vld [vmem:[%s1 + $0x900] sm:$0xff]
        %v508 = vld [vmem:[%s1 + $0x908] sm:$0xff]
        %v509 = vld [vmem:[%s1 + $0x910] sm:$0xff]
        %v510 = vld [vmem:[%s1 + $0x918] sm:$0xff]
        %v511 = vld [vmem:[%s1 + $0x920] sm:$0xff]
        %v512 = vld [vmem:[%s1 + $0x928] sm:$0xff]
        %v513 = vld [vmem:[%s1 + $0x930] sm:$0xff]
        %v514 = vld [vmem:[%s1 + $0x938] sm:$0xff]
        %v515 = vld [vmem:[%s1 + $0x940] sm:$0xff]
        %v516 = vld [vmem:[%s1 + $0x948] sm:$0xff]
        %v517 = vld [vmem:[%s1 + $0x950] sm:$0xff]
        %v518 = vld [vmem:[%s1 + $0x958] sm:$0xff]
        %v519 = vld [vmem:[%s1 + $0x960] sm:$0xff]
        %v520 = vld [vmem:[%s1 + $0x968] sm:$0xff]
        %v521 = vld [vmem:[%s1 + $0x970] sm:$0xff]
        %v522 = vld [vmem:[%s1 + $0x978] sm:$0xff]
        %v523 = vld [vmem:[%s1 + $0x980] sm:$0xff]
        %v524 = vld [vmem:[%s1 + $0x988] sm:$0xff]
        %v525 = vld [vmem:[%s1 + $0x990] sm:$0xff]
        %v526 = vld [vmem:[%s1 + $0x998] sm:$0xff]
        %v527 = vld [vmem:[%s1 + $0x9a0] sm:$0xff]
        %v528 = vld [vmem:[%s1 + $0x9a8] sm:$0xff]
        %v529 = vld [vmem:[%s1 + $0x9b0] sm:$0xff]
        %v530 = vld [vmem:[%s1 + $0x9b8] sm:$0xff]
        %v531 = vld [vmem:[%s1 + $0x9c0] sm:$0xff]
        %v532 = vld [vmem:[%s1 + $0x9c8] sm:$0xff]
        %v533 = vld [vmem:[%s1 + $0x9d0] sm:$0xff]
        %v534 = vld [vmem:[%s1 + $0x9d8] sm:$0xff]
        %v535 = vld [vmem:[%s1 + $0x9e0] sm:$0xff]
        %v536 = vld [vmem:[%s1 + $0x9e8] sm:$0xff]
        %v537 = vld [vmem:[%s1 + $0x9f0] sm:$0xff]
        %v538 = vld [vmem:[%s1 + $0x9f8] sm:$0xff]
        %v539 = vld [vmem:[%s1 + $0xa00] sm:$0xff]
        %v540 = vld [vmem:[%s1 + $0xa08] sm:$0xff]
        %v541 = vld [vmem:[%s1 + $0xa10] sm:$0xff]
        %v542 = vld [vmem:[%s1 + $0xa18] sm:$0xff]
        %v543 = vld [vmem:[%s1 + $0xa20] sm:$0xff]
        %v544 = vld [vmem:[%s1 + $0xa28] sm:$0xff]
        %v545 = vld [vmem:[%s1 + $0xa30] sm:$0xff]
        %v546 = vld [vmem:[%s1 + $0xa38] sm:$0xff]
        %v547 = vld [vmem:[%s1 + $0xa40] sm:$0xff]
        %v548 = vld [vmem:[%s1 + $0xa48] sm:$0xff]
        %v549 = vld [vmem:[%s1 + $0xa50] sm:$0xff]
        %v550 = vld [vmem:[%s1 + $0xa58] sm:$0xff]
        %v551 = vld [vmem:[%s1 + $0xa60] sm:$0xff]
        %v552 = vld [vmem:[%s1 + $0xa68] sm:$0xff]
        %v553 = vld [vmem:[%s1 + $0xa70] sm:$0xff]
        %v554 = vld [vmem:[%s1 + $0xa78] sm:$0xff]
        %v555 = vld [vmem:[%s1 + $0xa80] sm:$0xff]
        %v556 = vld [vmem:[%s1 + $0xa88] sm:$0xff]
        %v557 = vld [vmem:[%s1 + $0xa90] sm:$0xff]
        %v558 = vld [vmem:[%s1 + $0xa98] sm:$0xff]
        %v559 = vld [vmem:[%s1 + $0xaa0] sm:$0xff]
        %v560 = vld [vmem:[%s1 + $0xaa8] sm:$0xff]
        %v561 = vld [vmem:[%s1 + $0xab0] sm:$0xff]
        %v562 = vld [vmem:[%s1 + $0xab8] sm:$0xff]
        %v563 = vld [vmem:[%s1 + $0xac0] sm:$0xff]
        %v564 = vld [vmem:[%s1 + $0xac8] sm:$0xff]
        %v565 = vld [vmem:[%s1 + $0xad0] sm:$0xff]
        %v566 = vld [vmem:[%s1 + $0xad8] sm:$0xff]
        %v567 = vld [vmem:[%s1 + $0xae0] sm:$0xff]
        %v568 = vld [vmem:[%s1 + $0xae8] sm:$0xff]
        %v569 = vld [vmem:[%s1 + $0xaf0] sm:$0xff]
        %v570 = vld [vmem:[%s1 + $0xaf8] sm:$0xff]
        %v571 = vld [vmem:[%s1 + $0xb00] sm:$0xff]
        %v572 = vld [vmem:[%s1 + $0xb08] sm:$0xff]
        %v573 = vld [vmem:[%s1 + $0xb10] sm:$0xff]
        %v574 = vld [vmem:[%s1 + $0xb18] sm:$0xff]
        %v575 = vld [vmem:[%s1 + $0xb20] sm:$0xff]
        %v576 = vld [vmem:[%s1 + $0xb28] sm:$0xff]
        %v577 = vld [vmem:[%s1 + $0xb30] sm:$0xff]
        %v578 = vld [vmem:[%s1 + $0xb38] sm:$0xff]
        %v579 = vld [vmem:[%s1 + $0xb40] sm:$0xff]
        %v580 = vld [vmem:[%s1 + $0xb48] sm:$0xff]
        %v581 = vld [vmem:[%s1 + $0xb50] sm:$0xff]
        %v582 = vld [vmem:[%s1 + $0xb58] sm:$0xff]
        %v583 = vld [vmem:[%s1 + $0xb60] sm:$0xff]
        %v584 = vld [vmem:[%s1 + $0xb68] sm:$0xff]
        %v585 = vld [vmem:[%s1 + $0xb70] sm:$0xff]
        %v586 = vld [vmem:[%s1 + $0xb78] sm:$0xff]
        %v587 = vld [vmem:[%s1 + $0xb80] sm:$0xff]
        %v588 = vld [vmem:[%s1 + $0xb88] sm:$0xff]
        %v589 = vld [vmem:[%s1 + $0xb90] sm:$0xff]
        %v590 = vld [vmem:[%s1 + $0xb98] sm:$0xff]
        %v591 = vld [vmem:[%s1 + $0xba0] sm:$0xff]
        %v592 = vld [vmem:[%s1 + $0xba8] sm:$0xff]
        %v593 = vld [vmem:[%s1 + $0xbb0] sm:$0xff]
        %v594 = vld [vmem:[%s1 + $0xbb8] sm:$0xff]
        %v595 = vld [vmem:[%s1 + $0xbc0] sm:$0xff]
        %v596 = vld [vmem:[%s1 + $0xbc8] sm:$0xff]
        %v597 = vld [vmem:[%s1 + $0xbd0] sm:$0xff]
        %v598 = vld [vmem:[%s1 + $0xbd8] sm:$0xff]
        %v599 = vld [vmem:[%s1 + $0xbe0] sm:$0xff]
        %v600 = vld [vmem:[%s1 + $0xbe8] sm:$0xff]
        %v601 = vld [vmem:[%s1 + $0xbf0] sm:$0xff]
        %v602 = vld [vmem:[%s1 + $0xbf8] sm:$0xff]
        %v603 = vld [vmem:[%s1 + $0xc00] sm:$0xff]
        %v604 = vld [vmem:[%s1 + $0xc08] sm:$0xff]
        %v605 = vld [vmem:[%s1 + $0xc10] sm:$0xff]
        %v606 = vld [vmem:[%s1 + $0xc18] sm:$0xff]
        %v607 = vld [vmem:[%s1 + $0xc20] sm:$0xff]
        %v608 = vld [vmem:[%s1 + $0xc28] sm:$0xff]
        %v609 = vld [vmem:[%s1 + $0xc30] sm:$0xff]
        %v610 = vld [vmem:[%s1 + $0xc38] sm:$0xff]
        %v611 = vld [vmem:[%s1 + $0xc40] sm:$0xff]
        %v612 = vld [vmem:[%s1 + $0xc48] sm:$0xff]
        %v613 = vld [vmem:[%s1 + $0xc50] sm:$0xff]
        %v614 = vld [vmem:[%s1 + $0xc58] sm:$0xff]
        %v615 = vld [vmem:[%s1 + $0xc60] sm:$0xff]
        %v616 = vld [vmem:[%s1 + $0xc68] sm:$0xff]
        %v617 = vld [vmem:[%s1 + $0xc70] sm:$0xff]
        %v618 = vld [vmem:[%s1 + $0xc78] sm:$0xff]
        %v619 = vld [vmem:[%s1 + $0xc80] sm:$0xff]
        %v620 = vld [vmem:[%s1 + $0xc88] sm:$0xff]
        %v621 = vld [vmem:[%s1 + $0xc90] sm:$0xff]
        %v622 = vld [vmem:[%s1 + $0xc98] sm:$0xff]
        %v623 = vld [vmem:[%s1 + $0xca0] sm:$0xff]
        %v624 = vld [vmem:[%s1 + $0xca8] sm:$0xff]
        %v625 = vld [vmem:[%s1 + $0xcb0] sm:$0xff]
        %v626 = vld [vmem:[%s1 + $0xcb8] sm:$0xff]
        %v627 = vld [vmem:[%s1 + $0xcc0] sm:$0xff]
        %v628 = vld [vmem:[%s1 + $0xcc8] sm:$0xff]
        %v629 = vld [vmem:[%s1 + $0xcd0] sm:$0xff]
        %v630 = vld [vmem:[%s1 + $0xcd8] sm:$0xff]
        %v631 = vld [vmem:[%s1 + $0xce0] sm:$0xff]
        %v632 = vld [vmem:[%s1 + $0xce8] sm:$0xff]
        %v633 = vld [vmem:[%s1 + $0xcf0] sm:$0xff]
        %v634 = vld [vmem:[%s1 + $0xcf8] sm:$0xff]
        %v635 = vld [vmem:[%s1 + $0xd00] sm:$0xff]
        %v636 = vld [vmem:[%s1 + $0xd08] sm:$0xff]
        %v637 = vld [vmem:[%s1 + $0xd10] sm:$0xff]
        %v638 = vld [vmem:[%s1 + $0xd18] sm:$0xff]
        %v639 = vld [vmem:[%s1 + $0xd20] sm:$0xff]
        %v640 = vld [vmem:[%s1 + $0xd28] sm:$0xff]
        %v641 = vld [vmem:[%s1 + $0xd30] sm:$0xff]
        %v642 = vld [vmem:[%s1 + $0xd38] sm:$0xff]
        %v643 = vld [vmem:[%s1 + $0xd40] sm:$0xff]
        %v644 = vld [vmem:[%s1 + $0xd48] sm:$0xff]
        %v645 = vld [vmem:[%s1 + $0xd50] sm:$0xff]
        %v646 = vld [vmem:[%s1 + $0xd58] sm:$0xff]
        %v647 = vld [vmem:[%s1 + $0xd60] sm:$0xff]
        %v648 = vld [vmem:[%s1 + $0xd68] sm:$0xff]
        %v649 = vld [vmem:[%s1 + $0xd70] sm:$0xff]
        %v650 = vld [vmem:[%s1 + $0xd78] sm:$0xff]
        %v651 = vld [vmem:[%s1 + $0xd80] sm:$0xff]
        %v652 = vld [vmem:[%s1 + $0xd88] sm:$0xff]
        %v653 = vld [vmem:[%s1 + $0xd90] sm:$0xff]
        %v654 = vld [vmem:[%s1 + $0xd98] sm:$0xff]
        %v655 = vld [vmem:[%s1 + $0xda0] sm:$0xff]
        %v656 = vld [vmem:[%s1 + $0xda8] sm:$0xff]
        %v657 = vld [vmem:[%s1 + $0xdb0] sm:$0xff]
        %v658 = vld [vmem:[%s1 + $0xdb8] sm:$0xff]
        %v659 = vld [vmem:[%s1 + $0xdc0] sm:$0xff]
        %v660 = vld [vmem:[%s1 + $0xdc8] sm:$0xff]
        %v661 = vld [vmem:[%s1 + $0xdd0] sm:$0xff]
        %v662 = vld [vmem:[%s1 + $0xdd8] sm:$0xff]
        %v663 = vld [vmem:[%s1 + $0xde0] sm:$0xff]
        %v664 = vld [vmem:[%s1 + $0xde8] sm:$0xff]
        %v665 = vld [vmem:[%s1 + $0xdf0] sm:$0xff]
        %v666 = vld [vmem:[%s1 + $0xdf8] sm:$0xff]
        %v667 = vld [vmem:[%s1 + $0xe00] sm:$0xff]
        %v668 = vld [vmem:[%s1 + $0xe08] sm:$0xff]
        %v669 = vld [vmem:[%s1 + $0xe10] sm:$0xff]
        %v670 = vld [vmem:[%s1 + $0xe18] sm:$0xff]
        %v671 = vld [vmem:[%s1 + $0xe20] sm:$0xff]
        %v672 = vld [vmem:[%s1 + $0xe28] sm:$0xff]
        %v673 = vld [vmem:[%s1 + $0xe30] sm:$0xff]
        %v674 = vld [vmem:[%s1 + $0xe38] sm:$0xff]
        %v675 = vld [vmem:[%s1 + $0xe40] sm:$0xff]
        %v676 = vld [vmem:[%s1 + $0xe48] sm:$0xff]
        %v677 = vld [vmem:[%s1 + $0xe50] sm:$0xff]
        %v678 = vld [vmem:[%s1 + $0xe58] sm:$0xff]
        %v679 = vld [vmem:[%s1 + $0xe60] sm:$0xff]
        %v680 = vld [vmem:[%s1 + $0xe68] sm:$0xff]
        %v681 = vld [vmem:[%s1 + $0xe70] sm:$0xff]
        %v682 = vld [vmem:[%s1 + $0xe78] sm:$0xff]
        %v683 = vld [vmem:[%s1 + $0xe80] sm:$0xff]
        %v684 = vld [vmem:[%s1 + $0xe88] sm:$0xff]
        %v685 = vld [vmem:[%s1 + $0xe90] sm:$0xff]
        %v686 = vld [vmem:[%s1 + $0xe98] sm:$0xff]
        %v687 = vld [vmem:[%s1 + $0xea0] sm:$0xff]
        %v688 = vld [vmem:[%s1 + $0xea8] sm:$0xff]
        %v689 = vld [vmem:[%s1 + $0xeb0] sm:$0xff]
        %v690 = vld [vmem:[%s1 + $0xeb8] sm:$0xff]
        %v691 = vld [vmem:[%s1 + $0xec0] sm:$0xff]
        %v692 = vld [vmem:[%s1 + $0xec8] sm:$0xff]
        %v693 = vld [vmem:[%s1 + $0xed0] sm:$0xff]
        %v694 = vld [vmem:[%s1 + $0xed8] sm:$0xff]
        %v695 = vld [vmem:[%s1 + $0xee0] sm:$0xff]
        %v696 = vld [vmem:[%s1 + $0xee8] sm:$0xff]
        %v697 = vld [vmem:[%s1 + $0xef0] sm:$0xff]
        %v698 = vld [vmem:[%s1 + $0xef8] sm:$0xff]
        %v699 = vld [vmem:[%s1 + $0xf00] sm:$0xff]
        %v700 = vld [vmem:[%s1 + $0xf08] sm:$0xff]
        %v701 = vld [vmem:[%s1 + $0xf10] sm:$0xff]
        %v702 = vld [vmem:[%s1 + $0xf18] sm:$0xff]
        %v703 = vld [vmem:[%s1 + $0xf20] sm:$0xff]
        %v704 = vld [vmem:[%s1 + $0xf28] sm:$0xff]
        %v705 = vld [vmem:[%s1 + $0xf30] sm:$0xff]
        %v706 = vld [vmem:[%s1 + $0xf38] sm:$0xff]
        %v707 = vld [vmem:[%s1 + $0xf40] sm:$0xff]
        %v708 = vld [vmem:[%s1 + $0xf48] sm:$0xff]
        %v709 = vld [vmem:[%s1 + $0xf50] sm:$0xff]
        %v710 = vld [vmem:[%s1 + $0xf58] sm:$0xff]
        %v711 = vld [vmem:[%s1 + $0xf60] sm:$0xff]
        %v712 = vld [vmem:[%s1 + $0xf68] sm:$0xff]
        %v713 = vld [vmem:[%s1 + $0xf70] sm:$0xff]
        %v714 = vld [vmem:[%s1 + $0xf78] sm:$0xff]
        %v715 = vld [vmem:[%s1 + $0xf80] sm:$0xff]
        %v716 = vld [vmem:[%s1 + $0xf88] sm:$0xff]
        %v717 = vld [vmem:[%s1 + $0xf90] sm:$0xff]
        %v718 = vld [vmem:[%s1 + $0xf98] sm:$0xff]
        %v719 = vld [vmem:[%s1 + $0xfa0] sm:$0xff]
        %v720 = vld [vmem:[%s1 + $0xfa8] sm:$0xff]
        %v721 = vld [vmem:[%s1 + $0xfb0] sm:$0xff]
        %v722 = vld [vmem:[%s1 + $0xfb8] sm:$0xff]
        %v723 = vld [vmem:[%s1 + $0xfc0] sm:$0xff]
        %v724 = vld [vmem:[%s1 + $0xfc8] sm:$0xff]
        %v725 = vld [vmem:[%s1 + $0xfd0] sm:$0xff]
        %v726 = vld [vmem:[%s1 + $0xfd8] sm:$0xff]
        %v727 = vld [vmem:[%s1 + $0xfe0] sm:$0xff]
        %v728 = vld [vmem:[%s1 + $0xfe8] sm:$0xff]
        %v729 = vld [vmem:[%s1 + $0xff0] sm:$0xff]
        %v730 = vld [vmem:[%s1 + $0xff8] sm:$0xff]
        %s731 = scalar_lea.vmem %s208, 2
        %v732 = vld [vmem:[%s731] sm:$0x3]
        %s733 = scalar_lea.vmem %s1, 4096
        %v734 = vld [vmem:[%s733] sm:$0xff]
        %v735 = vld [vmem:[%s733 + $0x8] sm:$0xff]
        %v736 = vld [vmem:[%s733 + $0x10] sm:$0xff]
        %v737 = vld [vmem:[%s733 + $0x18] sm:$0xff]
        %v738 = vld [vmem:[%s733 + $0x20] sm:$0xff]
        %v739 = vld [vmem:[%s733 + $0x28] sm:$0xff]
        %v740 = vld [vmem:[%s733 + $0x30] sm:$0xff]
        %v741 = vld [vmem:[%s733 + $0x38] sm:$0xff]
        %v742 = vld [vmem:[%s733 + $0x40] sm:$0xff]
        %v743 = vld [vmem:[%s733 + $0x48] sm:$0xff]
        %v744 = vld [vmem:[%s733 + $0x50] sm:$0xff]
        %v745 = vld [vmem:[%s733 + $0x58] sm:$0xff]
        %v746 = vld [vmem:[%s733 + $0x60] sm:$0xff]
        %v747 = vld [vmem:[%s733 + $0x68] sm:$0xff]
        %v748 = vld [vmem:[%s733 + $0x70] sm:$0xff]
        %v749 = vld [vmem:[%s733 + $0x78] sm:$0xff]
        %v750 = vld [vmem:[%s733 + $0x80] sm:$0xff]
        %v751 = vld [vmem:[%s733 + $0x88] sm:$0xff]
        %v752 = vld [vmem:[%s733 + $0x90] sm:$0xff]
        %v753 = vld [vmem:[%s733 + $0x98] sm:$0xff]
        %v754 = vld [vmem:[%s733 + $0xa0] sm:$0xff]
        %v755 = vld [vmem:[%s733 + $0xa8] sm:$0xff]
        %v756 = vld [vmem:[%s733 + $0xb0] sm:$0xff]
        %v757 = vld [vmem:[%s733 + $0xb8] sm:$0xff]
        %v758 = vld [vmem:[%s733 + $0xc0] sm:$0xff]
        %v759 = vld [vmem:[%s733 + $0xc8] sm:$0xff]
        %v760 = vld [vmem:[%s733 + $0xd0] sm:$0xff]
        %v761 = vld [vmem:[%s733 + $0xd8] sm:$0xff]
        %v762 = vld [vmem:[%s733 + $0xe0] sm:$0xff]
        %v763 = vld [vmem:[%s733 + $0xe8] sm:$0xff]
        %v764 = vld [vmem:[%s733 + $0xf0] sm:$0xff]
        %v765 = vld [vmem:[%s733 + $0xf8] sm:$0xff]
        %v766 = vld [vmem:[%s733 + $0x100] sm:$0xff]
        %v767 = vld [vmem:[%s733 + $0x108] sm:$0xff]
        %v768 = vld [vmem:[%s733 + $0x110] sm:$0xff]
        %v769 = vld [vmem:[%s733 + $0x118] sm:$0xff]
        %v770 = vld [vmem:[%s733 + $0x120] sm:$0xff]
        %v771 = vld [vmem:[%s733 + $0x128] sm:$0xff]
        %v772 = vld [vmem:[%s733 + $0x130] sm:$0xff]
        %v773 = vld [vmem:[%s733 + $0x138] sm:$0xff]
        %v774 = vld [vmem:[%s733 + $0x140] sm:$0xff]
        %v775 = vld [vmem:[%s733 + $0x148] sm:$0xff]
        %v776 = vld [vmem:[%s733 + $0x150] sm:$0xff]
        %v777 = vld [vmem:[%s733 + $0x158] sm:$0xff]
        %v778 = vld [vmem:[%s733 + $0x160] sm:$0xff]
        %v779 = vld [vmem:[%s733 + $0x168] sm:$0xff]
        %v780 = vld [vmem:[%s733 + $0x170] sm:$0xff]
        %v781 = vld [vmem:[%s733 + $0x178] sm:$0xff]
        %v782 = vld [vmem:[%s733 + $0x180] sm:$0xff]
        %v783 = vld [vmem:[%s733 + $0x188] sm:$0xff]
        %v784 = vld [vmem:[%s733 + $0x190] sm:$0xff]
        %v785 = vld [vmem:[%s733 + $0x198] sm:$0xff]
        %v786 = vld [vmem:[%s733 + $0x1a0] sm:$0xff]
        %v787 = vld [vmem:[%s733 + $0x1a8] sm:$0xff]
        %v788 = vld [vmem:[%s733 + $0x1b0] sm:$0xff]
        %v789 = vld [vmem:[%s733 + $0x1b8] sm:$0xff]
        %v790 = vld [vmem:[%s733 + $0x1c0] sm:$0xff]
        %v791 = vld [vmem:[%s733 + $0x1c8] sm:$0xff]
        %v792 = vld [vmem:[%s733 + $0x1d0] sm:$0xff]
        %v793 = vld [vmem:[%s733 + $0x1d8] sm:$0xff]
        %v794 = vld [vmem:[%s733 + $0x1e0] sm:$0xff]
        %v795 = vld [vmem:[%s733 + $0x1e8] sm:$0xff]
        %v796 = vld [vmem:[%s733 + $0x1f0] sm:$0xff]
        %v797 = vld [vmem:[%s733 + $0x1f8] sm:$0xff]
        %v798 = vld [vmem:[%s733 + $0x200] sm:$0xff]
        %v799 = vld [vmem:[%s733 + $0x208] sm:$0xff]
        %v800 = vld [vmem:[%s733 + $0x210] sm:$0xff]
        %v801 = vld [vmem:[%s733 + $0x218] sm:$0xff]
        %v802 = vld [vmem:[%s733 + $0x220] sm:$0xff]
        %v803 = vld [vmem:[%s733 + $0x228] sm:$0xff]
        %v804 = vld [vmem:[%s733 + $0x230] sm:$0xff]
        %v805 = vld [vmem:[%s733 + $0x238] sm:$0xff]
        %v806 = vld [vmem:[%s733 + $0x240] sm:$0xff]
        %v807 = vld [vmem:[%s733 + $0x248] sm:$0xff]
        %v808 = vld [vmem:[%s733 + $0x250] sm:$0xff]
        %v809 = vld [vmem:[%s733 + $0x258] sm:$0xff]
        %v810 = vld [vmem:[%s733 + $0x260] sm:$0xff]
        %v811 = vld [vmem:[%s733 + $0x268] sm:$0xff]
        %v812 = vld [vmem:[%s733 + $0x270] sm:$0xff]
        %v813 = vld [vmem:[%s733 + $0x278] sm:$0xff]
        %v814 = vld [vmem:[%s733 + $0x280] sm:$0xff]
        %v815 = vld [vmem:[%s733 + $0x288] sm:$0xff]
        %v816 = vld [vmem:[%s733 + $0x290] sm:$0xff]
        %v817 = vld [vmem:[%s733 + $0x298] sm:$0xff]
        %v818 = vld [vmem:[%s733 + $0x2a0] sm:$0xff]
        %v819 = vld [vmem:[%s733 + $0x2a8] sm:$0xff]
        %v820 = vld [vmem:[%s733 + $0x2b0] sm:$0xff]
        %v821 = vld [vmem:[%s733 + $0x2b8] sm:$0xff]
        %v822 = vld [vmem:[%s733 + $0x2c0] sm:$0xff]
        %v823 = vld [vmem:[%s733 + $0x2c8] sm:$0xff]
        %v824 = vld [vmem:[%s733 + $0x2d0] sm:$0xff]
        %v825 = vld [vmem:[%s733 + $0x2d8] sm:$0xff]
        %v826 = vld [vmem:[%s733 + $0x2e0] sm:$0xff]
        %v827 = vld [vmem:[%s733 + $0x2e8] sm:$0xff]
        %v828 = vld [vmem:[%s733 + $0x2f0] sm:$0xff]
        %v829 = vld [vmem:[%s733 + $0x2f8] sm:$0xff]
        %v830 = vld [vmem:[%s733 + $0x300] sm:$0xff]
        %v831 = vld [vmem:[%s733 + $0x308] sm:$0xff]
        %v832 = vld [vmem:[%s733 + $0x310] sm:$0xff]
        %v833 = vld [vmem:[%s733 + $0x318] sm:$0xff]
        %v834 = vld [vmem:[%s733 + $0x320] sm:$0xff]
        %v835 = vld [vmem:[%s733 + $0x328] sm:$0xff]
        %v836 = vld [vmem:[%s733 + $0x330] sm:$0xff]
        %v837 = vld [vmem:[%s733 + $0x338] sm:$0xff]
        %v838 = vld [vmem:[%s733 + $0x340] sm:$0xff]
        %v839 = vld [vmem:[%s733 + $0x348] sm:$0xff]
        %v840 = vld [vmem:[%s733 + $0x350] sm:$0xff]
        %v841 = vld [vmem:[%s733 + $0x358] sm:$0xff]
        %v842 = vld [vmem:[%s733 + $0x360] sm:$0xff]
        %v843 = vld [vmem:[%s733 + $0x368] sm:$0xff]
        %v844 = vld [vmem:[%s733 + $0x370] sm:$0xff]
        %v845 = vld [vmem:[%s733 + $0x378] sm:$0xff]
        %v846 = vld [vmem:[%s733 + $0x380] sm:$0xff]
        %v847 = vld [vmem:[%s733 + $0x388] sm:$0xff]
        %v848 = vld [vmem:[%s733 + $0x390] sm:$0xff]
        %v849 = vld [vmem:[%s733 + $0x398] sm:$0xff]
        %v850 = vld [vmem:[%s733 + $0x3a0] sm:$0xff]
        %v851 = vld [vmem:[%s733 + $0x3a8] sm:$0xff]
        %v852 = vld [vmem:[%s733 + $0x3b0] sm:$0xff]
        %v853 = vld [vmem:[%s733 + $0x3b8] sm:$0xff]
        %v854 = vld [vmem:[%s733 + $0x3c0] sm:$0xff]
        %v855 = vld [vmem:[%s733 + $0x3c8] sm:$0xff]
        %v856 = vld [vmem:[%s733 + $0x3d0] sm:$0xff]
        %v857 = vld [vmem:[%s733 + $0x3d8] sm:$0xff]
        %v858 = vld [vmem:[%s733 + $0x3e0] sm:$0xff]
        %v859 = vld [vmem:[%s733 + $0x3e8] sm:$0xff]
        %v860 = vld [vmem:[%s733 + $0x3f0] sm:$0xff]
        %v861 = vld [vmem:[%s733 + $0x3f8] sm:$0xff]
        %v862 = vld [vmem:[%s733 + $0x400] sm:$0xff]
        %v863 = vld [vmem:[%s733 + $0x408] sm:$0xff]
        %v864 = vld [vmem:[%s733 + $0x410] sm:$0xff]
        %v865 = vld [vmem:[%s733 + $0x418] sm:$0xff]
        %v866 = vld [vmem:[%s733 + $0x420] sm:$0xff]
        %v867 = vld [vmem:[%s733 + $0x428] sm:$0xff]
        %v868 = vld [vmem:[%s733 + $0x430] sm:$0xff]
        %v869 = vld [vmem:[%s733 + $0x438] sm:$0xff]
        %v870 = vld [vmem:[%s733 + $0x440] sm:$0xff]
        %v871 = vld [vmem:[%s733 + $0x448] sm:$0xff]
        %v872 = vld [vmem:[%s733 + $0x450] sm:$0xff]
        %v873 = vld [vmem:[%s733 + $0x458] sm:$0xff]
        %v874 = vld [vmem:[%s733 + $0x460] sm:$0xff]
        %v875 = vld [vmem:[%s733 + $0x468] sm:$0xff]
        %v876 = vld [vmem:[%s733 + $0x470] sm:$0xff]
        %v877 = vld [vmem:[%s733 + $0x478] sm:$0xff]
        %v878 = vld [vmem:[%s733 + $0x480] sm:$0xff]
        %v879 = vld [vmem:[%s733 + $0x488] sm:$0xff]
        %v880 = vld [vmem:[%s733 + $0x490] sm:$0xff]
        %v881 = vld [vmem:[%s733 + $0x498] sm:$0xff]
        %v882 = vld [vmem:[%s733 + $0x4a0] sm:$0xff]
        %v883 = vld [vmem:[%s733 + $0x4a8] sm:$0xff]
        %v884 = vld [vmem:[%s733 + $0x4b0] sm:$0xff]
        %v885 = vld [vmem:[%s733 + $0x4b8] sm:$0xff]
        %v886 = vld [vmem:[%s733 + $0x4c0] sm:$0xff]
        %v887 = vld [vmem:[%s733 + $0x4c8] sm:$0xff]
        %v888 = vld [vmem:[%s733 + $0x4d0] sm:$0xff]
        %v889 = vld [vmem:[%s733 + $0x4d8] sm:$0xff]
        %v890 = vld [vmem:[%s733 + $0x4e0] sm:$0xff]
        %v891 = vld [vmem:[%s733 + $0x4e8] sm:$0xff]
        %v892 = vld [vmem:[%s733 + $0x4f0] sm:$0xff]
        %v893 = vld [vmem:[%s733 + $0x4f8] sm:$0xff]
        %v894 = vld [vmem:[%s733 + $0x500] sm:$0xff]
        %v895 = vld [vmem:[%s733 + $0x508] sm:$0xff]
        %v896 = vld [vmem:[%s733 + $0x510] sm:$0xff]
        %v897 = vld [vmem:[%s733 + $0x518] sm:$0xff]
        %v898 = vld [vmem:[%s733 + $0x520] sm:$0xff]
        %v899 = vld [vmem:[%s733 + $0x528] sm:$0xff]
        %v900 = vld [vmem:[%s733 + $0x530] sm:$0xff]
        %v901 = vld [vmem:[%s733 + $0x538] sm:$0xff]
        %v902 = vld [vmem:[%s733 + $0x540] sm:$0xff]
        %v903 = vld [vmem:[%s733 + $0x548] sm:$0xff]
        %v904 = vld [vmem:[%s733 + $0x550] sm:$0xff]
        %v905 = vld [vmem:[%s733 + $0x558] sm:$0xff]
        %v906 = vld [vmem:[%s733 + $0x560] sm:$0xff]
        %v907 = vld [vmem:[%s733 + $0x568] sm:$0xff]
        %v908 = vld [vmem:[%s733 + $0x570] sm:$0xff]
        %v909 = vld [vmem:[%s733 + $0x578] sm:$0xff]
        %v910 = vld [vmem:[%s733 + $0x580] sm:$0xff]
        %v911 = vld [vmem:[%s733 + $0x588] sm:$0xff]
        %v912 = vld [vmem:[%s733 + $0x590] sm:$0xff]
        %v913 = vld [vmem:[%s733 + $0x598] sm:$0xff]
        %v914 = vld [vmem:[%s733 + $0x5a0] sm:$0xff]
        %v915 = vld [vmem:[%s733 + $0x5a8] sm:$0xff]
        %v916 = vld [vmem:[%s733 + $0x5b0] sm:$0xff]
        %v917 = vld [vmem:[%s733 + $0x5b8] sm:$0xff]
        %v918 = vld [vmem:[%s733 + $0x5c0] sm:$0xff]
        %v919 = vld [vmem:[%s733 + $0x5c8] sm:$0xff]
        %v920 = vld [vmem:[%s733 + $0x5d0] sm:$0xff]
        %v921 = vld [vmem:[%s733 + $0x5d8] sm:$0xff]
        %v922 = vld [vmem:[%s733 + $0x5e0] sm:$0xff]
        %v923 = vld [vmem:[%s733 + $0x5e8] sm:$0xff]
        %v924 = vld [vmem:[%s733 + $0x5f0] sm:$0xff]
        %v925 = vld [vmem:[%s733 + $0x5f8] sm:$0xff]
        %v926 = vld [vmem:[%s733 + $0x600] sm:$0xff]
        %v927 = vld [vmem:[%s733 + $0x608] sm:$0xff]
        %v928 = vld [vmem:[%s733 + $0x610] sm:$0xff]
        %v929 = vld [vmem:[%s733 + $0x618] sm:$0xff]
        %v930 = vld [vmem:[%s733 + $0x620] sm:$0xff]
        %v931 = vld [vmem:[%s733 + $0x628] sm:$0xff]
        %v932 = vld [vmem:[%s733 + $0x630] sm:$0xff]
        %v933 = vld [vmem:[%s733 + $0x638] sm:$0xff]
        %v934 = vld [vmem:[%s733 + $0x640] sm:$0xff]
        %v935 = vld [vmem:[%s733 + $0x648] sm:$0xff]
        %v936 = vld [vmem:[%s733 + $0x650] sm:$0xff]
        %v937 = vld [vmem:[%s733 + $0x658] sm:$0xff]
        %v938 = vld [vmem:[%s733 + $0x660] sm:$0xff]
        %v939 = vld [vmem:[%s733 + $0x668] sm:$0xff]
        %v940 = vld [vmem:[%s733 + $0x670] sm:$0xff]
        %v941 = vld [vmem:[%s733 + $0x678] sm:$0xff]
        %v942 = vld [vmem:[%s733 + $0x680] sm:$0xff]
        %v943 = vld [vmem:[%s733 + $0x688] sm:$0xff]
        %v944 = vld [vmem:[%s733 + $0x690] sm:$0xff]
        %v945 = vld [vmem:[%s733 + $0x698] sm:$0xff]
        %v946 = vld [vmem:[%s733 + $0x6a0] sm:$0xff]
        %v947 = vld [vmem:[%s733 + $0x6a8] sm:$0xff]
        %v948 = vld [vmem:[%s733 + $0x6b0] sm:$0xff]
        %v949 = vld [vmem:[%s733 + $0x6b8] sm:$0xff]
        %v950 = vld [vmem:[%s733 + $0x6c0] sm:$0xff]
        %v951 = vld [vmem:[%s733 + $0x6c8] sm:$0xff]
        %v952 = vld [vmem:[%s733 + $0x6d0] sm:$0xff]
        %v953 = vld [vmem:[%s733 + $0x6d8] sm:$0xff]
        %v954 = vld [vmem:[%s733 + $0x6e0] sm:$0xff]
        %v955 = vld [vmem:[%s733 + $0x6e8] sm:$0xff]
        %v956 = vld [vmem:[%s733 + $0x6f0] sm:$0xff]
        %v957 = vld [vmem:[%s733 + $0x6f8] sm:$0xff]
        %v958 = vld [vmem:[%s733 + $0x700] sm:$0xff]
        %v959 = vld [vmem:[%s733 + $0x708] sm:$0xff]
        %v960 = vld [vmem:[%s733 + $0x710] sm:$0xff]
        %v961 = vld [vmem:[%s733 + $0x718] sm:$0xff]
        %v962 = vld [vmem:[%s733 + $0x720] sm:$0xff]
        %v963 = vld [vmem:[%s733 + $0x728] sm:$0xff]
        %v964 = vld [vmem:[%s733 + $0x730] sm:$0xff]
        %v965 = vld [vmem:[%s733 + $0x738] sm:$0xff]
        %v966 = vld [vmem:[%s733 + $0x740] sm:$0xff]
        %v967 = vld [vmem:[%s733 + $0x748] sm:$0xff]
        %v968 = vld [vmem:[%s733 + $0x750] sm:$0xff]
        %v969 = vld [vmem:[%s733 + $0x758] sm:$0xff]
        %v970 = vld [vmem:[%s733 + $0x760] sm:$0xff]
        %v971 = vld [vmem:[%s733 + $0x768] sm:$0xff]
        %v972 = vld [vmem:[%s733 + $0x770] sm:$0xff]
        %v973 = vld [vmem:[%s733 + $0x778] sm:$0xff]
        %v974 = vld [vmem:[%s733 + $0x780] sm:$0xff]
        %v975 = vld [vmem:[%s733 + $0x788] sm:$0xff]
        %v976 = vld [vmem:[%s733 + $0x790] sm:$0xff]
        %v977 = vld [vmem:[%s733 + $0x798] sm:$0xff]
        %v978 = vld [vmem:[%s733 + $0x7a0] sm:$0xff]
        %v979 = vld [vmem:[%s733 + $0x7a8] sm:$0xff]
        %v980 = vld [vmem:[%s733 + $0x7b0] sm:$0xff]
        %v981 = vld [vmem:[%s733 + $0x7b8] sm:$0xff]
        %v982 = vld [vmem:[%s733 + $0x7c0] sm:$0xff]
        %v983 = vld [vmem:[%s733 + $0x7c8] sm:$0xff]
        %v984 = vld [vmem:[%s733 + $0x7d0] sm:$0xff]
        %v985 = vld [vmem:[%s733 + $0x7d8] sm:$0xff]
        %v986 = vld [vmem:[%s733 + $0x7e0] sm:$0xff]
        %v987 = vld [vmem:[%s733 + $0x7e8] sm:$0xff]
        %v988 = vld [vmem:[%s733 + $0x7f0] sm:$0xff]
        %v989 = vld [vmem:[%s733 + $0x7f8] sm:$0xff]
        %v990 = vld [vmem:[%s733 + $0x800] sm:$0xff]
        %v991 = vld [vmem:[%s733 + $0x808] sm:$0xff]
        %v992 = vld [vmem:[%s733 + $0x810] sm:$0xff]
        %v993 = vld [vmem:[%s733 + $0x818] sm:$0xff]
        %v994 = vld [vmem:[%s733 + $0x820] sm:$0xff]
        %v995 = vld [vmem:[%s733 + $0x828] sm:$0xff]
        %v996 = vld [vmem:[%s733 + $0x830] sm:$0xff]
        %v997 = vld [vmem:[%s733 + $0x838] sm:$0xff]
        %v998 = vld [vmem:[%s733 + $0x840] sm:$0xff]
        %v999 = vld [vmem:[%s733 + $0x848] sm:$0xff]
        %v1000 = vld [vmem:[%s733 + $0x850] sm:$0xff]
        %v1001 = vld [vmem:[%s733 + $0x858] sm:$0xff]
        %v1002 = vld [vmem:[%s733 + $0x860] sm:$0xff]
        %v1003 = vld [vmem:[%s733 + $0x868] sm:$0xff]
        %v1004 = vld [vmem:[%s733 + $0x870] sm:$0xff]
        %v1005 = vld [vmem:[%s733 + $0x878] sm:$0xff]
        %v1006 = vld [vmem:[%s733 + $0x880] sm:$0xff]
        %v1007 = vld [vmem:[%s733 + $0x888] sm:$0xff]
        %v1008 = vld [vmem:[%s733 + $0x890] sm:$0xff]
        %v1009 = vld [vmem:[%s733 + $0x898] sm:$0xff]
        %v1010 = vld [vmem:[%s733 + $0x8a0] sm:$0xff]
        %v1011 = vld [vmem:[%s733 + $0x8a8] sm:$0xff]
        %v1012 = vld [vmem:[%s733 + $0x8b0] sm:$0xff]
        %v1013 = vld [vmem:[%s733 + $0x8b8] sm:$0xff]
        %v1014 = vld [vmem:[%s733 + $0x8c0] sm:$0xff]
        %v1015 = vld [vmem:[%s733 + $0x8c8] sm:$0xff]
        %v1016 = vld [vmem:[%s733 + $0x8d0] sm:$0xff]
        %v1017 = vld [vmem:[%s733 + $0x8d8] sm:$0xff]
        %v1018 = vld [vmem:[%s733 + $0x8e0] sm:$0xff]
        %v1019 = vld [vmem:[%s733 + $0x8e8] sm:$0xff]
        %v1020 = vld [vmem:[%s733 + $0x8f0] sm:$0xff]
        %v1021 = vld [vmem:[%s733 + $0x8f8] sm:$0xff]
        %v1022 = vld [vmem:[%s733 + $0x900] sm:$0xff]
        %v1023 = vld [vmem:[%s733 + $0x908] sm:$0xff]
        %v1024 = vld [vmem:[%s733 + $0x910] sm:$0xff]
        %v1025 = vld [vmem:[%s733 + $0x918] sm:$0xff]
        %v1026 = vld [vmem:[%s733 + $0x920] sm:$0xff]
        %v1027 = vld [vmem:[%s733 + $0x928] sm:$0xff]
        %v1028 = vld [vmem:[%s733 + $0x930] sm:$0xff]
        %v1029 = vld [vmem:[%s733 + $0x938] sm:$0xff]
        %v1030 = vld [vmem:[%s733 + $0x940] sm:$0xff]
        %v1031 = vld [vmem:[%s733 + $0x948] sm:$0xff]
        %v1032 = vld [vmem:[%s733 + $0x950] sm:$0xff]
        %v1033 = vld [vmem:[%s733 + $0x958] sm:$0xff]
        %v1034 = vld [vmem:[%s733 + $0x960] sm:$0xff]
        %v1035 = vld [vmem:[%s733 + $0x968] sm:$0xff]
        %v1036 = vld [vmem:[%s733 + $0x970] sm:$0xff]
        %v1037 = vld [vmem:[%s733 + $0x978] sm:$0xff]
        %v1038 = vld [vmem:[%s733 + $0x980] sm:$0xff]
        %v1039 = vld [vmem:[%s733 + $0x988] sm:$0xff]
        %v1040 = vld [vmem:[%s733 + $0x990] sm:$0xff]
        %v1041 = vld [vmem:[%s733 + $0x998] sm:$0xff]
        %v1042 = vld [vmem:[%s733 + $0x9a0] sm:$0xff]
        %v1043 = vld [vmem:[%s733 + $0x9a8] sm:$0xff]
        %v1044 = vld [vmem:[%s733 + $0x9b0] sm:$0xff]
        %v1045 = vld [vmem:[%s733 + $0x9b8] sm:$0xff]
        %v1046 = vld [vmem:[%s733 + $0x9c0] sm:$0xff]
        %v1047 = vld [vmem:[%s733 + $0x9c8] sm:$0xff]
        %v1048 = vld [vmem:[%s733 + $0x9d0] sm:$0xff]
        %v1049 = vld [vmem:[%s733 + $0x9d8] sm:$0xff]
        %v1050 = vld [vmem:[%s733 + $0x9e0] sm:$0xff]
        %v1051 = vld [vmem:[%s733 + $0x9e8] sm:$0xff]
        %v1052 = vld [vmem:[%s733 + $0x9f0] sm:$0xff]
        %v1053 = vld [vmem:[%s733 + $0x9f8] sm:$0xff]
        %v1054 = vld [vmem:[%s733 + $0xa00] sm:$0xff]
        %v1055 = vld [vmem:[%s733 + $0xa08] sm:$0xff]
        %v1056 = vld [vmem:[%s733 + $0xa10] sm:$0xff]
        %v1057 = vld [vmem:[%s733 + $0xa18] sm:$0xff]
        %v1058 = vld [vmem:[%s733 + $0xa20] sm:$0xff]
        %v1059 = vld [vmem:[%s733 + $0xa28] sm:$0xff]
        %v1060 = vld [vmem:[%s733 + $0xa30] sm:$0xff]
        %v1061 = vld [vmem:[%s733 + $0xa38] sm:$0xff]
        %v1062 = vld [vmem:[%s733 + $0xa40] sm:$0xff]
        %v1063 = vld [vmem:[%s733 + $0xa48] sm:$0xff]
        %v1064 = vld [vmem:[%s733 + $0xa50] sm:$0xff]
        %v1065 = vld [vmem:[%s733 + $0xa58] sm:$0xff]
        %v1066 = vld [vmem:[%s733 + $0xa60] sm:$0xff]
        %v1067 = vld [vmem:[%s733 + $0xa68] sm:$0xff]
        %v1068 = vld [vmem:[%s733 + $0xa70] sm:$0xff]
        %v1069 = vld [vmem:[%s733 + $0xa78] sm:$0xff]
        %v1070 = vld [vmem:[%s733 + $0xa80] sm:$0xff]
        %v1071 = vld [vmem:[%s733 + $0xa88] sm:$0xff]
        %v1072 = vld [vmem:[%s733 + $0xa90] sm:$0xff]
        %v1073 = vld [vmem:[%s733 + $0xa98] sm:$0xff]
        %v1074 = vld [vmem:[%s733 + $0xaa0] sm:$0xff]
        %v1075 = vld [vmem:[%s733 + $0xaa8] sm:$0xff]
        %v1076 = vld [vmem:[%s733 + $0xab0] sm:$0xff]
        %v1077 = vld [vmem:[%s733 + $0xab8] sm:$0xff]
        %v1078 = vld [vmem:[%s733 + $0xac0] sm:$0xff]
        %v1079 = vld [vmem:[%s733 + $0xac8] sm:$0xff]
        %v1080 = vld [vmem:[%s733 + $0xad0] sm:$0xff]
        %v1081 = vld [vmem:[%s733 + $0xad8] sm:$0xff]
        %v1082 = vld [vmem:[%s733 + $0xae0] sm:$0xff]
        %v1083 = vld [vmem:[%s733 + $0xae8] sm:$0xff]
        %v1084 = vld [vmem:[%s733 + $0xaf0] sm:$0xff]
        %v1085 = vld [vmem:[%s733 + $0xaf8] sm:$0xff]
        %v1086 = vld [vmem:[%s733 + $0xb00] sm:$0xff]
        %v1087 = vld [vmem:[%s733 + $0xb08] sm:$0xff]
        %v1088 = vld [vmem:[%s733 + $0xb10] sm:$0xff]
        %v1089 = vld [vmem:[%s733 + $0xb18] sm:$0xff]
        %v1090 = vld [vmem:[%s733 + $0xb20] sm:$0xff]
        %v1091 = vld [vmem:[%s733 + $0xb28] sm:$0xff]
        %v1092 = vld [vmem:[%s733 + $0xb30] sm:$0xff]
        %v1093 = vld [vmem:[%s733 + $0xb38] sm:$0xff]
        %v1094 = vld [vmem:[%s733 + $0xb40] sm:$0xff]
        %v1095 = vld [vmem:[%s733 + $0xb48] sm:$0xff]
        %v1096 = vld [vmem:[%s733 + $0xb50] sm:$0xff]
        %v1097 = vld [vmem:[%s733 + $0xb58] sm:$0xff]
        %v1098 = vld [vmem:[%s733 + $0xb60] sm:$0xff]
        %v1099 = vld [vmem:[%s733 + $0xb68] sm:$0xff]
        %v1100 = vld [vmem:[%s733 + $0xb70] sm:$0xff]
        %v1101 = vld [vmem:[%s733 + $0xb78] sm:$0xff]
        %v1102 = vld [vmem:[%s733 + $0xb80] sm:$0xff]
        %v1103 = vld [vmem:[%s733 + $0xb88] sm:$0xff]
        %v1104 = vld [vmem:[%s733 + $0xb90] sm:$0xff]
        %v1105 = vld [vmem:[%s733 + $0xb98] sm:$0xff]
        %v1106 = vld [vmem:[%s733 + $0xba0] sm:$0xff]
        %v1107 = vld [vmem:[%s733 + $0xba8] sm:$0xff]
        %v1108 = vld [vmem:[%s733 + $0xbb0] sm:$0xff]
        %v1109 = vld [vmem:[%s733 + $0xbb8] sm:$0xff]
        %v1110 = vld [vmem:[%s733 + $0xbc0] sm:$0xff]
        %v1111 = vld [vmem:[%s733 + $0xbc8] sm:$0xff]
        %v1112 = vld [vmem:[%s733 + $0xbd0] sm:$0xff]
        %v1113 = vld [vmem:[%s733 + $0xbd8] sm:$0xff]
        %v1114 = vld [vmem:[%s733 + $0xbe0] sm:$0xff]
        %v1115 = vld [vmem:[%s733 + $0xbe8] sm:$0xff]
        %v1116 = vld [vmem:[%s733 + $0xbf0] sm:$0xff]
        %v1117 = vld [vmem:[%s733 + $0xbf8] sm:$0xff]
        %v1118 = vld [vmem:[%s733 + $0xc00] sm:$0xff]
        %v1119 = vld [vmem:[%s733 + $0xc08] sm:$0xff]
        %v1120 = vld [vmem:[%s733 + $0xc10] sm:$0xff]
        %v1121 = vld [vmem:[%s733 + $0xc18] sm:$0xff]
        %v1122 = vld [vmem:[%s733 + $0xc20] sm:$0xff]
        %v1123 = vld [vmem:[%s733 + $0xc28] sm:$0xff]
        %v1124 = vld [vmem:[%s733 + $0xc30] sm:$0xff]
        %v1125 = vld [vmem:[%s733 + $0xc38] sm:$0xff]
        %v1126 = vld [vmem:[%s733 + $0xc40] sm:$0xff]
        %v1127 = vld [vmem:[%s733 + $0xc48] sm:$0xff]
        %v1128 = vld [vmem:[%s733 + $0xc50] sm:$0xff]
        %v1129 = vld [vmem:[%s733 + $0xc58] sm:$0xff]
        %v1130 = vld [vmem:[%s733 + $0xc60] sm:$0xff]
        %v1131 = vld [vmem:[%s733 + $0xc68] sm:$0xff]
        %v1132 = vld [vmem:[%s733 + $0xc70] sm:$0xff]
        %v1133 = vld [vmem:[%s733 + $0xc78] sm:$0xff]
        %v1134 = vld [vmem:[%s733 + $0xc80] sm:$0xff]
        %v1135 = vld [vmem:[%s733 + $0xc88] sm:$0xff]
        %v1136 = vld [vmem:[%s733 + $0xc90] sm:$0xff]
        %v1137 = vld [vmem:[%s733 + $0xc98] sm:$0xff]
        %v1138 = vld [vmem:[%s733 + $0xca0] sm:$0xff]
        %v1139 = vld [vmem:[%s733 + $0xca8] sm:$0xff]
        %v1140 = vld [vmem:[%s733 + $0xcb0] sm:$0xff]
        %v1141 = vld [vmem:[%s733 + $0xcb8] sm:$0xff]
        %v1142 = vld [vmem:[%s733 + $0xcc0] sm:$0xff]
        %v1143 = vld [vmem:[%s733 + $0xcc8] sm:$0xff]
        %v1144 = vld [vmem:[%s733 + $0xcd0] sm:$0xff]
        %v1145 = vld [vmem:[%s733 + $0xcd8] sm:$0xff]
        %v1146 = vld [vmem:[%s733 + $0xce0] sm:$0xff]
        %v1147 = vld [vmem:[%s733 + $0xce8] sm:$0xff]
        %v1148 = vld [vmem:[%s733 + $0xcf0] sm:$0xff]
        %v1149 = vld [vmem:[%s733 + $0xcf8] sm:$0xff]
        %v1150 = vld [vmem:[%s733 + $0xd00] sm:$0xff]
        %v1151 = vld [vmem:[%s733 + $0xd08] sm:$0xff]
        %v1152 = vld [vmem:[%s733 + $0xd10] sm:$0xff]
        %v1153 = vld [vmem:[%s733 + $0xd18] sm:$0xff]
        %v1154 = vld [vmem:[%s733 + $0xd20] sm:$0xff]
        %v1155 = vld [vmem:[%s733 + $0xd28] sm:$0xff]
        %v1156 = vld [vmem:[%s733 + $0xd30] sm:$0xff]
        %v1157 = vld [vmem:[%s733 + $0xd38] sm:$0xff]
        %v1158 = vld [vmem:[%s733 + $0xd40] sm:$0xff]
        %v1159 = vld [vmem:[%s733 + $0xd48] sm:$0xff]
        %v1160 = vld [vmem:[%s733 + $0xd50] sm:$0xff]
        %v1161 = vld [vmem:[%s733 + $0xd58] sm:$0xff]
        %v1162 = vld [vmem:[%s733 + $0xd60] sm:$0xff]
        %v1163 = vld [vmem:[%s733 + $0xd68] sm:$0xff]
        %v1164 = vld [vmem:[%s733 + $0xd70] sm:$0xff]
        %v1165 = vld [vmem:[%s733 + $0xd78] sm:$0xff]
        %v1166 = vld [vmem:[%s733 + $0xd80] sm:$0xff]
        %v1167 = vld [vmem:[%s733 + $0xd88] sm:$0xff]
        %v1168 = vld [vmem:[%s733 + $0xd90] sm:$0xff]
        %v1169 = vld [vmem:[%s733 + $0xd98] sm:$0xff]
        %v1170 = vld [vmem:[%s733 + $0xda0] sm:$0xff]
        %v1171 = vld [vmem:[%s733 + $0xda8] sm:$0xff]
        %v1172 = vld [vmem:[%s733 + $0xdb0] sm:$0xff]
        %v1173 = vld [vmem:[%s733 + $0xdb8] sm:$0xff]
        %v1174 = vld [vmem:[%s733 + $0xdc0] sm:$0xff]
        %v1175 = vld [vmem:[%s733 + $0xdc8] sm:$0xff]
        %v1176 = vld [vmem:[%s733 + $0xdd0] sm:$0xff]
        %v1177 = vld [vmem:[%s733 + $0xdd8] sm:$0xff]
        %v1178 = vld [vmem:[%s733 + $0xde0] sm:$0xff]
        %v1179 = vld [vmem:[%s733 + $0xde8] sm:$0xff]
        %v1180 = vld [vmem:[%s733 + $0xdf0] sm:$0xff]
        %v1181 = vld [vmem:[%s733 + $0xdf8] sm:$0xff]
        %v1182 = vld [vmem:[%s733 + $0xe00] sm:$0xff]
        %v1183 = vld [vmem:[%s733 + $0xe08] sm:$0xff]
        %v1184 = vld [vmem:[%s733 + $0xe10] sm:$0xff]
        %v1185 = vld [vmem:[%s733 + $0xe18] sm:$0xff]
        %v1186 = vld [vmem:[%s733 + $0xe20] sm:$0xff]
        %v1187 = vld [vmem:[%s733 + $0xe28] sm:$0xff]
        %v1188 = vld [vmem:[%s733 + $0xe30] sm:$0xff]
        %v1189 = vld [vmem:[%s733 + $0xe38] sm:$0xff]
        %v1190 = vld [vmem:[%s733 + $0xe40] sm:$0xff]
        %v1191 = vld [vmem:[%s733 + $0xe48] sm:$0xff]
        %v1192 = vld [vmem:[%s733 + $0xe50] sm:$0xff]
        %v1193 = vld [vmem:[%s733 + $0xe58] sm:$0xff]
        %v1194 = vld [vmem:[%s733 + $0xe60] sm:$0xff]
        %v1195 = vld [vmem:[%s733 + $0xe68] sm:$0xff]
        %v1196 = vld [vmem:[%s733 + $0xe70] sm:$0xff]
        %v1197 = vld [vmem:[%s733 + $0xe78] sm:$0xff]
        %v1198 = vld [vmem:[%s733 + $0xe80] sm:$0xff]
        %v1199 = vld [vmem:[%s733 + $0xe88] sm:$0xff]
        %v1200 = vld [vmem:[%s733 + $0xe90] sm:$0xff]
        %v1201 = vld [vmem:[%s733 + $0xe98] sm:$0xff]
        %v1202 = vld [vmem:[%s733 + $0xea0] sm:$0xff]
        %v1203 = vld [vmem:[%s733 + $0xea8] sm:$0xff]
        %v1204 = vld [vmem:[%s733 + $0xeb0] sm:$0xff]
        %v1205 = vld [vmem:[%s733 + $0xeb8] sm:$0xff]
        %v1206 = vld [vmem:[%s733 + $0xec0] sm:$0xff]
        %v1207 = vld [vmem:[%s733 + $0xec8] sm:$0xff]
        %v1208 = vld [vmem:[%s733 + $0xed0] sm:$0xff]
        %v1209 = vld [vmem:[%s733 + $0xed8] sm:$0xff]
        %v1210 = vld [vmem:[%s733 + $0xee0] sm:$0xff]
        %v1211 = vld [vmem:[%s733 + $0xee8] sm:$0xff]
        %v1212 = vld [vmem:[%s733 + $0xef0] sm:$0xff]
        %v1213 = vld [vmem:[%s733 + $0xef8] sm:$0xff]
        %v1214 = vld [vmem:[%s733 + $0xf00] sm:$0xff]
        %v1215 = vld [vmem:[%s733 + $0xf08] sm:$0xff]
        %v1216 = vld [vmem:[%s733 + $0xf10] sm:$0xff]
        %v1217 = vld [vmem:[%s733 + $0xf18] sm:$0xff]
        %v1218 = vld [vmem:[%s733 + $0xf20] sm:$0xff]
        %v1219 = vld [vmem:[%s733 + $0xf28] sm:$0xff]
        %v1220 = vld [vmem:[%s733 + $0xf30] sm:$0xff]
        %v1221 = vld [vmem:[%s733 + $0xf38] sm:$0xff]
        %v1222 = vld [vmem:[%s733 + $0xf40] sm:$0xff]
        %v1223 = vld [vmem:[%s733 + $0xf48] sm:$0xff]
        %v1224 = vld [vmem:[%s733 + $0xf50] sm:$0xff]
        %v1225 = vld [vmem:[%s733 + $0xf58] sm:$0xff]
        %v1226 = vld [vmem:[%s733 + $0xf60] sm:$0xff]
        %v1227 = vld [vmem:[%s733 + $0xf68] sm:$0xff]
        %v1228 = vld [vmem:[%s733 + $0xf70] sm:$0xff]
        %v1229 = vld [vmem:[%s733 + $0xf78] sm:$0xff]
        %v1230 = vld [vmem:[%s733 + $0xf80] sm:$0xff]
        %v1231 = vld [vmem:[%s733 + $0xf88] sm:$0xff]
        %v1232 = vld [vmem:[%s733 + $0xf90] sm:$0xff]
        %v1233 = vld [vmem:[%s733 + $0xf98] sm:$0xff]
        %v1234 = vld [vmem:[%s733 + $0xfa0] sm:$0xff]
        %v1235 = vld [vmem:[%s733 + $0xfa8] sm:$0xff]
        %v1236 = vld [vmem:[%s733 + $0xfb0] sm:$0xff]
        %v1237 = vld [vmem:[%s733 + $0xfb8] sm:$0xff]
        %v1238 = vld [vmem:[%s733 + $0xfc0] sm:$0xff]
        %v1239 = vld [vmem:[%s733 + $0xfc8] sm:$0xff]
        %v1240 = vld [vmem:[%s733 + $0xfd0] sm:$0xff]
        %v1241 = vld [vmem:[%s733 + $0xfd8] sm:$0xff]
        %v1242 = vld [vmem:[%s733 + $0xfe0] sm:$0xff]
        %v1243 = vld [vmem:[%s733 + $0xfe8] sm:$0xff]
        %v1244 = vld [vmem:[%s733 + $0xff0] sm:$0xff]
        %v1245 = vld [vmem:[%s733 + $0xff8] sm:$0xff]
        %1246 = vmatpush.msra.mxu0 %v1214
        %1247 = vmatpush.msra.mxu0 %v1182
        %1248 = vmatpush.msra.mxu0 %v1150
        %1249 = vmatpush.msra.mxu0 %v1118
        %1250 = vmatpush.msra.mxu0 %v1086
        %1251 = vmatpush.msra.mxu0 %v1054
        %1252 = vmatpush.msra.mxu0 %v1022
        %1253 = vmatpush.msra.mxu0 %v990
        %1254 = vmatpush.msra.mxu0 %v958
        %1255 = vmatpush.msra.mxu0 %v926
        %1256 = vmatpush.msra.mxu0 %v894
        %1257 = vmatpush.msra.mxu0 %v862
        %1258 = vmatpush.msra.mxu0 %v830
        %1259 = vmatpush.msra.mxu0 %v798
        %1260 = vmatpush.msra.mxu0 %v766
        %1261 = vmatpush.msra.mxu0 %v734
        %1262 = vmatmul.f32.gmra.mxu0 %v732
        %v1263 = vpop.f32.mrf.mxu0
        %v1264 = vadd.f32 0.0, %v1263
        %1265 = vdwg.mxu0
        %1266 = vmatpush.msra.mxu0 %v1215
        %1267 = vmatpush.msra.mxu0 %v1183
        %1268 = vmatpush.msra.mxu0 %v1151
        %1269 = vmatpush.msra.mxu0 %v1119
        %1270 = vmatpush.msra.mxu0 %v1087
        %1271 = vmatpush.msra.mxu0 %v1055
        %1272 = vmatpush.msra.mxu0 %v1023
        %1273 = vmatpush.msra.mxu0 %v991
        %1274 = vmatpush.msra.mxu0 %v959
        %1275 = vmatpush.msra.mxu0 %v927
        %1276 = vmatpush.msra.mxu0 %v895
        %1277 = vmatpush.msra.mxu0 %v863
        %1278 = vmatpush.msra.mxu0 %v831
        %1279 = vmatpush.msra.mxu0 %v799
        %1280 = vmatpush.msra.mxu0 %v767
        %1281 = vmatpush.msra.mxu0 %v735
        %1282 = vmatmul.f32.gmra.mxu0 %v732
        %v1283 = vpop.f32.mrf.mxu0
        %v1284 = vadd.f32 0.0, %v1283
        %1285 = vdwg.mxu0
        %1286 = vmatpush.msra.mxu0 %v1216
        %1287 = vmatpush.msra.mxu0 %v1184
        %1288 = vmatpush.msra.mxu0 %v1152
        %1289 = vmatpush.msra.mxu0 %v1120
        %1290 = vmatpush.msra.mxu0 %v1088
        %1291 = vmatpush.msra.mxu0 %v1056
        %1292 = vmatpush.msra.mxu0 %v1024
        %1293 = vmatpush.msra.mxu0 %v992
        %1294 = vmatpush.msra.mxu0 %v960
        %1295 = vmatpush.msra.mxu0 %v928
        %1296 = vmatpush.msra.mxu0 %v896
        %1297 = vmatpush.msra.mxu0 %v864
        %1298 = vmatpush.msra.mxu0 %v832
        %1299 = vmatpush.msra.mxu0 %v800
        %1300 = vmatpush.msra.mxu0 %v768
        %1301 = vmatpush.msra.mxu0 %v736
        %1302 = vmatmul.f32.gmra.mxu0 %v732
        %v1303 = vpop.f32.mrf.mxu0
        %v1304 = vadd.f32 0.0, %v1303
        %1305 = vdwg.mxu0
        %1306 = vmatpush.msra.mxu0 %v1217
        %1307 = vmatpush.msra.mxu0 %v1185
        %1308 = vmatpush.msra.mxu0 %v1153
        %1309 = vmatpush.msra.mxu0 %v1121
        %1310 = vmatpush.msra.mxu0 %v1089
        %1311 = vmatpush.msra.mxu0 %v1057
        %1312 = vmatpush.msra.mxu0 %v1025
        %1313 = vmatpush.msra.mxu0 %v993
        %1314 = vmatpush.msra.mxu0 %v961
        %1315 = vmatpush.msra.mxu0 %v929
        %1316 = vmatpush.msra.mxu0 %v897
        %1317 = vmatpush.msra.mxu0 %v865
        %1318 = vmatpush.msra.mxu0 %v833
        %1319 = vmatpush.msra.mxu0 %v801
        %1320 = vmatpush.msra.mxu0 %v769
        %1321 = vmatpush.msra.mxu0 %v737
        %1322 = vmatmul.f32.gmra.mxu0 %v732
        %v1323 = vpop.f32.mrf.mxu0
        %v1324 = vadd.f32 0.0, %v1323
        %1325 = vdwg.mxu0
        %1326 = vmatpush.msra.mxu0 %v1218
        %1327 = vmatpush.msra.mxu0 %v1186
        %1328 = vmatpush.msra.mxu0 %v1154
        %1329 = vmatpush.msra.mxu0 %v1122
        %1330 = vmatpush.msra.mxu0 %v1090
        %1331 = vmatpush.msra.mxu0 %v1058
        %1332 = vmatpush.msra.mxu0 %v1026
        %1333 = vmatpush.msra.mxu0 %v994
        %1334 = vmatpush.msra.mxu0 %v962
        %1335 = vmatpush.msra.mxu0 %v930
        %1336 = vmatpush.msra.mxu0 %v898
        %1337 = vmatpush.msra.mxu0 %v866
        %1338 = vmatpush.msra.mxu0 %v834
        %1339 = vmatpush.msra.mxu0 %v802
        %1340 = vmatpush.msra.mxu0 %v770
        %1341 = vmatpush.msra.mxu0 %v738
        %1342 = vmatmul.f32.gmra.mxu0 %v732
        %v1343 = vpop.f32.mrf.mxu0
        %v1344 = vadd.f32 0.0, %v1343
        %1345 = vdwg.mxu0
        %1346 = vmatpush.msra.mxu0 %v1219
        %1347 = vmatpush.msra.mxu0 %v1187
        %1348 = vmatpush.msra.mxu0 %v1155
        %1349 = vmatpush.msra.mxu0 %v1123
        %1350 = vmatpush.msra.mxu0 %v1091
        %1351 = vmatpush.msra.mxu0 %v1059
        %1352 = vmatpush.msra.mxu0 %v1027
        %1353 = vmatpush.msra.mxu0 %v995
        %1354 = vmatpush.msra.mxu0 %v963
        %1355 = vmatpush.msra.mxu0 %v931
        %1356 = vmatpush.msra.mxu0 %v899
        %1357 = vmatpush.msra.mxu0 %v867
        %1358 = vmatpush.msra.mxu0 %v835
        %1359 = vmatpush.msra.mxu0 %v803
        %1360 = vmatpush.msra.mxu0 %v771
        %1361 = vmatpush.msra.mxu0 %v739
        %1362 = vmatmul.f32.gmra.mxu0 %v732
        %v1363 = vpop.f32.mrf.mxu0
        %v1364 = vadd.f32 0.0, %v1363
        %1365 = vdwg.mxu0
        %1366 = vmatpush.msra.mxu0 %v1220
        %1367 = vmatpush.msra.mxu0 %v1188
        %1368 = vmatpush.msra.mxu0 %v1156
        %1369 = vmatpush.msra.mxu0 %v1124
        %1370 = vmatpush.msra.mxu0 %v1092
        %1371 = vmatpush.msra.mxu0 %v1060
        %1372 = vmatpush.msra.mxu0 %v1028
        %1373 = vmatpush.msra.mxu0 %v996
        %1374 = vmatpush.msra.mxu0 %v964
        %1375 = vmatpush.msra.mxu0 %v932
        %1376 = vmatpush.msra.mxu0 %v900
        %1377 = vmatpush.msra.mxu0 %v868
        %1378 = vmatpush.msra.mxu0 %v836
        %1379 = vmatpush.msra.mxu0 %v804
        %1380 = vmatpush.msra.mxu0 %v772
        %1381 = vmatpush.msra.mxu0 %v740
        %1382 = vmatmul.f32.gmra.mxu0 %v732
        %v1383 = vpop.f32.mrf.mxu0
        %v1384 = vadd.f32 0.0, %v1383
        %1385 = vdwg.mxu0
        %1386 = vmatpush.msra.mxu0 %v1221
        %1387 = vmatpush.msra.mxu0 %v1189
        %1388 = vmatpush.msra.mxu0 %v1157
        %1389 = vmatpush.msra.mxu0 %v1125
        %1390 = vmatpush.msra.mxu0 %v1093
        %1391 = vmatpush.msra.mxu0 %v1061
        %1392 = vmatpush.msra.mxu0 %v1029
        %1393 = vmatpush.msra.mxu0 %v997
        %1394 = vmatpush.msra.mxu0 %v965
        %1395 = vmatpush.msra.mxu0 %v933
        %1396 = vmatpush.msra.mxu0 %v901
        %1397 = vmatpush.msra.mxu0 %v869
        %1398 = vmatpush.msra.mxu0 %v837
        %1399 = vmatpush.msra.mxu0 %v805
        %1400 = vmatpush.msra.mxu0 %v773
        %1401 = vmatpush.msra.mxu0 %v741
        %1402 = vmatmul.f32.gmra.mxu0 %v732
        %v1403 = vpop.f32.mrf.mxu0
        %v1404 = vadd.f32 0.0, %v1403
        %1405 = vdwg.mxu0
        %1406 = vmatpush.msra.mxu0 %v1222
        %1407 = vmatpush.msra.mxu0 %v1190
        %1408 = vmatpush.msra.mxu0 %v1158
        %1409 = vmatpush.msra.mxu0 %v1126
        %1410 = vmatpush.msra.mxu0 %v1094
        %1411 = vmatpush.msra.mxu0 %v1062
        %1412 = vmatpush.msra.mxu0 %v1030
        %1413 = vmatpush.msra.mxu0 %v998
        %1414 = vmatpush.msra.mxu0 %v966
        %1415 = vmatpush.msra.mxu0 %v934
        %1416 = vmatpush.msra.mxu0 %v902
        %1417 = vmatpush.msra.mxu0 %v870
        %1418 = vmatpush.msra.mxu0 %v838
        %1419 = vmatpush.msra.mxu0 %v806
        %1420 = vmatpush.msra.mxu0 %v774
        %1421 = vmatpush.msra.mxu0 %v742
        %1422 = vmatmul.f32.gmra.mxu0 %v732
        %v1423 = vpop.f32.mrf.mxu0
        %v1424 = vadd.f32 0.0, %v1423
        %1425 = vdwg.mxu0
        %1426 = vmatpush.msra.mxu0 %v1223
        %1427 = vmatpush.msra.mxu0 %v1191
        %1428 = vmatpush.msra.mxu0 %v1159
        %1429 = vmatpush.msra.mxu0 %v1127
        %1430 = vmatpush.msra.mxu0 %v1095
        %1431 = vmatpush.msra.mxu0 %v1063
        %1432 = vmatpush.msra.mxu0 %v1031
        %1433 = vmatpush.msra.mxu0 %v999
        %1434 = vmatpush.msra.mxu0 %v967
        %1435 = vmatpush.msra.mxu0 %v935
        %1436 = vmatpush.msra.mxu0 %v903
        %1437 = vmatpush.msra.mxu0 %v871
        %1438 = vmatpush.msra.mxu0 %v839
        %1439 = vmatpush.msra.mxu0 %v807
        %1440 = vmatpush.msra.mxu0 %v775
        %1441 = vmatpush.msra.mxu0 %v743
        %1442 = vmatmul.f32.gmra.mxu0 %v732
        %v1443 = vpop.f32.mrf.mxu0
        %v1444 = vadd.f32 0.0, %v1443
        %1445 = vdwg.mxu0
        %1446 = vmatpush.msra.mxu0 %v1224
        %1447 = vmatpush.msra.mxu0 %v1192
        %1448 = vmatpush.msra.mxu0 %v1160
        %1449 = vmatpush.msra.mxu0 %v1128
        %1450 = vmatpush.msra.mxu0 %v1096
        %1451 = vmatpush.msra.mxu0 %v1064
        %1452 = vmatpush.msra.mxu0 %v1032
        %1453 = vmatpush.msra.mxu0 %v1000
        %1454 = vmatpush.msra.mxu0 %v968
        %1455 = vmatpush.msra.mxu0 %v936
        %1456 = vmatpush.msra.mxu0 %v904
        %1457 = vmatpush.msra.mxu0 %v872
        %1458 = vmatpush.msra.mxu0 %v840
        %1459 = vmatpush.msra.mxu0 %v808
        %1460 = vmatpush.msra.mxu0 %v776
        %1461 = vmatpush.msra.mxu0 %v744
        %1462 = vmatmul.f32.gmra.mxu0 %v732
        %v1463 = vpop.f32.mrf.mxu0
        %v1464 = vadd.f32 0.0, %v1463
        %1465 = vdwg.mxu0
        %1466 = vmatpush.msra.mxu0 %v1225
        %1467 = vmatpush.msra.mxu0 %v1193
        %1468 = vmatpush.msra.mxu0 %v1161
        %1469 = vmatpush.msra.mxu0 %v1129
        %1470 = vmatpush.msra.mxu0 %v1097
        %1471 = vmatpush.msra.mxu0 %v1065
        %1472 = vmatpush.msra.mxu0 %v1033
        %1473 = vmatpush.msra.mxu0 %v1001
        %1474 = vmatpush.msra.mxu0 %v969
        %1475 = vmatpush.msra.mxu0 %v937
        %1476 = vmatpush.msra.mxu0 %v905
        %1477 = vmatpush.msra.mxu0 %v873
        %1478 = vmatpush.msra.mxu0 %v841
        %1479 = vmatpush.msra.mxu0 %v809
        %1480 = vmatpush.msra.mxu0 %v777
        %1481 = vmatpush.msra.mxu0 %v745
        %1482 = vmatmul.f32.gmra.mxu0 %v732
        %v1483 = vpop.f32.mrf.mxu0
        %v1484 = vadd.f32 0.0, %v1483
        %1485 = vdwg.mxu0
        %1486 = vmatpush.msra.mxu0 %v1226
        %1487 = vmatpush.msra.mxu0 %v1194
        %1488 = vmatpush.msra.mxu0 %v1162
        %1489 = vmatpush.msra.mxu0 %v1130
        %1490 = vmatpush.msra.mxu0 %v1098
        %1491 = vmatpush.msra.mxu0 %v1066
        %1492 = vmatpush.msra.mxu0 %v1034
        %1493 = vmatpush.msra.mxu0 %v1002
        %1494 = vmatpush.msra.mxu0 %v970
        %1495 = vmatpush.msra.mxu0 %v938
        %1496 = vmatpush.msra.mxu0 %v906
        %1497 = vmatpush.msra.mxu0 %v874
        %1498 = vmatpush.msra.mxu0 %v842
        %1499 = vmatpush.msra.mxu0 %v810
        %1500 = vmatpush.msra.mxu0 %v778
        %1501 = vmatpush.msra.mxu0 %v746
        %1502 = vmatmul.f32.gmra.mxu0 %v732
        %v1503 = vpop.f32.mrf.mxu0
        %v1504 = vadd.f32 0.0, %v1503
        %1505 = vdwg.mxu0
        %1506 = vmatpush.msra.mxu0 %v1227
        %1507 = vmatpush.msra.mxu0 %v1195
        %1508 = vmatpush.msra.mxu0 %v1163
        %1509 = vmatpush.msra.mxu0 %v1131
        %1510 = vmatpush.msra.mxu0 %v1099
        %1511 = vmatpush.msra.mxu0 %v1067
        %1512 = vmatpush.msra.mxu0 %v1035
        %1513 = vmatpush.msra.mxu0 %v1003
        %1514 = vmatpush.msra.mxu0 %v971
        %1515 = vmatpush.msra.mxu0 %v939
        %1516 = vmatpush.msra.mxu0 %v907
        %1517 = vmatpush.msra.mxu0 %v875
        %1518 = vmatpush.msra.mxu0 %v843
        %1519 = vmatpush.msra.mxu0 %v811
        %1520 = vmatpush.msra.mxu0 %v779
        %1521 = vmatpush.msra.mxu0 %v747
        %1522 = vmatmul.f32.gmra.mxu0 %v732
        %v1523 = vpop.f32.mrf.mxu0
        %v1524 = vadd.f32 0.0, %v1523
        %1525 = vdwg.mxu0
        %1526 = vmatpush.msra.mxu0 %v1228
        %1527 = vmatpush.msra.mxu0 %v1196
        %1528 = vmatpush.msra.mxu0 %v1164
        %1529 = vmatpush.msra.mxu0 %v1132
        %1530 = vmatpush.msra.mxu0 %v1100
        %1531 = vmatpush.msra.mxu0 %v1068
        %1532 = vmatpush.msra.mxu0 %v1036
        %1533 = vmatpush.msra.mxu0 %v1004
        %1534 = vmatpush.msra.mxu0 %v972
        %1535 = vmatpush.msra.mxu0 %v940
        %1536 = vmatpush.msra.mxu0 %v908
        %1537 = vmatpush.msra.mxu0 %v876
        %1538 = vmatpush.msra.mxu0 %v844
        %1539 = vmatpush.msra.mxu0 %v812
        %1540 = vmatpush.msra.mxu0 %v780
        %1541 = vmatpush.msra.mxu0 %v748
        %1542 = vmatmul.f32.gmra.mxu0 %v732
        %v1543 = vpop.f32.mrf.mxu0
        %v1544 = vadd.f32 0.0, %v1543
        %1545 = vdwg.mxu0
        %1546 = vmatpush.msra.mxu0 %v1229
        %1547 = vmatpush.msra.mxu0 %v1197
        %1548 = vmatpush.msra.mxu0 %v1165
        %1549 = vmatpush.msra.mxu0 %v1133
        %1550 = vmatpush.msra.mxu0 %v1101
        %1551 = vmatpush.msra.mxu0 %v1069
        %1552 = vmatpush.msra.mxu0 %v1037
        %1553 = vmatpush.msra.mxu0 %v1005
        %1554 = vmatpush.msra.mxu0 %v973
        %1555 = vmatpush.msra.mxu0 %v941
        %1556 = vmatpush.msra.mxu0 %v909
        %1557 = vmatpush.msra.mxu0 %v877
        %1558 = vmatpush.msra.mxu0 %v845
        %1559 = vmatpush.msra.mxu0 %v813
        %1560 = vmatpush.msra.mxu0 %v781
        %1561 = vmatpush.msra.mxu0 %v749
        %1562 = vmatmul.f32.gmra.mxu0 %v732
        %v1563 = vpop.f32.mrf.mxu0
        %v1564 = vadd.f32 0.0, %v1563
        %1565 = vdwg.mxu0
        %1566 = vmatpush.msra.mxu0 %v1230
        %1567 = vmatpush.msra.mxu0 %v1198
        %1568 = vmatpush.msra.mxu0 %v1166
        %1569 = vmatpush.msra.mxu0 %v1134
        %1570 = vmatpush.msra.mxu0 %v1102
        %1571 = vmatpush.msra.mxu0 %v1070
        %1572 = vmatpush.msra.mxu0 %v1038
        %1573 = vmatpush.msra.mxu0 %v1006
        %1574 = vmatpush.msra.mxu0 %v974
        %1575 = vmatpush.msra.mxu0 %v942
        %1576 = vmatpush.msra.mxu0 %v910
        %1577 = vmatpush.msra.mxu0 %v878
        %1578 = vmatpush.msra.mxu0 %v846
        %1579 = vmatpush.msra.mxu0 %v814
        %1580 = vmatpush.msra.mxu0 %v782
        %1581 = vmatpush.msra.mxu0 %v750
        %1582 = vmatmul.f32.gmra.mxu0 %v732
        %v1583 = vpop.f32.mrf.mxu0
        %v1584 = vadd.f32 0.0, %v1583
        %1585 = vdwg.mxu0
        %1586 = vmatpush.msra.mxu0 %v1231
        %1587 = vmatpush.msra.mxu0 %v1199
        %1588 = vmatpush.msra.mxu0 %v1167
        %1589 = vmatpush.msra.mxu0 %v1135
        %1590 = vmatpush.msra.mxu0 %v1103
        %1591 = vmatpush.msra.mxu0 %v1071
        %1592 = vmatpush.msra.mxu0 %v1039
        %1593 = vmatpush.msra.mxu0 %v1007
        %1594 = vmatpush.msra.mxu0 %v975
        %1595 = vmatpush.msra.mxu0 %v943
        %1596 = vmatpush.msra.mxu0 %v911
        %1597 = vmatpush.msra.mxu0 %v879
        %1598 = vmatpush.msra.mxu0 %v847
        %1599 = vmatpush.msra.mxu0 %v815
        %1600 = vmatpush.msra.mxu0 %v783
        %1601 = vmatpush.msra.mxu0 %v751
        %1602 = vmatmul.f32.gmra.mxu0 %v732
        %v1603 = vpop.f32.mrf.mxu0
        %v1604 = vadd.f32 0.0, %v1603
        %1605 = vdwg.mxu0
        %1606 = vmatpush.msra.mxu0 %v1232
        %1607 = vmatpush.msra.mxu0 %v1200
        %1608 = vmatpush.msra.mxu0 %v1168
        %1609 = vmatpush.msra.mxu0 %v1136
        %1610 = vmatpush.msra.mxu0 %v1104
        %1611 = vmatpush.msra.mxu0 %v1072
        %1612 = vmatpush.msra.mxu0 %v1040
        %1613 = vmatpush.msra.mxu0 %v1008
        %1614 = vmatpush.msra.mxu0 %v976
        %1615 = vmatpush.msra.mxu0 %v944
        %1616 = vmatpush.msra.mxu0 %v912
        %1617 = vmatpush.msra.mxu0 %v880
        %1618 = vmatpush.msra.mxu0 %v848
        %1619 = vmatpush.msra.mxu0 %v816
        %1620 = vmatpush.msra.mxu0 %v784
        %1621 = vmatpush.msra.mxu0 %v752
        %1622 = vmatmul.f32.gmra.mxu0 %v732
        %v1623 = vpop.f32.mrf.mxu0
        %v1624 = vadd.f32 0.0, %v1623
        %1625 = vdwg.mxu0
        %1626 = vmatpush.msra.mxu0 %v1233
        %1627 = vmatpush.msra.mxu0 %v1201
        %1628 = vmatpush.msra.mxu0 %v1169
        %1629 = vmatpush.msra.mxu0 %v1137
        %1630 = vmatpush.msra.mxu0 %v1105
        %1631 = vmatpush.msra.mxu0 %v1073
        %1632 = vmatpush.msra.mxu0 %v1041
        %1633 = vmatpush.msra.mxu0 %v1009
        %1634 = vmatpush.msra.mxu0 %v977
        %1635 = vmatpush.msra.mxu0 %v945
        %1636 = vmatpush.msra.mxu0 %v913
        %1637 = vmatpush.msra.mxu0 %v881
        %1638 = vmatpush.msra.mxu0 %v849
        %1639 = vmatpush.msra.mxu0 %v817
        %1640 = vmatpush.msra.mxu0 %v785
        %1641 = vmatpush.msra.mxu0 %v753
        %1642 = vmatmul.f32.gmra.mxu0 %v732
        %v1643 = vpop.f32.mrf.mxu0
        %v1644 = vadd.f32 0.0, %v1643
        %1645 = vdwg.mxu0
        %1646 = vmatpush.msra.mxu0 %v1234
        %1647 = vmatpush.msra.mxu0 %v1202
        %1648 = vmatpush.msra.mxu0 %v1170
        %1649 = vmatpush.msra.mxu0 %v1138
        %1650 = vmatpush.msra.mxu0 %v1106
        %1651 = vmatpush.msra.mxu0 %v1074
        %1652 = vmatpush.msra.mxu0 %v1042
        %1653 = vmatpush.msra.mxu0 %v1010
        %1654 = vmatpush.msra.mxu0 %v978
        %1655 = vmatpush.msra.mxu0 %v946
        %1656 = vmatpush.msra.mxu0 %v914
        %1657 = vmatpush.msra.mxu0 %v882
        %1658 = vmatpush.msra.mxu0 %v850
        %1659 = vmatpush.msra.mxu0 %v818
        %1660 = vmatpush.msra.mxu0 %v786
        %1661 = vmatpush.msra.mxu0 %v754
        %1662 = vmatmul.f32.gmra.mxu0 %v732
        %v1663 = vpop.f32.mrf.mxu0
        %v1664 = vadd.f32 0.0, %v1663
        %1665 = vdwg.mxu0
        %1666 = vmatpush.msra.mxu0 %v1235
        %1667 = vmatpush.msra.mxu0 %v1203
        %1668 = vmatpush.msra.mxu0 %v1171
        %1669 = vmatpush.msra.mxu0 %v1139
        %1670 = vmatpush.msra.mxu0 %v1107
        %1671 = vmatpush.msra.mxu0 %v1075
        %1672 = vmatpush.msra.mxu0 %v1043
        %1673 = vmatpush.msra.mxu0 %v1011
        %1674 = vmatpush.msra.mxu0 %v979
        %1675 = vmatpush.msra.mxu0 %v947
        %1676 = vmatpush.msra.mxu0 %v915
        %1677 = vmatpush.msra.mxu0 %v883
        %1678 = vmatpush.msra.mxu0 %v851
        %1679 = vmatpush.msra.mxu0 %v819
        %1680 = vmatpush.msra.mxu0 %v787
        %1681 = vmatpush.msra.mxu0 %v755
        %1682 = vmatmul.f32.gmra.mxu0 %v732
        %v1683 = vpop.f32.mrf.mxu0
        %v1684 = vadd.f32 0.0, %v1683
        %1685 = vdwg.mxu0
        %1686 = vmatpush.msra.mxu0 %v1236
        %1687 = vmatpush.msra.mxu0 %v1204
        %1688 = vmatpush.msra.mxu0 %v1172
        %1689 = vmatpush.msra.mxu0 %v1140
        %1690 = vmatpush.msra.mxu0 %v1108
        %1691 = vmatpush.msra.mxu0 %v1076
        %1692 = vmatpush.msra.mxu0 %v1044
        %1693 = vmatpush.msra.mxu0 %v1012
        %1694 = vmatpush.msra.mxu0 %v980
        %1695 = vmatpush.msra.mxu0 %v948
        %1696 = vmatpush.msra.mxu0 %v916
        %1697 = vmatpush.msra.mxu0 %v884
        %1698 = vmatpush.msra.mxu0 %v852
        %1699 = vmatpush.msra.mxu0 %v820
        %1700 = vmatpush.msra.mxu0 %v788
        %1701 = vmatpush.msra.mxu0 %v756
        %1702 = vmatmul.f32.gmra.mxu0 %v732
        %v1703 = vpop.f32.mrf.mxu0
        %v1704 = vadd.f32 0.0, %v1703
        %1705 = vdwg.mxu0
        %1706 = vmatpush.msra.mxu0 %v1237
        %1707 = vmatpush.msra.mxu0 %v1205
        %1708 = vmatpush.msra.mxu0 %v1173
        %1709 = vmatpush.msra.mxu0 %v1141
        %1710 = vmatpush.msra.mxu0 %v1109
        %1711 = vmatpush.msra.mxu0 %v1077
        %1712 = vmatpush.msra.mxu0 %v1045
        %1713 = vmatpush.msra.mxu0 %v1013
        %1714 = vmatpush.msra.mxu0 %v981
        %1715 = vmatpush.msra.mxu0 %v949
        %1716 = vmatpush.msra.mxu0 %v917
        %1717 = vmatpush.msra.mxu0 %v885
        %1718 = vmatpush.msra.mxu0 %v853
        %1719 = vmatpush.msra.mxu0 %v821
        %1720 = vmatpush.msra.mxu0 %v789
        %1721 = vmatpush.msra.mxu0 %v757
        %1722 = vmatmul.f32.gmra.mxu0 %v732
        %v1723 = vpop.f32.mrf.mxu0
        %v1724 = vadd.f32 0.0, %v1723
        %1725 = vdwg.mxu0
        %1726 = vmatpush.msra.mxu0 %v1238
        %1727 = vmatpush.msra.mxu0 %v1206
        %1728 = vmatpush.msra.mxu0 %v1174
        %1729 = vmatpush.msra.mxu0 %v1142
        %1730 = vmatpush.msra.mxu0 %v1110
        %1731 = vmatpush.msra.mxu0 %v1078
        %1732 = vmatpush.msra.mxu0 %v1046
        %1733 = vmatpush.msra.mxu0 %v1014
        %1734 = vmatpush.msra.mxu0 %v982
        %1735 = vmatpush.msra.mxu0 %v950
        %1736 = vmatpush.msra.mxu0 %v918
        %1737 = vmatpush.msra.mxu0 %v886
        %1738 = vmatpush.msra.mxu0 %v854
        %1739 = vmatpush.msra.mxu0 %v822
        %1740 = vmatpush.msra.mxu0 %v790
        %1741 = vmatpush.msra.mxu0 %v758
        %1742 = vmatmul.f32.gmra.mxu0 %v732
        %v1743 = vpop.f32.mrf.mxu0
        %v1744 = vadd.f32 0.0, %v1743
        %1745 = vdwg.mxu0
        %1746 = vmatpush.msra.mxu0 %v1239
        %1747 = vmatpush.msra.mxu0 %v1207
        %1748 = vmatpush.msra.mxu0 %v1175
        %1749 = vmatpush.msra.mxu0 %v1143
        %1750 = vmatpush.msra.mxu0 %v1111
        %1751 = vmatpush.msra.mxu0 %v1079
        %1752 = vmatpush.msra.mxu0 %v1047
        %1753 = vmatpush.msra.mxu0 %v1015
        %1754 = vmatpush.msra.mxu0 %v983
        %1755 = vmatpush.msra.mxu0 %v951
        %1756 = vmatpush.msra.mxu0 %v919
        %1757 = vmatpush.msra.mxu0 %v887
        %1758 = vmatpush.msra.mxu0 %v855
        %1759 = vmatpush.msra.mxu0 %v823
        %1760 = vmatpush.msra.mxu0 %v791
        %1761 = vmatpush.msra.mxu0 %v759
        %1762 = vmatmul.f32.gmra.mxu0 %v732
        %v1763 = vpop.f32.mrf.mxu0
        %v1764 = vadd.f32 0.0, %v1763
        %1765 = vdwg.mxu0
        %1766 = vmatpush.msra.mxu0 %v1240
        %1767 = vmatpush.msra.mxu0 %v1208
        %1768 = vmatpush.msra.mxu0 %v1176
        %1769 = vmatpush.msra.mxu0 %v1144
        %1770 = vmatpush.msra.mxu0 %v1112
        %1771 = vmatpush.msra.mxu0 %v1080
        %1772 = vmatpush.msra.mxu0 %v1048
        %1773 = vmatpush.msra.mxu0 %v1016
        %1774 = vmatpush.msra.mxu0 %v984
        %1775 = vmatpush.msra.mxu0 %v952
        %1776 = vmatpush.msra.mxu0 %v920
        %1777 = vmatpush.msra.mxu0 %v888
        %1778 = vmatpush.msra.mxu0 %v856
        %1779 = vmatpush.msra.mxu0 %v824
        %1780 = vmatpush.msra.mxu0 %v792
        %1781 = vmatpush.msra.mxu0 %v760
        %1782 = vmatmul.f32.gmra.mxu0 %v732
        %v1783 = vpop.f32.mrf.mxu0
        %v1784 = vadd.f32 0.0, %v1783
        %1785 = vdwg.mxu0
        %1786 = vmatpush.msra.mxu0 %v1241
        %1787 = vmatpush.msra.mxu0 %v1209
        %1788 = vmatpush.msra.mxu0 %v1177
        %1789 = vmatpush.msra.mxu0 %v1145
        %1790 = vmatpush.msra.mxu0 %v1113
        %1791 = vmatpush.msra.mxu0 %v1081
        %1792 = vmatpush.msra.mxu0 %v1049
        %1793 = vmatpush.msra.mxu0 %v1017
        %1794 = vmatpush.msra.mxu0 %v985
        %1795 = vmatpush.msra.mxu0 %v953
        %1796 = vmatpush.msra.mxu0 %v921
        %1797 = vmatpush.msra.mxu0 %v889
        %1798 = vmatpush.msra.mxu0 %v857
        %1799 = vmatpush.msra.mxu0 %v825
        %1800 = vmatpush.msra.mxu0 %v793
        %1801 = vmatpush.msra.mxu0 %v761
        %1802 = vmatmul.f32.gmra.mxu0 %v732
        %v1803 = vpop.f32.mrf.mxu0
        %v1804 = vadd.f32 0.0, %v1803
        %1805 = vdwg.mxu0
        %1806 = vmatpush.msra.mxu0 %v1242
        %1807 = vmatpush.msra.mxu0 %v1210
        %1808 = vmatpush.msra.mxu0 %v1178
        %1809 = vmatpush.msra.mxu0 %v1146
        %1810 = vmatpush.msra.mxu0 %v1114
        %1811 = vmatpush.msra.mxu0 %v1082
        %1812 = vmatpush.msra.mxu0 %v1050
        %1813 = vmatpush.msra.mxu0 %v1018
        %1814 = vmatpush.msra.mxu0 %v986
        %1815 = vmatpush.msra.mxu0 %v954
        %1816 = vmatpush.msra.mxu0 %v922
        %1817 = vmatpush.msra.mxu0 %v890
        %1818 = vmatpush.msra.mxu0 %v858
        %1819 = vmatpush.msra.mxu0 %v826
        %1820 = vmatpush.msra.mxu0 %v794
        %1821 = vmatpush.msra.mxu0 %v762
        %1822 = vmatmul.f32.gmra.mxu0 %v732
        %v1823 = vpop.f32.mrf.mxu0
        %v1824 = vadd.f32 0.0, %v1823
        %1825 = vdwg.mxu0
        %1826 = vmatpush.msra.mxu0 %v1243
        %1827 = vmatpush.msra.mxu0 %v1211
        %1828 = vmatpush.msra.mxu0 %v1179
        %1829 = vmatpush.msra.mxu0 %v1147
        %1830 = vmatpush.msra.mxu0 %v1115
        %1831 = vmatpush.msra.mxu0 %v1083
        %1832 = vmatpush.msra.mxu0 %v1051
        %1833 = vmatpush.msra.mxu0 %v1019
        %1834 = vmatpush.msra.mxu0 %v987
        %1835 = vmatpush.msra.mxu0 %v955
        %1836 = vmatpush.msra.mxu0 %v923
        %1837 = vmatpush.msra.mxu0 %v891
        %1838 = vmatpush.msra.mxu0 %v859
        %1839 = vmatpush.msra.mxu0 %v827
        %1840 = vmatpush.msra.mxu0 %v795
        %1841 = vmatpush.msra.mxu0 %v763
        %1842 = vmatmul.f32.gmra.mxu0 %v732
        %v1843 = vpop.f32.mrf.mxu0
        %v1844 = vadd.f32 0.0, %v1843
        %1845 = vdwg.mxu0
        %1846 = vmatpush.msra.mxu0 %v1244
        %1847 = vmatpush.msra.mxu0 %v1212
        %1848 = vmatpush.msra.mxu0 %v1180
        %1849 = vmatpush.msra.mxu0 %v1148
        %1850 = vmatpush.msra.mxu0 %v1116
        %1851 = vmatpush.msra.mxu0 %v1084
        %1852 = vmatpush.msra.mxu0 %v1052
        %1853 = vmatpush.msra.mxu0 %v1020
        %1854 = vmatpush.msra.mxu0 %v988
        %1855 = vmatpush.msra.mxu0 %v956
        %1856 = vmatpush.msra.mxu0 %v924
        %1857 = vmatpush.msra.mxu0 %v892
        %1858 = vmatpush.msra.mxu0 %v860
        %1859 = vmatpush.msra.mxu0 %v828
        %1860 = vmatpush.msra.mxu0 %v796
        %1861 = vmatpush.msra.mxu0 %v764
        %1862 = vmatmul.f32.gmra.mxu0 %v732
        %v1863 = vpop.f32.mrf.mxu0
        %v1864 = vadd.f32 0.0, %v1863
        %1865 = vdwg.mxu0
        %1866 = vmatpush.msra.mxu0 %v1245
        %1867 = vmatpush.msra.mxu0 %v1213
        %1868 = vmatpush.msra.mxu0 %v1181
        %1869 = vmatpush.msra.mxu0 %v1149
        %1870 = vmatpush.msra.mxu0 %v1117
        %1871 = vmatpush.msra.mxu0 %v1085
        %1872 = vmatpush.msra.mxu0 %v1053
        %1873 = vmatpush.msra.mxu0 %v1021
        %1874 = vmatpush.msra.mxu0 %v989
        %1875 = vmatpush.msra.mxu0 %v957
        %1876 = vmatpush.msra.mxu0 %v925
        %1877 = vmatpush.msra.mxu0 %v893
        %1878 = vmatpush.msra.mxu0 %v861
        %1879 = vmatpush.msra.mxu0 %v829
        %1880 = vmatpush.msra.mxu0 %v797
        %1881 = vmatpush.msra.mxu0 %v765
        %1882 = vmatmul.f32.gmra.mxu0 %v732
        %v1883 = vpop.f32.mrf.mxu0
        %v1884 = vadd.f32 0.0, %v1883
        %1885 = vdwg.mxu0
        %1886 = vmatpush.msra.mxu0 %v699
        %1887 = vmatpush.msra.mxu0 %v667
        %1888 = vmatpush.msra.mxu0 %v635
        %1889 = vmatpush.msra.mxu0 %v603
        %1890 = vmatpush.msra.mxu0 %v571
        %1891 = vmatpush.msra.mxu0 %v539
        %1892 = vmatpush.msra.mxu0 %v507
        %1893 = vmatpush.msra.mxu0 %v475
        %1894 = vmatpush.msra.mxu0 %v443
        %1895 = vmatpush.msra.mxu0 %v411
        %1896 = vmatpush.msra.mxu0 %v379
        %1897 = vmatpush.msra.mxu0 %v347
        %1898 = vmatpush.msra.mxu0 %v315
        %1899 = vmatpush.msra.mxu0 %v283
        %1900 = vmatpush.msra.mxu0 %v251
        %1901 = vmatpush.msra.mxu0 %v219
        %1902 = vmatmul.f32.gmra.mxu0 %v218
        %v1903 = vpop.f32.mrf.mxu0
        %v1904 = vadd.f32 %v1264, %v1903
        %1905 = vdwg.mxu0
        %1906 = vmatpush.msra.mxu0 %v700
        %1907 = vmatpush.msra.mxu0 %v668
        %1908 = vmatpush.msra.mxu0 %v636
        %1909 = vmatpush.msra.mxu0 %v604
        %1910 = vmatpush.msra.mxu0 %v572
        %1911 = vmatpush.msra.mxu0 %v540
        %1912 = vmatpush.msra.mxu0 %v508
        %1913 = vmatpush.msra.mxu0 %v476
        %1914 = vmatpush.msra.mxu0 %v444
        %1915 = vmatpush.msra.mxu0 %v412
        %1916 = vmatpush.msra.mxu0 %v380
        %1917 = vmatpush.msra.mxu0 %v348
        %1918 = vmatpush.msra.mxu0 %v316
        %1919 = vmatpush.msra.mxu0 %v284
        %1920 = vmatpush.msra.mxu0 %v252
        %1921 = vmatpush.msra.mxu0 %v220
        %1922 = vmatmul.f32.gmra.mxu0 %v218
        %v1923 = vpop.f32.mrf.mxu0
        %v1924 = vadd.f32 %v1284, %v1923
        %1925 = vdwg.mxu0
        %1926 = vmatpush.msra.mxu0 %v701
        %1927 = vmatpush.msra.mxu0 %v669
        %1928 = vmatpush.msra.mxu0 %v637
        %1929 = vmatpush.msra.mxu0 %v605
        %1930 = vmatpush.msra.mxu0 %v573
        %1931 = vmatpush.msra.mxu0 %v541
        %1932 = vmatpush.msra.mxu0 %v509
        %1933 = vmatpush.msra.mxu0 %v477
        %1934 = vmatpush.msra.mxu0 %v445
        %1935 = vmatpush.msra.mxu0 %v413
        %1936 = vmatpush.msra.mxu0 %v381
        %1937 = vmatpush.msra.mxu0 %v349
        %1938 = vmatpush.msra.mxu0 %v317
        %1939 = vmatpush.msra.mxu0 %v285
        %1940 = vmatpush.msra.mxu0 %v253
        %1941 = vmatpush.msra.mxu0 %v221
        %1942 = vmatmul.f32.gmra.mxu0 %v218
        %v1943 = vpop.f32.mrf.mxu0
        %v1944 = vadd.f32 %v1304, %v1943
        %1945 = vdwg.mxu0
        %1946 = vmatpush.msra.mxu0 %v702
        %1947 = vmatpush.msra.mxu0 %v670
        %1948 = vmatpush.msra.mxu0 %v638
        %1949 = vmatpush.msra.mxu0 %v606
        %1950 = vmatpush.msra.mxu0 %v574
        %1951 = vmatpush.msra.mxu0 %v542
        %1952 = vmatpush.msra.mxu0 %v510
        %1953 = vmatpush.msra.mxu0 %v478
        %1954 = vmatpush.msra.mxu0 %v446
        %1955 = vmatpush.msra.mxu0 %v414
        %1956 = vmatpush.msra.mxu0 %v382
        %1957 = vmatpush.msra.mxu0 %v350
        %1958 = vmatpush.msra.mxu0 %v318
        %1959 = vmatpush.msra.mxu0 %v286
        %1960 = vmatpush.msra.mxu0 %v254
        %1961 = vmatpush.msra.mxu0 %v222
        %1962 = vmatmul.f32.gmra.mxu0 %v218
        %v1963 = vpop.f32.mrf.mxu0
        %v1964 = vadd.f32 %v1324, %v1963
        %1965 = vdwg.mxu0
        %1966 = vmatpush.msra.mxu0 %v703
        %1967 = vmatpush.msra.mxu0 %v671
        %1968 = vmatpush.msra.mxu0 %v639
        %1969 = vmatpush.msra.mxu0 %v607
        %1970 = vmatpush.msra.mxu0 %v575
        %1971 = vmatpush.msra.mxu0 %v543
        %1972 = vmatpush.msra.mxu0 %v511
        %1973 = vmatpush.msra.mxu0 %v479
        %1974 = vmatpush.msra.mxu0 %v447
        %1975 = vmatpush.msra.mxu0 %v415
        %1976 = vmatpush.msra.mxu0 %v383
        %1977 = vmatpush.msra.mxu0 %v351
        %1978 = vmatpush.msra.mxu0 %v319
        %1979 = vmatpush.msra.mxu0 %v287
        %1980 = vmatpush.msra.mxu0 %v255
        %1981 = vmatpush.msra.mxu0 %v223
        %1982 = vmatmul.f32.gmra.mxu0 %v218
        %v1983 = vpop.f32.mrf.mxu0
        %v1984 = vadd.f32 %v1344, %v1983
        %1985 = vdwg.mxu0
        %1986 = vmatpush.msra.mxu0 %v704
        %1987 = vmatpush.msra.mxu0 %v672
        %1988 = vmatpush.msra.mxu0 %v640
        %1989 = vmatpush.msra.mxu0 %v608
        %1990 = vmatpush.msra.mxu0 %v576
        %1991 = vmatpush.msra.mxu0 %v544
        %1992 = vmatpush.msra.mxu0 %v512
        %1993 = vmatpush.msra.mxu0 %v480
        %1994 = vmatpush.msra.mxu0 %v448
        %1995 = vmatpush.msra.mxu0 %v416
        %1996 = vmatpush.msra.mxu0 %v384
        %1997 = vmatpush.msra.mxu0 %v352
        %1998 = vmatpush.msra.mxu0 %v320
        %1999 = vmatpush.msra.mxu0 %v288
        %2000 = vmatpush.msra.mxu0 %v256
        %2001 = vmatpush.msra.mxu0 %v224
        %2002 = vmatmul.f32.gmra.mxu0 %v218
        %v2003 = vpop.f32.mrf.mxu0
        %v2004 = vadd.f32 %v1364, %v2003
        %2005 = vdwg.mxu0
        %2006 = vmatpush.msra.mxu0 %v705
        %2007 = vmatpush.msra.mxu0 %v673
        %2008 = vmatpush.msra.mxu0 %v641
        %2009 = vmatpush.msra.mxu0 %v609
        %2010 = vmatpush.msra.mxu0 %v577
        %2011 = vmatpush.msra.mxu0 %v545
        %2012 = vmatpush.msra.mxu0 %v513
        %2013 = vmatpush.msra.mxu0 %v481
        %2014 = vmatpush.msra.mxu0 %v449
        %2015 = vmatpush.msra.mxu0 %v417
        %2016 = vmatpush.msra.mxu0 %v385
        %2017 = vmatpush.msra.mxu0 %v353
        %2018 = vmatpush.msra.mxu0 %v321
        %2019 = vmatpush.msra.mxu0 %v289
        %2020 = vmatpush.msra.mxu0 %v257
        %2021 = vmatpush.msra.mxu0 %v225
        %2022 = vmatmul.f32.gmra.mxu0 %v218
        %v2023 = vpop.f32.mrf.mxu0
        %v2024 = vadd.f32 %v1384, %v2023
        %2025 = vdwg.mxu0
        %2026 = vmatpush.msra.mxu0 %v706
        %2027 = vmatpush.msra.mxu0 %v674
        %2028 = vmatpush.msra.mxu0 %v642
        %2029 = vmatpush.msra.mxu0 %v610
        %2030 = vmatpush.msra.mxu0 %v578
        %2031 = vmatpush.msra.mxu0 %v546
        %2032 = vmatpush.msra.mxu0 %v514
        %2033 = vmatpush.msra.mxu0 %v482
        %2034 = vmatpush.msra.mxu0 %v450
        %2035 = vmatpush.msra.mxu0 %v418
        %2036 = vmatpush.msra.mxu0 %v386
        %2037 = vmatpush.msra.mxu0 %v354
        %2038 = vmatpush.msra.mxu0 %v322
        %2039 = vmatpush.msra.mxu0 %v290
        %2040 = vmatpush.msra.mxu0 %v258
        %2041 = vmatpush.msra.mxu0 %v226
        %2042 = vmatmul.f32.gmra.mxu0 %v218
        %v2043 = vpop.f32.mrf.mxu0
        %v2044 = vadd.f32 %v1404, %v2043
        %2045 = vdwg.mxu0
        %2046 = vmatpush.msra.mxu0 %v707
        %2047 = vmatpush.msra.mxu0 %v675
        %2048 = vmatpush.msra.mxu0 %v643
        %2049 = vmatpush.msra.mxu0 %v611
        %2050 = vmatpush.msra.mxu0 %v579
        %2051 = vmatpush.msra.mxu0 %v547
        %2052 = vmatpush.msra.mxu0 %v515
        %2053 = vmatpush.msra.mxu0 %v483
        %2054 = vmatpush.msra.mxu0 %v451
        %2055 = vmatpush.msra.mxu0 %v419
        %2056 = vmatpush.msra.mxu0 %v387
        %2057 = vmatpush.msra.mxu0 %v355
        %2058 = vmatpush.msra.mxu0 %v323
        %2059 = vmatpush.msra.mxu0 %v291
        %2060 = vmatpush.msra.mxu0 %v259
        %2061 = vmatpush.msra.mxu0 %v227
        %2062 = vmatmul.f32.gmra.mxu0 %v218
        %v2063 = vpop.f32.mrf.mxu0
        %v2064 = vadd.f32 %v1424, %v2063
        %2065 = vdwg.mxu0
        %2066 = vmatpush.msra.mxu0 %v708
        %2067 = vmatpush.msra.mxu0 %v676
        %2068 = vmatpush.msra.mxu0 %v644
        %2069 = vmatpush.msra.mxu0 %v612
        %2070 = vmatpush.msra.mxu0 %v580
        %2071 = vmatpush.msra.mxu0 %v548
        %2072 = vmatpush.msra.mxu0 %v516
        %2073 = vmatpush.msra.mxu0 %v484
        %2074 = vmatpush.msra.mxu0 %v452
        %2075 = vmatpush.msra.mxu0 %v420
        %2076 = vmatpush.msra.mxu0 %v388
        %2077 = vmatpush.msra.mxu0 %v356
        %2078 = vmatpush.msra.mxu0 %v324
        %2079 = vmatpush.msra.mxu0 %v292
        %2080 = vmatpush.msra.mxu0 %v260
        %2081 = vmatpush.msra.mxu0 %v228
        %2082 = vmatmul.f32.gmra.mxu0 %v218
        %v2083 = vpop.f32.mrf.mxu0
        %v2084 = vadd.f32 %v1444, %v2083
        %2085 = vdwg.mxu0
        %2086 = vmatpush.msra.mxu0 %v709
        %2087 = vmatpush.msra.mxu0 %v677
        %2088 = vmatpush.msra.mxu0 %v645
        %2089 = vmatpush.msra.mxu0 %v613
        %2090 = vmatpush.msra.mxu0 %v581
        %2091 = vmatpush.msra.mxu0 %v549
        %2092 = vmatpush.msra.mxu0 %v517
        %2093 = vmatpush.msra.mxu0 %v485
        %2094 = vmatpush.msra.mxu0 %v453
        %2095 = vmatpush.msra.mxu0 %v421
        %2096 = vmatpush.msra.mxu0 %v389
        %2097 = vmatpush.msra.mxu0 %v357
        %2098 = vmatpush.msra.mxu0 %v325
        %2099 = vmatpush.msra.mxu0 %v293
        %2100 = vmatpush.msra.mxu0 %v261
        %2101 = vmatpush.msra.mxu0 %v229
        %2102 = vmatmul.f32.gmra.mxu0 %v218
        %v2103 = vpop.f32.mrf.mxu0
        %v2104 = vadd.f32 %v1464, %v2103
        %2105 = vdwg.mxu0
        %2106 = vmatpush.msra.mxu0 %v710
        %2107 = vmatpush.msra.mxu0 %v678
        %2108 = vmatpush.msra.mxu0 %v646
        %2109 = vmatpush.msra.mxu0 %v614
        %2110 = vmatpush.msra.mxu0 %v582
        %2111 = vmatpush.msra.mxu0 %v550
        %2112 = vmatpush.msra.mxu0 %v518
        %2113 = vmatpush.msra.mxu0 %v486
        %2114 = vmatpush.msra.mxu0 %v454
        %2115 = vmatpush.msra.mxu0 %v422
        %2116 = vmatpush.msra.mxu0 %v390
        %2117 = vmatpush.msra.mxu0 %v358
        %2118 = vmatpush.msra.mxu0 %v326
        %2119 = vmatpush.msra.mxu0 %v294
        %2120 = vmatpush.msra.mxu0 %v262
        %2121 = vmatpush.msra.mxu0 %v230
        %2122 = vmatmul.f32.gmra.mxu0 %v218
        %v2123 = vpop.f32.mrf.mxu0
        %v2124 = vadd.f32 %v1484, %v2123
        %2125 = vdwg.mxu0
        %2126 = vmatpush.msra.mxu0 %v711
        %2127 = vmatpush.msra.mxu0 %v679
        %2128 = vmatpush.msra.mxu0 %v647
        %2129 = vmatpush.msra.mxu0 %v615
        %2130 = vmatpush.msra.mxu0 %v583
        %2131 = vmatpush.msra.mxu0 %v551
        %2132 = vmatpush.msra.mxu0 %v519
        %2133 = vmatpush.msra.mxu0 %v487
        %2134 = vmatpush.msra.mxu0 %v455
        %2135 = vmatpush.msra.mxu0 %v423
        %2136 = vmatpush.msra.mxu0 %v391
        %2137 = vmatpush.msra.mxu0 %v359
        %2138 = vmatpush.msra.mxu0 %v327
        %2139 = vmatpush.msra.mxu0 %v295
        %2140 = vmatpush.msra.mxu0 %v263
        %2141 = vmatpush.msra.mxu0 %v231
        %2142 = vmatmul.f32.gmra.mxu0 %v218
        %v2143 = vpop.f32.mrf.mxu0
        %v2144 = vadd.f32 %v1504, %v2143
        %2145 = vdwg.mxu0
        %2146 = vmatpush.msra.mxu0 %v712
        %2147 = vmatpush.msra.mxu0 %v680
        %2148 = vmatpush.msra.mxu0 %v648
        %2149 = vmatpush.msra.mxu0 %v616
        %2150 = vmatpush.msra.mxu0 %v584
        %2151 = vmatpush.msra.mxu0 %v552
        %2152 = vmatpush.msra.mxu0 %v520
        %2153 = vmatpush.msra.mxu0 %v488
        %2154 = vmatpush.msra.mxu0 %v456
        %2155 = vmatpush.msra.mxu0 %v424
        %2156 = vmatpush.msra.mxu0 %v392
        %2157 = vmatpush.msra.mxu0 %v360
        %2158 = vmatpush.msra.mxu0 %v328
        %2159 = vmatpush.msra.mxu0 %v296
        %2160 = vmatpush.msra.mxu0 %v264
        %2161 = vmatpush.msra.mxu0 %v232
        %2162 = vmatmul.f32.gmra.mxu0 %v218
        %v2163 = vpop.f32.mrf.mxu0
        %v2164 = vadd.f32 %v1524, %v2163
        %2165 = vdwg.mxu0
        %2166 = vmatpush.msra.mxu0 %v713
        %2167 = vmatpush.msra.mxu0 %v681
        %2168 = vmatpush.msra.mxu0 %v649
        %2169 = vmatpush.msra.mxu0 %v617
        %2170 = vmatpush.msra.mxu0 %v585
        %2171 = vmatpush.msra.mxu0 %v553
        %2172 = vmatpush.msra.mxu0 %v521
        %2173 = vmatpush.msra.mxu0 %v489
        %2174 = vmatpush.msra.mxu0 %v457
        %2175 = vmatpush.msra.mxu0 %v425
        %2176 = vmatpush.msra.mxu0 %v393
        %2177 = vmatpush.msra.mxu0 %v361
        %2178 = vmatpush.msra.mxu0 %v329
        %2179 = vmatpush.msra.mxu0 %v297
        %2180 = vmatpush.msra.mxu0 %v265
        %2181 = vmatpush.msra.mxu0 %v233
        %2182 = vmatmul.f32.gmra.mxu0 %v218
        %v2183 = vpop.f32.mrf.mxu0
        %v2184 = vadd.f32 %v1544, %v2183
        %2185 = vdwg.mxu0
        %2186 = vmatpush.msra.mxu0 %v714
        %2187 = vmatpush.msra.mxu0 %v682
        %2188 = vmatpush.msra.mxu0 %v650
        %2189 = vmatpush.msra.mxu0 %v618
        %2190 = vmatpush.msra.mxu0 %v586
        %2191 = vmatpush.msra.mxu0 %v554
        %2192 = vmatpush.msra.mxu0 %v522
        %2193 = vmatpush.msra.mxu0 %v490
        %2194 = vmatpush.msra.mxu0 %v458
        %2195 = vmatpush.msra.mxu0 %v426
        %2196 = vmatpush.msra.mxu0 %v394
        %2197 = vmatpush.msra.mxu0 %v362
        %2198 = vmatpush.msra.mxu0 %v330
        %2199 = vmatpush.msra.mxu0 %v298
        %2200 = vmatpush.msra.mxu0 %v266
        %2201 = vmatpush.msra.mxu0 %v234
        %2202 = vmatmul.f32.gmra.mxu0 %v218
        %v2203 = vpop.f32.mrf.mxu0
        %v2204 = vadd.f32 %v1564, %v2203
        %2205 = vdwg.mxu0
        %2206 = vmatpush.msra.mxu0 %v715
        %2207 = vmatpush.msra.mxu0 %v683
        %2208 = vmatpush.msra.mxu0 %v651
        %2209 = vmatpush.msra.mxu0 %v619
        %2210 = vmatpush.msra.mxu0 %v587
        %2211 = vmatpush.msra.mxu0 %v555
        %2212 = vmatpush.msra.mxu0 %v523
        %2213 = vmatpush.msra.mxu0 %v491
        %2214 = vmatpush.msra.mxu0 %v459
        %2215 = vmatpush.msra.mxu0 %v427
        %2216 = vmatpush.msra.mxu0 %v395
        %2217 = vmatpush.msra.mxu0 %v363
        %2218 = vmatpush.msra.mxu0 %v331
        %2219 = vmatpush.msra.mxu0 %v299
        %2220 = vmatpush.msra.mxu0 %v267
        %2221 = vmatpush.msra.mxu0 %v235
        %2222 = vmatmul.f32.gmra.mxu0 %v218
        %v2223 = vpop.f32.mrf.mxu0
        %v2224 = vadd.f32 %v1584, %v2223
        %2225 = vdwg.mxu0
        %2226 = vmatpush.msra.mxu0 %v716
        %2227 = vmatpush.msra.mxu0 %v684
        %2228 = vmatpush.msra.mxu0 %v652
        %2229 = vmatpush.msra.mxu0 %v620
        %2230 = vmatpush.msra.mxu0 %v588
        %2231 = vmatpush.msra.mxu0 %v556
        %2232 = vmatpush.msra.mxu0 %v524
        %2233 = vmatpush.msra.mxu0 %v492
        %2234 = vmatpush.msra.mxu0 %v460
        %2235 = vmatpush.msra.mxu0 %v428
        %2236 = vmatpush.msra.mxu0 %v396
        %2237 = vmatpush.msra.mxu0 %v364
        %2238 = vmatpush.msra.mxu0 %v332
        %2239 = vmatpush.msra.mxu0 %v300
        %2240 = vmatpush.msra.mxu0 %v268
        %2241 = vmatpush.msra.mxu0 %v236
        %2242 = vmatmul.f32.gmra.mxu0 %v218
        %v2243 = vpop.f32.mrf.mxu0
        %v2244 = vadd.f32 %v1604, %v2243
        %2245 = vdwg.mxu0
        %2246 = vmatpush.msra.mxu0 %v717
        %2247 = vmatpush.msra.mxu0 %v685
        %2248 = vmatpush.msra.mxu0 %v653
        %2249 = vmatpush.msra.mxu0 %v621
        %2250 = vmatpush.msra.mxu0 %v589
        %2251 = vmatpush.msra.mxu0 %v557
        %2252 = vmatpush.msra.mxu0 %v525
        %2253 = vmatpush.msra.mxu0 %v493
        %2254 = vmatpush.msra.mxu0 %v461
        %2255 = vmatpush.msra.mxu0 %v429
        %2256 = vmatpush.msra.mxu0 %v397
        %2257 = vmatpush.msra.mxu0 %v365
        %2258 = vmatpush.msra.mxu0 %v333
        %2259 = vmatpush.msra.mxu0 %v301
        %2260 = vmatpush.msra.mxu0 %v269
        %2261 = vmatpush.msra.mxu0 %v237
        %2262 = vmatmul.f32.gmra.mxu0 %v218
        %v2263 = vpop.f32.mrf.mxu0
        %v2264 = vadd.f32 %v1624, %v2263
        %2265 = vdwg.mxu0
        %2266 = vmatpush.msra.mxu0 %v718
        %2267 = vmatpush.msra.mxu0 %v686
        %2268 = vmatpush.msra.mxu0 %v654
        %2269 = vmatpush.msra.mxu0 %v622
        %2270 = vmatpush.msra.mxu0 %v590
        %2271 = vmatpush.msra.mxu0 %v558
        %2272 = vmatpush.msra.mxu0 %v526
        %2273 = vmatpush.msra.mxu0 %v494
        %2274 = vmatpush.msra.mxu0 %v462
        %2275 = vmatpush.msra.mxu0 %v430
        %2276 = vmatpush.msra.mxu0 %v398
        %2277 = vmatpush.msra.mxu0 %v366
        %2278 = vmatpush.msra.mxu0 %v334
        %2279 = vmatpush.msra.mxu0 %v302
        %2280 = vmatpush.msra.mxu0 %v270
        %2281 = vmatpush.msra.mxu0 %v238
        %2282 = vmatmul.f32.gmra.mxu0 %v218
        %v2283 = vpop.f32.mrf.mxu0
        %v2284 = vadd.f32 %v1644, %v2283
        %2285 = vdwg.mxu0
        %2286 = vmatpush.msra.mxu0 %v719
        %2287 = vmatpush.msra.mxu0 %v687
        %2288 = vmatpush.msra.mxu0 %v655
        %2289 = vmatpush.msra.mxu0 %v623
        %2290 = vmatpush.msra.mxu0 %v591
        %2291 = vmatpush.msra.mxu0 %v559
        %2292 = vmatpush.msra.mxu0 %v527
        %2293 = vmatpush.msra.mxu0 %v495
        %2294 = vmatpush.msra.mxu0 %v463
        %2295 = vmatpush.msra.mxu0 %v431
        %2296 = vmatpush.msra.mxu0 %v399
        %2297 = vmatpush.msra.mxu0 %v367
        %2298 = vmatpush.msra.mxu0 %v335
        %2299 = vmatpush.msra.mxu0 %v303
        %2300 = vmatpush.msra.mxu0 %v271
        %2301 = vmatpush.msra.mxu0 %v239
        %2302 = vmatmul.f32.gmra.mxu0 %v218
        %v2303 = vpop.f32.mrf.mxu0
        %v2304 = vadd.f32 %v1664, %v2303
        %2305 = vdwg.mxu0
        %2306 = vmatpush.msra.mxu0 %v720
        %2307 = vmatpush.msra.mxu0 %v688
        %2308 = vmatpush.msra.mxu0 %v656
        %2309 = vmatpush.msra.mxu0 %v624
        %2310 = vmatpush.msra.mxu0 %v592
        %2311 = vmatpush.msra.mxu0 %v560
        %2312 = vmatpush.msra.mxu0 %v528
        %2313 = vmatpush.msra.mxu0 %v496
        %2314 = vmatpush.msra.mxu0 %v464
        %2315 = vmatpush.msra.mxu0 %v432
        %2316 = vmatpush.msra.mxu0 %v400
        %2317 = vmatpush.msra.mxu0 %v368
        %2318 = vmatpush.msra.mxu0 %v336
        %2319 = vmatpush.msra.mxu0 %v304
        %2320 = vmatpush.msra.mxu0 %v272
        %2321 = vmatpush.msra.mxu0 %v240
        %2322 = vmatmul.f32.gmra.mxu0 %v218
        %v2323 = vpop.f32.mrf.mxu0
        %v2324 = vadd.f32 %v1684, %v2323
        %2325 = vdwg.mxu0
        %2326 = vmatpush.msra.mxu0 %v721
        %2327 = vmatpush.msra.mxu0 %v689
        %2328 = vmatpush.msra.mxu0 %v657
        %2329 = vmatpush.msra.mxu0 %v625
        %2330 = vmatpush.msra.mxu0 %v593
        %2331 = vmatpush.msra.mxu0 %v561
        %2332 = vmatpush.msra.mxu0 %v529
        %2333 = vmatpush.msra.mxu0 %v497
        %2334 = vmatpush.msra.mxu0 %v465
        %2335 = vmatpush.msra.mxu0 %v433
        %2336 = vmatpush.msra.mxu0 %v401
        %2337 = vmatpush.msra.mxu0 %v369
        %2338 = vmatpush.msra.mxu0 %v337
        %2339 = vmatpush.msra.mxu0 %v305
        %2340 = vmatpush.msra.mxu0 %v273
        %2341 = vmatpush.msra.mxu0 %v241
        %2342 = vmatmul.f32.gmra.mxu0 %v218
        %v2343 = vpop.f32.mrf.mxu0
        %v2344 = vadd.f32 %v1704, %v2343
        %2345 = vdwg.mxu0
        %2346 = vmatpush.msra.mxu0 %v722
        %2347 = vmatpush.msra.mxu0 %v690
        %2348 = vmatpush.msra.mxu0 %v658
        %2349 = vmatpush.msra.mxu0 %v626
        %2350 = vmatpush.msra.mxu0 %v594
        %2351 = vmatpush.msra.mxu0 %v562
        %2352 = vmatpush.msra.mxu0 %v530
        %2353 = vmatpush.msra.mxu0 %v498
        %2354 = vmatpush.msra.mxu0 %v466
        %2355 = vmatpush.msra.mxu0 %v434
        %2356 = vmatpush.msra.mxu0 %v402
        %2357 = vmatpush.msra.mxu0 %v370
        %2358 = vmatpush.msra.mxu0 %v338
        %2359 = vmatpush.msra.mxu0 %v306
        %2360 = vmatpush.msra.mxu0 %v274
        %2361 = vmatpush.msra.mxu0 %v242
        %2362 = vmatmul.f32.gmra.mxu0 %v218
        %v2363 = vpop.f32.mrf.mxu0
        %v2364 = vadd.f32 %v1724, %v2363
        %2365 = vdwg.mxu0
        %2366 = vmatpush.msra.mxu0 %v723
        %2367 = vmatpush.msra.mxu0 %v691
        %2368 = vmatpush.msra.mxu0 %v659
        %2369 = vmatpush.msra.mxu0 %v627
        %2370 = vmatpush.msra.mxu0 %v595
        %2371 = vmatpush.msra.mxu0 %v563
        %2372 = vmatpush.msra.mxu0 %v531
        %2373 = vmatpush.msra.mxu0 %v499
        %2374 = vmatpush.msra.mxu0 %v467
        %2375 = vmatpush.msra.mxu0 %v435
        %2376 = vmatpush.msra.mxu0 %v403
        %2377 = vmatpush.msra.mxu0 %v371
        %2378 = vmatpush.msra.mxu0 %v339
        %2379 = vmatpush.msra.mxu0 %v307
        %2380 = vmatpush.msra.mxu0 %v275
        %2381 = vmatpush.msra.mxu0 %v243
        %2382 = vmatmul.f32.gmra.mxu0 %v218
        %v2383 = vpop.f32.mrf.mxu0
        %v2384 = vadd.f32 %v1744, %v2383
        %2385 = vdwg.mxu0
        %2386 = vmatpush.msra.mxu0 %v724
        %2387 = vmatpush.msra.mxu0 %v692
        %2388 = vmatpush.msra.mxu0 %v660
        %2389 = vmatpush.msra.mxu0 %v628
        %2390 = vmatpush.msra.mxu0 %v596
        %2391 = vmatpush.msra.mxu0 %v564
        %2392 = vmatpush.msra.mxu0 %v532
        %2393 = vmatpush.msra.mxu0 %v500
        %2394 = vmatpush.msra.mxu0 %v468
        %2395 = vmatpush.msra.mxu0 %v436
        %2396 = vmatpush.msra.mxu0 %v404
        %2397 = vmatpush.msra.mxu0 %v372
        %2398 = vmatpush.msra.mxu0 %v340
        %2399 = vmatpush.msra.mxu0 %v308
        %2400 = vmatpush.msra.mxu0 %v276
        %2401 = vmatpush.msra.mxu0 %v244
        %2402 = vmatmul.f32.gmra.mxu0 %v218
        %v2403 = vpop.f32.mrf.mxu0
        %v2404 = vadd.f32 %v1764, %v2403
        %2405 = vdwg.mxu0
        %2406 = vmatpush.msra.mxu0 %v725
        %2407 = vmatpush.msra.mxu0 %v693
        %2408 = vmatpush.msra.mxu0 %v661
        %2409 = vmatpush.msra.mxu0 %v629
        %2410 = vmatpush.msra.mxu0 %v597
        %2411 = vmatpush.msra.mxu0 %v565
        %2412 = vmatpush.msra.mxu0 %v533
        %2413 = vmatpush.msra.mxu0 %v501
        %2414 = vmatpush.msra.mxu0 %v469
        %2415 = vmatpush.msra.mxu0 %v437
        %2416 = vmatpush.msra.mxu0 %v405
        %2417 = vmatpush.msra.mxu0 %v373
        %2418 = vmatpush.msra.mxu0 %v341
        %2419 = vmatpush.msra.mxu0 %v309
        %2420 = vmatpush.msra.mxu0 %v277
        %2421 = vmatpush.msra.mxu0 %v245
        %2422 = vmatmul.f32.gmra.mxu0 %v218
        %v2423 = vpop.f32.mrf.mxu0
        %v2424 = vadd.f32 %v1784, %v2423
        %2425 = vdwg.mxu0
        %2426 = vmatpush.msra.mxu0 %v726
        %2427 = vmatpush.msra.mxu0 %v694
        %2428 = vmatpush.msra.mxu0 %v662
        %2429 = vmatpush.msra.mxu0 %v630
        %2430 = vmatpush.msra.mxu0 %v598
        %2431 = vmatpush.msra.mxu0 %v566
        %2432 = vmatpush.msra.mxu0 %v534
        %2433 = vmatpush.msra.mxu0 %v502
        %2434 = vmatpush.msra.mxu0 %v470
        %2435 = vmatpush.msra.mxu0 %v438
        %2436 = vmatpush.msra.mxu0 %v406
        %2437 = vmatpush.msra.mxu0 %v374
        %2438 = vmatpush.msra.mxu0 %v342
        %2439 = vmatpush.msra.mxu0 %v310
        %2440 = vmatpush.msra.mxu0 %v278
        %2441 = vmatpush.msra.mxu0 %v246
        %2442 = vmatmul.f32.gmra.mxu0 %v218
        %v2443 = vpop.f32.mrf.mxu0
        %v2444 = vadd.f32 %v1804, %v2443
        %2445 = vdwg.mxu0
        %2446 = vmatpush.msra.mxu0 %v727
        %2447 = vmatpush.msra.mxu0 %v695
        %2448 = vmatpush.msra.mxu0 %v663
        %2449 = vmatpush.msra.mxu0 %v631
        %2450 = vmatpush.msra.mxu0 %v599
        %2451 = vmatpush.msra.mxu0 %v567
        %2452 = vmatpush.msra.mxu0 %v535
        %2453 = vmatpush.msra.mxu0 %v503
        %2454 = vmatpush.msra.mxu0 %v471
        %2455 = vmatpush.msra.mxu0 %v439
        %2456 = vmatpush.msra.mxu0 %v407
        %2457 = vmatpush.msra.mxu0 %v375
        %2458 = vmatpush.msra.mxu0 %v343
        %2459 = vmatpush.msra.mxu0 %v311
        %2460 = vmatpush.msra.mxu0 %v279
        %2461 = vmatpush.msra.mxu0 %v247
        %2462 = vmatmul.f32.gmra.mxu0 %v218
        %v2463 = vpop.f32.mrf.mxu0
        %v2464 = vadd.f32 %v1824, %v2463
        %2465 = vdwg.mxu0
        %2466 = vmatpush.msra.mxu0 %v728
        %2467 = vmatpush.msra.mxu0 %v696
        %2468 = vmatpush.msra.mxu0 %v664
        %2469 = vmatpush.msra.mxu0 %v632
        %2470 = vmatpush.msra.mxu0 %v600
        %2471 = vmatpush.msra.mxu0 %v568
        %2472 = vmatpush.msra.mxu0 %v536
        %2473 = vmatpush.msra.mxu0 %v504
        %2474 = vmatpush.msra.mxu0 %v472
        %2475 = vmatpush.msra.mxu0 %v440
        %2476 = vmatpush.msra.mxu0 %v408
        %2477 = vmatpush.msra.mxu0 %v376
        %2478 = vmatpush.msra.mxu0 %v344
        %2479 = vmatpush.msra.mxu0 %v312
        %2480 = vmatpush.msra.mxu0 %v280
        %2481 = vmatpush.msra.mxu0 %v248
        %2482 = vmatmul.f32.gmra.mxu0 %v218
        %v2483 = vpop.f32.mrf.mxu0
        %v2484 = vadd.f32 %v1844, %v2483
        %2485 = vdwg.mxu0
        %2486 = vmatpush.msra.mxu0 %v729
        %2487 = vmatpush.msra.mxu0 %v697
        %2488 = vmatpush.msra.mxu0 %v665
        %2489 = vmatpush.msra.mxu0 %v633
        %2490 = vmatpush.msra.mxu0 %v601
        %2491 = vmatpush.msra.mxu0 %v569
        %2492 = vmatpush.msra.mxu0 %v537
        %2493 = vmatpush.msra.mxu0 %v505
        %2494 = vmatpush.msra.mxu0 %v473
        %2495 = vmatpush.msra.mxu0 %v441
        %2496 = vmatpush.msra.mxu0 %v409
        %2497 = vmatpush.msra.mxu0 %v377
        %2498 = vmatpush.msra.mxu0 %v345
        %2499 = vmatpush.msra.mxu0 %v313
        %2500 = vmatpush.msra.mxu0 %v281
        %2501 = vmatpush.msra.mxu0 %v249
        %2502 = vmatmul.f32.gmra.mxu0 %v218
        %v2503 = vpop.f32.mrf.mxu0
        %v2504 = vadd.f32 %v1864, %v2503
        %2505 = vdwg.mxu0
        %2506 = vmatpush.msra.mxu0 %v730
        %2507 = vmatpush.msra.mxu0 %v698
        %2508 = vmatpush.msra.mxu0 %v666
        %2509 = vmatpush.msra.mxu0 %v634
        %2510 = vmatpush.msra.mxu0 %v602
        %2511 = vmatpush.msra.mxu0 %v570
        %2512 = vmatpush.msra.mxu0 %v538
        %2513 = vmatpush.msra.mxu0 %v506
        %2514 = vmatpush.msra.mxu0 %v474
        %2515 = vmatpush.msra.mxu0 %v442
        %2516 = vmatpush.msra.mxu0 %v410
        %2517 = vmatpush.msra.mxu0 %v378
        %2518 = vmatpush.msra.mxu0 %v346
        %2519 = vmatpush.msra.mxu0 %v314
        %2520 = vmatpush.msra.mxu0 %v282
        %2521 = vmatpush.msra.mxu0 %v250
        %2522 = vmatmul.f32.gmra.mxu0 %v218
        %v2523 = vpop.f32.mrf.mxu0
        %v2524 = vadd.f32 %v1884, %v2523
        %2525 = vdwg.mxu0
        %s2526 = scalar_lea.vmem %s208, 4
        %v2527 = vld [vmem:[%s2526] sm:$0x3]
        %s2528 = scalar_lea.vmem %s1, 8192
        %v2529 = vld [vmem:[%s2528] sm:$0xff]
        %v2530 = vld [vmem:[%s2528 + $0x8] sm:$0xff]
        %v2531 = vld [vmem:[%s2528 + $0x10] sm:$0xff]
        %v2532 = vld [vmem:[%s2528 + $0x18] sm:$0xff]
        %v2533 = vld [vmem:[%s2528 + $0x20] sm:$0xff]
        %v2534 = vld [vmem:[%s2528 + $0x28] sm:$0xff]
        %v2535 = vld [vmem:[%s2528 + $0x30] sm:$0xff]
        %v2536 = vld [vmem:[%s2528 + $0x38] sm:$0xff]
        %v2537 = vld [vmem:[%s2528 + $0x40] sm:$0xff]
        %v2538 = vld [vmem:[%s2528 + $0x48] sm:$0xff]
        %v2539 = vld [vmem:[%s2528 + $0x50] sm:$0xff]
        %v2540 = vld [vmem:[%s2528 + $0x58] sm:$0xff]
        %v2541 = vld [vmem:[%s2528 + $0x60] sm:$0xff]
        %v2542 = vld [vmem:[%s2528 + $0x68] sm:$0xff]
        %v2543 = vld [vmem:[%s2528 + $0x70] sm:$0xff]
        %v2544 = vld [vmem:[%s2528 + $0x78] sm:$0xff]
        %v2545 = vld [vmem:[%s2528 + $0x80] sm:$0xff]
        %v2546 = vld [vmem:[%s2528 + $0x88] sm:$0xff]
        %v2547 = vld [vmem:[%s2528 + $0x90] sm:$0xff]
        %v2548 = vld [vmem:[%s2528 + $0x98] sm:$0xff]
        %v2549 = vld [vmem:[%s2528 + $0xa0] sm:$0xff]
        %v2550 = vld [vmem:[%s2528 + $0xa8] sm:$0xff]
        %v2551 = vld [vmem:[%s2528 + $0xb0] sm:$0xff]
        %v2552 = vld [vmem:[%s2528 + $0xb8] sm:$0xff]
        %v2553 = vld [vmem:[%s2528 + $0xc0] sm:$0xff]
        %v2554 = vld [vmem:[%s2528 + $0xc8] sm:$0xff]
        %v2555 = vld [vmem:[%s2528 + $0xd0] sm:$0xff]
        %v2556 = vld [vmem:[%s2528 + $0xd8] sm:$0xff]
        %v2557 = vld [vmem:[%s2528 + $0xe0] sm:$0xff]
        %v2558 = vld [vmem:[%s2528 + $0xe8] sm:$0xff]
        %v2559 = vld [vmem:[%s2528 + $0xf0] sm:$0xff]
        %v2560 = vld [vmem:[%s2528 + $0xf8] sm:$0xff]
        %v2561 = vld [vmem:[%s2528 + $0x100] sm:$0xff]
        %v2562 = vld [vmem:[%s2528 + $0x108] sm:$0xff]
        %v2563 = vld [vmem:[%s2528 + $0x110] sm:$0xff]
        %v2564 = vld [vmem:[%s2528 + $0x118] sm:$0xff]
        %v2565 = vld [vmem:[%s2528 + $0x120] sm:$0xff]
        %v2566 = vld [vmem:[%s2528 + $0x128] sm:$0xff]
        %v2567 = vld [vmem:[%s2528 + $0x130] sm:$0xff]
        %v2568 = vld [vmem:[%s2528 + $0x138] sm:$0xff]
        %v2569 = vld [vmem:[%s2528 + $0x140] sm:$0xff]
        %v2570 = vld [vmem:[%s2528 + $0x148] sm:$0xff]
        %v2571 = vld [vmem:[%s2528 + $0x150] sm:$0xff]
        %v2572 = vld [vmem:[%s2528 + $0x158] sm:$0xff]
        %v2573 = vld [vmem:[%s2528 + $0x160] sm:$0xff]
        %v2574 = vld [vmem:[%s2528 + $0x168] sm:$0xff]
        %v2575 = vld [vmem:[%s2528 + $0x170] sm:$0xff]
        %v2576 = vld [vmem:[%s2528 + $0x178] sm:$0xff]
        %v2577 = vld [vmem:[%s2528 + $0x180] sm:$0xff]
        %v2578 = vld [vmem:[%s2528 + $0x188] sm:$0xff]
        %v2579 = vld [vmem:[%s2528 + $0x190] sm:$0xff]
        %v2580 = vld [vmem:[%s2528 + $0x198] sm:$0xff]
        %v2581 = vld [vmem:[%s2528 + $0x1a0] sm:$0xff]
        %v2582 = vld [vmem:[%s2528 + $0x1a8] sm:$0xff]
        %v2583 = vld [vmem:[%s2528 + $0x1b0] sm:$0xff]
        %v2584 = vld [vmem:[%s2528 + $0x1b8] sm:$0xff]
        %v2585 = vld [vmem:[%s2528 + $0x1c0] sm:$0xff]
        %v2586 = vld [vmem:[%s2528 + $0x1c8] sm:$0xff]
        %v2587 = vld [vmem:[%s2528 + $0x1d0] sm:$0xff]
        %v2588 = vld [vmem:[%s2528 + $0x1d8] sm:$0xff]
        %v2589 = vld [vmem:[%s2528 + $0x1e0] sm:$0xff]
        %v2590 = vld [vmem:[%s2528 + $0x1e8] sm:$0xff]
        %v2591 = vld [vmem:[%s2528 + $0x1f0] sm:$0xff]
        %v2592 = vld [vmem:[%s2528 + $0x1f8] sm:$0xff]
        %v2593 = vld [vmem:[%s2528 + $0x200] sm:$0xff]
        %v2594 = vld [vmem:[%s2528 + $0x208] sm:$0xff]
        %v2595 = vld [vmem:[%s2528 + $0x210] sm:$0xff]
        %v2596 = vld [vmem:[%s2528 + $0x218] sm:$0xff]
        %v2597 = vld [vmem:[%s2528 + $0x220] sm:$0xff]
        %v2598 = vld [vmem:[%s2528 + $0x228] sm:$0xff]
        %v2599 = vld [vmem:[%s2528 + $0x230] sm:$0xff]
        %v2600 = vld [vmem:[%s2528 + $0x238] sm:$0xff]
        %v2601 = vld [vmem:[%s2528 + $0x240] sm:$0xff]
        %v2602 = vld [vmem:[%s2528 + $0x248] sm:$0xff]
        %v2603 = vld [vmem:[%s2528 + $0x250] sm:$0xff]
        %v2604 = vld [vmem:[%s2528 + $0x258] sm:$0xff]
        %v2605 = vld [vmem:[%s2528 + $0x260] sm:$0xff]
        %v2606 = vld [vmem:[%s2528 + $0x268] sm:$0xff]
        %v2607 = vld [vmem:[%s2528 + $0x270] sm:$0xff]
        %v2608 = vld [vmem:[%s2528 + $0x278] sm:$0xff]
        %v2609 = vld [vmem:[%s2528 + $0x280] sm:$0xff]
        %v2610 = vld [vmem:[%s2528 + $0x288] sm:$0xff]
        %v2611 = vld [vmem:[%s2528 + $0x290] sm:$0xff]
        %v2612 = vld [vmem:[%s2528 + $0x298] sm:$0xff]
        %v2613 = vld [vmem:[%s2528 + $0x2a0] sm:$0xff]
        %v2614 = vld [vmem:[%s2528 + $0x2a8] sm:$0xff]
        %v2615 = vld [vmem:[%s2528 + $0x2b0] sm:$0xff]
        %v2616 = vld [vmem:[%s2528 + $0x2b8] sm:$0xff]
        %v2617 = vld [vmem:[%s2528 + $0x2c0] sm:$0xff]
        %v2618 = vld [vmem:[%s2528 + $0x2c8] sm:$0xff]
        %v2619 = vld [vmem:[%s2528 + $0x2d0] sm:$0xff]
        %v2620 = vld [vmem:[%s2528 + $0x2d8] sm:$0xff]
        %v2621 = vld [vmem:[%s2528 + $0x2e0] sm:$0xff]
        %v2622 = vld [vmem:[%s2528 + $0x2e8] sm:$0xff]
        %v2623 = vld [vmem:[%s2528 + $0x2f0] sm:$0xff]
        %v2624 = vld [vmem:[%s2528 + $0x2f8] sm:$0xff]
        %v2625 = vld [vmem:[%s2528 + $0x300] sm:$0xff]
        %v2626 = vld [vmem:[%s2528 + $0x308] sm:$0xff]
        %v2627 = vld [vmem:[%s2528 + $0x310] sm:$0xff]
        %v2628 = vld [vmem:[%s2528 + $0x318] sm:$0xff]
        %v2629 = vld [vmem:[%s2528 + $0x320] sm:$0xff]
        %v2630 = vld [vmem:[%s2528 + $0x328] sm:$0xff]
        %v2631 = vld [vmem:[%s2528 + $0x330] sm:$0xff]
        %v2632 = vld [vmem:[%s2528 + $0x338] sm:$0xff]
        %v2633 = vld [vmem:[%s2528 + $0x340] sm:$0xff]
        %v2634 = vld [vmem:[%s2528 + $0x348] sm:$0xff]
        %v2635 = vld [vmem:[%s2528 + $0x350] sm:$0xff]
        %v2636 = vld [vmem:[%s2528 + $0x358] sm:$0xff]
        %v2637 = vld [vmem:[%s2528 + $0x360] sm:$0xff]
        %v2638 = vld [vmem:[%s2528 + $0x368] sm:$0xff]
        %v2639 = vld [vmem:[%s2528 + $0x370] sm:$0xff]
        %v2640 = vld [vmem:[%s2528 + $0x378] sm:$0xff]
        %v2641 = vld [vmem:[%s2528 + $0x380] sm:$0xff]
        %v2642 = vld [vmem:[%s2528 + $0x388] sm:$0xff]
        %v2643 = vld [vmem:[%s2528 + $0x390] sm:$0xff]
        %v2644 = vld [vmem:[%s2528 + $0x398] sm:$0xff]
        %v2645 = vld [vmem:[%s2528 + $0x3a0] sm:$0xff]
        %v2646 = vld [vmem:[%s2528 + $0x3a8] sm:$0xff]
        %v2647 = vld [vmem:[%s2528 + $0x3b0] sm:$0xff]
        %v2648 = vld [vmem:[%s2528 + $0x3b8] sm:$0xff]
        %v2649 = vld [vmem:[%s2528 + $0x3c0] sm:$0xff]
        %v2650 = vld [vmem:[%s2528 + $0x3c8] sm:$0xff]
        %v2651 = vld [vmem:[%s2528 + $0x3d0] sm:$0xff]
        %v2652 = vld [vmem:[%s2528 + $0x3d8] sm:$0xff]
        %v2653 = vld [vmem:[%s2528 + $0x3e0] sm:$0xff]
        %v2654 = vld [vmem:[%s2528 + $0x3e8] sm:$0xff]
        %v2655 = vld [vmem:[%s2528 + $0x3f0] sm:$0xff]
        %v2656 = vld [vmem:[%s2528 + $0x3f8] sm:$0xff]
        %v2657 = vld [vmem:[%s2528 + $0x400] sm:$0xff]
        %v2658 = vld [vmem:[%s2528 + $0x408] sm:$0xff]
        %v2659 = vld [vmem:[%s2528 + $0x410] sm:$0xff]
        %v2660 = vld [vmem:[%s2528 + $0x418] sm:$0xff]
        %v2661 = vld [vmem:[%s2528 + $0x420] sm:$0xff]
        %v2662 = vld [vmem:[%s2528 + $0x428] sm:$0xff]
        %v2663 = vld [vmem:[%s2528 + $0x430] sm:$0xff]
        %v2664 = vld [vmem:[%s2528 + $0x438] sm:$0xff]
        %v2665 = vld [vmem:[%s2528 + $0x440] sm:$0xff]
        %v2666 = vld [vmem:[%s2528 + $0x448] sm:$0xff]
        %v2667 = vld [vmem:[%s2528 + $0x450] sm:$0xff]
        %v2668 = vld [vmem:[%s2528 + $0x458] sm:$0xff]
        %v2669 = vld [vmem:[%s2528 + $0x460] sm:$0xff]
        %v2670 = vld [vmem:[%s2528 + $0x468] sm:$0xff]
        %v2671 = vld [vmem:[%s2528 + $0x470] sm:$0xff]
        %v2672 = vld [vmem:[%s2528 + $0x478] sm:$0xff]
        %v2673 = vld [vmem:[%s2528 + $0x480] sm:$0xff]
        %v2674 = vld [vmem:[%s2528 + $0x488] sm:$0xff]
        %v2675 = vld [vmem:[%s2528 + $0x490] sm:$0xff]
        %v2676 = vld [vmem:[%s2528 + $0x498] sm:$0xff]
        %v2677 = vld [vmem:[%s2528 + $0x4a0] sm:$0xff]
        %v2678 = vld [vmem:[%s2528 + $0x4a8] sm:$0xff]
        %v2679 = vld [vmem:[%s2528 + $0x4b0] sm:$0xff]
        %v2680 = vld [vmem:[%s2528 + $0x4b8] sm:$0xff]
        %v2681 = vld [vmem:[%s2528 + $0x4c0] sm:$0xff]
        %v2682 = vld [vmem:[%s2528 + $0x4c8] sm:$0xff]
        %v2683 = vld [vmem:[%s2528 + $0x4d0] sm:$0xff]
        %v2684 = vld [vmem:[%s2528 + $0x4d8] sm:$0xff]
        %v2685 = vld [vmem:[%s2528 + $0x4e0] sm:$0xff]
        %v2686 = vld [vmem:[%s2528 + $0x4e8] sm:$0xff]
        %v2687 = vld [vmem:[%s2528 + $0x4f0] sm:$0xff]
        %v2688 = vld [vmem:[%s2528 + $0x4f8] sm:$0xff]
        %v2689 = vld [vmem:[%s2528 + $0x500] sm:$0xff]
        %v2690 = vld [vmem:[%s2528 + $0x508] sm:$0xff]
        %v2691 = vld [vmem:[%s2528 + $0x510] sm:$0xff]
        %v2692 = vld [vmem:[%s2528 + $0x518] sm:$0xff]
        %v2693 = vld [vmem:[%s2528 + $0x520] sm:$0xff]
        %v2694 = vld [vmem:[%s2528 + $0x528] sm:$0xff]
        %v2695 = vld [vmem:[%s2528 + $0x530] sm:$0xff]
        %v2696 = vld [vmem:[%s2528 + $0x538] sm:$0xff]
        %v2697 = vld [vmem:[%s2528 + $0x540] sm:$0xff]
        %v2698 = vld [vmem:[%s2528 + $0x548] sm:$0xff]
        %v2699 = vld [vmem:[%s2528 + $0x550] sm:$0xff]
        %v2700 = vld [vmem:[%s2528 + $0x558] sm:$0xff]
        %v2701 = vld [vmem:[%s2528 + $0x560] sm:$0xff]
        %v2702 = vld [vmem:[%s2528 + $0x568] sm:$0xff]
        %v2703 = vld [vmem:[%s2528 + $0x570] sm:$0xff]
        %v2704 = vld [vmem:[%s2528 + $0x578] sm:$0xff]
        %v2705 = vld [vmem:[%s2528 + $0x580] sm:$0xff]
        %v2706 = vld [vmem:[%s2528 + $0x588] sm:$0xff]
        %v2707 = vld [vmem:[%s2528 + $0x590] sm:$0xff]
        %v2708 = vld [vmem:[%s2528 + $0x598] sm:$0xff]
        %v2709 = vld [vmem:[%s2528 + $0x5a0] sm:$0xff]
        %v2710 = vld [vmem:[%s2528 + $0x5a8] sm:$0xff]
        %v2711 = vld [vmem:[%s2528 + $0x5b0] sm:$0xff]
        %v2712 = vld [vmem:[%s2528 + $0x5b8] sm:$0xff]
        %v2713 = vld [vmem:[%s2528 + $0x5c0] sm:$0xff]
        %v2714 = vld [vmem:[%s2528 + $0x5c8] sm:$0xff]
        %v2715 = vld [vmem:[%s2528 + $0x5d0] sm:$0xff]
        %v2716 = vld [vmem:[%s2528 + $0x5d8] sm:$0xff]
        %v2717 = vld [vmem:[%s2528 + $0x5e0] sm:$0xff]
        %v2718 = vld [vmem:[%s2528 + $0x5e8] sm:$0xff]
        %v2719 = vld [vmem:[%s2528 + $0x5f0] sm:$0xff]
        %v2720 = vld [vmem:[%s2528 + $0x5f8] sm:$0xff]
        %v2721 = vld [vmem:[%s2528 + $0x600] sm:$0xff]
        %v2722 = vld [vmem:[%s2528 + $0x608] sm:$0xff]
        %v2723 = vld [vmem:[%s2528 + $0x610] sm:$0xff]
        %v2724 = vld [vmem:[%s2528 + $0x618] sm:$0xff]
        %v2725 = vld [vmem:[%s2528 + $0x620] sm:$0xff]
        %v2726 = vld [vmem:[%s2528 + $0x628] sm:$0xff]
        %v2727 = vld [vmem:[%s2528 + $0x630] sm:$0xff]
        %v2728 = vld [vmem:[%s2528 + $0x638] sm:$0xff]
        %v2729 = vld [vmem:[%s2528 + $0x640] sm:$0xff]
        %v2730 = vld [vmem:[%s2528 + $0x648] sm:$0xff]
        %v2731 = vld [vmem:[%s2528 + $0x650] sm:$0xff]
        %v2732 = vld [vmem:[%s2528 + $0x658] sm:$0xff]
        %v2733 = vld [vmem:[%s2528 + $0x660] sm:$0xff]
        %v2734 = vld [vmem:[%s2528 + $0x668] sm:$0xff]
        %v2735 = vld [vmem:[%s2528 + $0x670] sm:$0xff]
        %v2736 = vld [vmem:[%s2528 + $0x678] sm:$0xff]
        %v2737 = vld [vmem:[%s2528 + $0x680] sm:$0xff]
        %v2738 = vld [vmem:[%s2528 + $0x688] sm:$0xff]
        %v2739 = vld [vmem:[%s2528 + $0x690] sm:$0xff]
        %v2740 = vld [vmem:[%s2528 + $0x698] sm:$0xff]
        %v2741 = vld [vmem:[%s2528 + $0x6a0] sm:$0xff]
        %v2742 = vld [vmem:[%s2528 + $0x6a8] sm:$0xff]
        %v2743 = vld [vmem:[%s2528 + $0x6b0] sm:$0xff]
        %v2744 = vld [vmem:[%s2528 + $0x6b8] sm:$0xff]
        %v2745 = vld [vmem:[%s2528 + $0x6c0] sm:$0xff]
        %v2746 = vld [vmem:[%s2528 + $0x6c8] sm:$0xff]
        %v2747 = vld [vmem:[%s2528 + $0x6d0] sm:$0xff]
        %v2748 = vld [vmem:[%s2528 + $0x6d8] sm:$0xff]
        %v2749 = vld [vmem:[%s2528 + $0x6e0] sm:$0xff]
        %v2750 = vld [vmem:[%s2528 + $0x6e8] sm:$0xff]
        %v2751 = vld [vmem:[%s2528 + $0x6f0] sm:$0xff]
        %v2752 = vld [vmem:[%s2528 + $0x6f8] sm:$0xff]
        %v2753 = vld [vmem:[%s2528 + $0x700] sm:$0xff]
        %v2754 = vld [vmem:[%s2528 + $0x708] sm:$0xff]
        %v2755 = vld [vmem:[%s2528 + $0x710] sm:$0xff]
        %v2756 = vld [vmem:[%s2528 + $0x718] sm:$0xff]
        %v2757 = vld [vmem:[%s2528 + $0x720] sm:$0xff]
        %v2758 = vld [vmem:[%s2528 + $0x728] sm:$0xff]
        %v2759 = vld [vmem:[%s2528 + $0x730] sm:$0xff]
        %v2760 = vld [vmem:[%s2528 + $0x738] sm:$0xff]
        %v2761 = vld [vmem:[%s2528 + $0x740] sm:$0xff]
        %v2762 = vld [vmem:[%s2528 + $0x748] sm:$0xff]
        %v2763 = vld [vmem:[%s2528 + $0x750] sm:$0xff]
        %v2764 = vld [vmem:[%s2528 + $0x758] sm:$0xff]
        %v2765 = vld [vmem:[%s2528 + $0x760] sm:$0xff]
        %v2766 = vld [vmem:[%s2528 + $0x768] sm:$0xff]
        %v2767 = vld [vmem:[%s2528 + $0x770] sm:$0xff]
        %v2768 = vld [vmem:[%s2528 + $0x778] sm:$0xff]
        %v2769 = vld [vmem:[%s2528 + $0x780] sm:$0xff]
        %v2770 = vld [vmem:[%s2528 + $0x788] sm:$0xff]
        %v2771 = vld [vmem:[%s2528 + $0x790] sm:$0xff]
        %v2772 = vld [vmem:[%s2528 + $0x798] sm:$0xff]
        %v2773 = vld [vmem:[%s2528 + $0x7a0] sm:$0xff]
        %v2774 = vld [vmem:[%s2528 + $0x7a8] sm:$0xff]
        %v2775 = vld [vmem:[%s2528 + $0x7b0] sm:$0xff]
        %v2776 = vld [vmem:[%s2528 + $0x7b8] sm:$0xff]
        %v2777 = vld [vmem:[%s2528 + $0x7c0] sm:$0xff]
        %v2778 = vld [vmem:[%s2528 + $0x7c8] sm:$0xff]
        %v2779 = vld [vmem:[%s2528 + $0x7d0] sm:$0xff]
        %v2780 = vld [vmem:[%s2528 + $0x7d8] sm:$0xff]
        %v2781 = vld [vmem:[%s2528 + $0x7e0] sm:$0xff]
        %v2782 = vld [vmem:[%s2528 + $0x7e8] sm:$0xff]
        %v2783 = vld [vmem:[%s2528 + $0x7f0] sm:$0xff]
        %v2784 = vld [vmem:[%s2528 + $0x7f8] sm:$0xff]
        %v2785 = vld [vmem:[%s2528 + $0x800] sm:$0xff]
        %v2786 = vld [vmem:[%s2528 + $0x808] sm:$0xff]
        %v2787 = vld [vmem:[%s2528 + $0x810] sm:$0xff]
        %v2788 = vld [vmem:[%s2528 + $0x818] sm:$0xff]
        %v2789 = vld [vmem:[%s2528 + $0x820] sm:$0xff]
        %v2790 = vld [vmem:[%s2528 + $0x828] sm:$0xff]
        %v2791 = vld [vmem:[%s2528 + $0x830] sm:$0xff]
        %v2792 = vld [vmem:[%s2528 + $0x838] sm:$0xff]
        %v2793 = vld [vmem:[%s2528 + $0x840] sm:$0xff]
        %v2794 = vld [vmem:[%s2528 + $0x848] sm:$0xff]
        %v2795 = vld [vmem:[%s2528 + $0x850] sm:$0xff]
        %v2796 = vld [vmem:[%s2528 + $0x858] sm:$0xff]
        %v2797 = vld [vmem:[%s2528 + $0x860] sm:$0xff]
        %v2798 = vld [vmem:[%s2528 + $0x868] sm:$0xff]
        %v2799 = vld [vmem:[%s2528 + $0x870] sm:$0xff]
        %v2800 = vld [vmem:[%s2528 + $0x878] sm:$0xff]
        %v2801 = vld [vmem:[%s2528 + $0x880] sm:$0xff]
        %v2802 = vld [vmem:[%s2528 + $0x888] sm:$0xff]
        %v2803 = vld [vmem:[%s2528 + $0x890] sm:$0xff]
        %v2804 = vld [vmem:[%s2528 + $0x898] sm:$0xff]
        %v2805 = vld [vmem:[%s2528 + $0x8a0] sm:$0xff]
        %v2806 = vld [vmem:[%s2528 + $0x8a8] sm:$0xff]
        %v2807 = vld [vmem:[%s2528 + $0x8b0] sm:$0xff]
        %v2808 = vld [vmem:[%s2528 + $0x8b8] sm:$0xff]
        %v2809 = vld [vmem:[%s2528 + $0x8c0] sm:$0xff]
        %v2810 = vld [vmem:[%s2528 + $0x8c8] sm:$0xff]
        %v2811 = vld [vmem:[%s2528 + $0x8d0] sm:$0xff]
        %v2812 = vld [vmem:[%s2528 + $0x8d8] sm:$0xff]
        %v2813 = vld [vmem:[%s2528 + $0x8e0] sm:$0xff]
        %v2814 = vld [vmem:[%s2528 + $0x8e8] sm:$0xff]
        %v2815 = vld [vmem:[%s2528 + $0x8f0] sm:$0xff]
        %v2816 = vld [vmem:[%s2528 + $0x8f8] sm:$0xff]
        %v2817 = vld [vmem:[%s2528 + $0x900] sm:$0xff]
        %v2818 = vld [vmem:[%s2528 + $0x908] sm:$0xff]
        %v2819 = vld [vmem:[%s2528 + $0x910] sm:$0xff]
        %v2820 = vld [vmem:[%s2528 + $0x918] sm:$0xff]
        %v2821 = vld [vmem:[%s2528 + $0x920] sm:$0xff]
        %v2822 = vld [vmem:[%s2528 + $0x928] sm:$0xff]
        %v2823 = vld [vmem:[%s2528 + $0x930] sm:$0xff]
        %v2824 = vld [vmem:[%s2528 + $0x938] sm:$0xff]
        %v2825 = vld [vmem:[%s2528 + $0x940] sm:$0xff]
        %v2826 = vld [vmem:[%s2528 + $0x948] sm:$0xff]
        %v2827 = vld [vmem:[%s2528 + $0x950] sm:$0xff]
        %v2828 = vld [vmem:[%s2528 + $0x958] sm:$0xff]
        %v2829 = vld [vmem:[%s2528 + $0x960] sm:$0xff]
        %v2830 = vld [vmem:[%s2528 + $0x968] sm:$0xff]
        %v2831 = vld [vmem:[%s2528 + $0x970] sm:$0xff]
        %v2832 = vld [vmem:[%s2528 + $0x978] sm:$0xff]
        %v2833 = vld [vmem:[%s2528 + $0x980] sm:$0xff]
        %v2834 = vld [vmem:[%s2528 + $0x988] sm:$0xff]
        %v2835 = vld [vmem:[%s2528 + $0x990] sm:$0xff]
        %v2836 = vld [vmem:[%s2528 + $0x998] sm:$0xff]
        %v2837 = vld [vmem:[%s2528 + $0x9a0] sm:$0xff]
        %v2838 = vld [vmem:[%s2528 + $0x9a8] sm:$0xff]
        %v2839 = vld [vmem:[%s2528 + $0x9b0] sm:$0xff]
        %v2840 = vld [vmem:[%s2528 + $0x9b8] sm:$0xff]
        %v2841 = vld [vmem:[%s2528 + $0x9c0] sm:$0xff]
        %v2842 = vld [vmem:[%s2528 + $0x9c8] sm:$0xff]
        %v2843 = vld [vmem:[%s2528 + $0x9d0] sm:$0xff]
        %v2844 = vld [vmem:[%s2528 + $0x9d8] sm:$0xff]
        %v2845 = vld [vmem:[%s2528 + $0x9e0] sm:$0xff]
        %v2846 = vld [vmem:[%s2528 + $0x9e8] sm:$0xff]
        %v2847 = vld [vmem:[%s2528 + $0x9f0] sm:$0xff]
        %v2848 = vld [vmem:[%s2528 + $0x9f8] sm:$0xff]
        %v2849 = vld [vmem:[%s2528 + $0xa00] sm:$0xff]
        %v2850 = vld [vmem:[%s2528 + $0xa08] sm:$0xff]
        %v2851 = vld [vmem:[%s2528 + $0xa10] sm:$0xff]
        %v2852 = vld [vmem:[%s2528 + $0xa18] sm:$0xff]
        %v2853 = vld [vmem:[%s2528 + $0xa20] sm:$0xff]
        %v2854 = vld [vmem:[%s2528 + $0xa28] sm:$0xff]
        %v2855 = vld [vmem:[%s2528 + $0xa30] sm:$0xff]
        %v2856 = vld [vmem:[%s2528 + $0xa38] sm:$0xff]
        %v2857 = vld [vmem:[%s2528 + $0xa40] sm:$0xff]
        %v2858 = vld [vmem:[%s2528 + $0xa48] sm:$0xff]
        %v2859 = vld [vmem:[%s2528 + $0xa50] sm:$0xff]
        %v2860 = vld [vmem:[%s2528 + $0xa58] sm:$0xff]
        %v2861 = vld [vmem:[%s2528 + $0xa60] sm:$0xff]
        %v2862 = vld [vmem:[%s2528 + $0xa68] sm:$0xff]
        %v2863 = vld [vmem:[%s2528 + $0xa70] sm:$0xff]
        %v2864 = vld [vmem:[%s2528 + $0xa78] sm:$0xff]
        %v2865 = vld [vmem:[%s2528 + $0xa80] sm:$0xff]
        %v2866 = vld [vmem:[%s2528 + $0xa88] sm:$0xff]
        %v2867 = vld [vmem:[%s2528 + $0xa90] sm:$0xff]
        %v2868 = vld [vmem:[%s2528 + $0xa98] sm:$0xff]
        %v2869 = vld [vmem:[%s2528 + $0xaa0] sm:$0xff]
        %v2870 = vld [vmem:[%s2528 + $0xaa8] sm:$0xff]
        %v2871 = vld [vmem:[%s2528 + $0xab0] sm:$0xff]
        %v2872 = vld [vmem:[%s2528 + $0xab8] sm:$0xff]
        %v2873 = vld [vmem:[%s2528 + $0xac0] sm:$0xff]
        %v2874 = vld [vmem:[%s2528 + $0xac8] sm:$0xff]
        %v2875 = vld [vmem:[%s2528 + $0xad0] sm:$0xff]
        %v2876 = vld [vmem:[%s2528 + $0xad8] sm:$0xff]
        %v2877 = vld [vmem:[%s2528 + $0xae0] sm:$0xff]
        %v2878 = vld [vmem:[%s2528 + $0xae8] sm:$0xff]
        %v2879 = vld [vmem:[%s2528 + $0xaf0] sm:$0xff]
        %v2880 = vld [vmem:[%s2528 + $0xaf8] sm:$0xff]
        %v2881 = vld [vmem:[%s2528 + $0xb00] sm:$0xff]
        %v2882 = vld [vmem:[%s2528 + $0xb08] sm:$0xff]
        %v2883 = vld [vmem:[%s2528 + $0xb10] sm:$0xff]
        %v2884 = vld [vmem:[%s2528 + $0xb18] sm:$0xff]
        %v2885 = vld [vmem:[%s2528 + $0xb20] sm:$0xff]
        %v2886 = vld [vmem:[%s2528 + $0xb28] sm:$0xff]
        %v2887 = vld [vmem:[%s2528 + $0xb30] sm:$0xff]
        %v2888 = vld [vmem:[%s2528 + $0xb38] sm:$0xff]
        %v2889 = vld [vmem:[%s2528 + $0xb40] sm:$0xff]
        %v2890 = vld [vmem:[%s2528 + $0xb48] sm:$0xff]
        %v2891 = vld [vmem:[%s2528 + $0xb50] sm:$0xff]
        %v2892 = vld [vmem:[%s2528 + $0xb58] sm:$0xff]
        %v2893 = vld [vmem:[%s2528 + $0xb60] sm:$0xff]
        %v2894 = vld [vmem:[%s2528 + $0xb68] sm:$0xff]
        %v2895 = vld [vmem:[%s2528 + $0xb70] sm:$0xff]
        %v2896 = vld [vmem:[%s2528 + $0xb78] sm:$0xff]
        %v2897 = vld [vmem:[%s2528 + $0xb80] sm:$0xff]
        %v2898 = vld [vmem:[%s2528 + $0xb88] sm:$0xff]
        %v2899 = vld [vmem:[%s2528 + $0xb90] sm:$0xff]
        %v2900 = vld [vmem:[%s2528 + $0xb98] sm:$0xff]
        %v2901 = vld [vmem:[%s2528 + $0xba0] sm:$0xff]
        %v2902 = vld [vmem:[%s2528 + $0xba8] sm:$0xff]
        %v2903 = vld [vmem:[%s2528 + $0xbb0] sm:$0xff]
        %v2904 = vld [vmem:[%s2528 + $0xbb8] sm:$0xff]
        %v2905 = vld [vmem:[%s2528 + $0xbc0] sm:$0xff]
        %v2906 = vld [vmem:[%s2528 + $0xbc8] sm:$0xff]
        %v2907 = vld [vmem:[%s2528 + $0xbd0] sm:$0xff]
        %v2908 = vld [vmem:[%s2528 + $0xbd8] sm:$0xff]
        %v2909 = vld [vmem:[%s2528 + $0xbe0] sm:$0xff]
        %v2910 = vld [vmem:[%s2528 + $0xbe8] sm:$0xff]
        %v2911 = vld [vmem:[%s2528 + $0xbf0] sm:$0xff]
        %v2912 = vld [vmem:[%s2528 + $0xbf8] sm:$0xff]
        %v2913 = vld [vmem:[%s2528 + $0xc00] sm:$0xff]
        %v2914 = vld [vmem:[%s2528 + $0xc08] sm:$0xff]
        %v2915 = vld [vmem:[%s2528 + $0xc10] sm:$0xff]
        %v2916 = vld [vmem:[%s2528 + $0xc18] sm:$0xff]
        %v2917 = vld [vmem:[%s2528 + $0xc20] sm:$0xff]
        %v2918 = vld [vmem:[%s2528 + $0xc28] sm:$0xff]
        %v2919 = vld [vmem:[%s2528 + $0xc30] sm:$0xff]
        %v2920 = vld [vmem:[%s2528 + $0xc38] sm:$0xff]
        %v2921 = vld [vmem:[%s2528 + $0xc40] sm:$0xff]
        %v2922 = vld [vmem:[%s2528 + $0xc48] sm:$0xff]
        %v2923 = vld [vmem:[%s2528 + $0xc50] sm:$0xff]
        %v2924 = vld [vmem:[%s2528 + $0xc58] sm:$0xff]
        %v2925 = vld [vmem:[%s2528 + $0xc60] sm:$0xff]
        %v2926 = vld [vmem:[%s2528 + $0xc68] sm:$0xff]
        %v2927 = vld [vmem:[%s2528 + $0xc70] sm:$0xff]
        %v2928 = vld [vmem:[%s2528 + $0xc78] sm:$0xff]
        %v2929 = vld [vmem:[%s2528 + $0xc80] sm:$0xff]
        %v2930 = vld [vmem:[%s2528 + $0xc88] sm:$0xff]
        %v2931 = vld [vmem:[%s2528 + $0xc90] sm:$0xff]
        %v2932 = vld [vmem:[%s2528 + $0xc98] sm:$0xff]
        %v2933 = vld [vmem:[%s2528 + $0xca0] sm:$0xff]
        %v2934 = vld [vmem:[%s2528 + $0xca8] sm:$0xff]
        %v2935 = vld [vmem:[%s2528 + $0xcb0] sm:$0xff]
        %v2936 = vld [vmem:[%s2528 + $0xcb8] sm:$0xff]
        %v2937 = vld [vmem:[%s2528 + $0xcc0] sm:$0xff]
        %v2938 = vld [vmem:[%s2528 + $0xcc8] sm:$0xff]
        %v2939 = vld [vmem:[%s2528 + $0xcd0] sm:$0xff]
        %v2940 = vld [vmem:[%s2528 + $0xcd8] sm:$0xff]
        %v2941 = vld [vmem:[%s2528 + $0xce0] sm:$0xff]
        %v2942 = vld [vmem:[%s2528 + $0xce8] sm:$0xff]
        %v2943 = vld [vmem:[%s2528 + $0xcf0] sm:$0xff]
        %v2944 = vld [vmem:[%s2528 + $0xcf8] sm:$0xff]
        %v2945 = vld [vmem:[%s2528 + $0xd00] sm:$0xff]
        %v2946 = vld [vmem:[%s2528 + $0xd08] sm:$0xff]
        %v2947 = vld [vmem:[%s2528 + $0xd10] sm:$0xff]
        %v2948 = vld [vmem:[%s2528 + $0xd18] sm:$0xff]
        %v2949 = vld [vmem:[%s2528 + $0xd20] sm:$0xff]
        %v2950 = vld [vmem:[%s2528 + $0xd28] sm:$0xff]
        %v2951 = vld [vmem:[%s2528 + $0xd30] sm:$0xff]
        %v2952 = vld [vmem:[%s2528 + $0xd38] sm:$0xff]
        %v2953 = vld [vmem:[%s2528 + $0xd40] sm:$0xff]
        %v2954 = vld [vmem:[%s2528 + $0xd48] sm:$0xff]
        %v2955 = vld [vmem:[%s2528 + $0xd50] sm:$0xff]
        %v2956 = vld [vmem:[%s2528 + $0xd58] sm:$0xff]
        %v2957 = vld [vmem:[%s2528 + $0xd60] sm:$0xff]
        %v2958 = vld [vmem:[%s2528 + $0xd68] sm:$0xff]
        %v2959 = vld [vmem:[%s2528 + $0xd70] sm:$0xff]
        %v2960 = vld [vmem:[%s2528 + $0xd78] sm:$0xff]
        %v2961 = vld [vmem:[%s2528 + $0xd80] sm:$0xff]
        %v2962 = vld [vmem:[%s2528 + $0xd88] sm:$0xff]
        %v2963 = vld [vmem:[%s2528 + $0xd90] sm:$0xff]
        %v2964 = vld [vmem:[%s2528 + $0xd98] sm:$0xff]
        %v2965 = vld [vmem:[%s2528 + $0xda0] sm:$0xff]
        %v2966 = vld [vmem:[%s2528 + $0xda8] sm:$0xff]
        %v2967 = vld [vmem:[%s2528 + $0xdb0] sm:$0xff]
        %v2968 = vld [vmem:[%s2528 + $0xdb8] sm:$0xff]
        %v2969 = vld [vmem:[%s2528 + $0xdc0] sm:$0xff]
        %v2970 = vld [vmem:[%s2528 + $0xdc8] sm:$0xff]
        %v2971 = vld [vmem:[%s2528 + $0xdd0] sm:$0xff]
        %v2972 = vld [vmem:[%s2528 + $0xdd8] sm:$0xff]
        %v2973 = vld [vmem:[%s2528 + $0xde0] sm:$0xff]
        %v2974 = vld [vmem:[%s2528 + $0xde8] sm:$0xff]
        %v2975 = vld [vmem:[%s2528 + $0xdf0] sm:$0xff]
        %v2976 = vld [vmem:[%s2528 + $0xdf8] sm:$0xff]
        %v2977 = vld [vmem:[%s2528 + $0xe00] sm:$0xff]
        %v2978 = vld [vmem:[%s2528 + $0xe08] sm:$0xff]
        %v2979 = vld [vmem:[%s2528 + $0xe10] sm:$0xff]
        %v2980 = vld [vmem:[%s2528 + $0xe18] sm:$0xff]
        %v2981 = vld [vmem:[%s2528 + $0xe20] sm:$0xff]
        %v2982 = vld [vmem:[%s2528 + $0xe28] sm:$0xff]
        %v2983 = vld [vmem:[%s2528 + $0xe30] sm:$0xff]
        %v2984 = vld [vmem:[%s2528 + $0xe38] sm:$0xff]
        %v2985 = vld [vmem:[%s2528 + $0xe40] sm:$0xff]
        %v2986 = vld [vmem:[%s2528 + $0xe48] sm:$0xff]
        %v2987 = vld [vmem:[%s2528 + $0xe50] sm:$0xff]
        %v2988 = vld [vmem:[%s2528 + $0xe58] sm:$0xff]
        %v2989 = vld [vmem:[%s2528 + $0xe60] sm:$0xff]
        %v2990 = vld [vmem:[%s2528 + $0xe68] sm:$0xff]
        %v2991 = vld [vmem:[%s2528 + $0xe70] sm:$0xff]
        %v2992 = vld [vmem:[%s2528 + $0xe78] sm:$0xff]
        %v2993 = vld [vmem:[%s2528 + $0xe80] sm:$0xff]
        %v2994 = vld [vmem:[%s2528 + $0xe88] sm:$0xff]
        %v2995 = vld [vmem:[%s2528 + $0xe90] sm:$0xff]
        %v2996 = vld [vmem:[%s2528 + $0xe98] sm:$0xff]
        %v2997 = vld [vmem:[%s2528 + $0xea0] sm:$0xff]
        %v2998 = vld [vmem:[%s2528 + $0xea8] sm:$0xff]
        %v2999 = vld [vmem:[%s2528 + $0xeb0] sm:$0xff]
        %v3000 = vld [vmem:[%s2528 + $0xeb8] sm:$0xff]
        %v3001 = vld [vmem:[%s2528 + $0xec0] sm:$0xff]
        %v3002 = vld [vmem:[%s2528 + $0xec8] sm:$0xff]
        %v3003 = vld [vmem:[%s2528 + $0xed0] sm:$0xff]
        %v3004 = vld [vmem:[%s2528 + $0xed8] sm:$0xff]
        %v3005 = vld [vmem:[%s2528 + $0xee0] sm:$0xff]
        %v3006 = vld [vmem:[%s2528 + $0xee8] sm:$0xff]
        %v3007 = vld [vmem:[%s2528 + $0xef0] sm:$0xff]
        %v3008 = vld [vmem:[%s2528 + $0xef8] sm:$0xff]
        %v3009 = vld [vmem:[%s2528 + $0xf00] sm:$0xff]
        %v3010 = vld [vmem:[%s2528 + $0xf08] sm:$0xff]
        %v3011 = vld [vmem:[%s2528 + $0xf10] sm:$0xff]
        %v3012 = vld [vmem:[%s2528 + $0xf18] sm:$0xff]
        %v3013 = vld [vmem:[%s2528 + $0xf20] sm:$0xff]
        %v3014 = vld [vmem:[%s2528 + $0xf28] sm:$0xff]
        %v3015 = vld [vmem:[%s2528 + $0xf30] sm:$0xff]
        %v3016 = vld [vmem:[%s2528 + $0xf38] sm:$0xff]
        %v3017 = vld [vmem:[%s2528 + $0xf40] sm:$0xff]
        %v3018 = vld [vmem:[%s2528 + $0xf48] sm:$0xff]
        %v3019 = vld [vmem:[%s2528 + $0xf50] sm:$0xff]
        %v3020 = vld [vmem:[%s2528 + $0xf58] sm:$0xff]
        %v3021 = vld [vmem:[%s2528 + $0xf60] sm:$0xff]
        %v3022 = vld [vmem:[%s2528 + $0xf68] sm:$0xff]
        %v3023 = vld [vmem:[%s2528 + $0xf70] sm:$0xff]
        %v3024 = vld [vmem:[%s2528 + $0xf78] sm:$0xff]
        %v3025 = vld [vmem:[%s2528 + $0xf80] sm:$0xff]
        %v3026 = vld [vmem:[%s2528 + $0xf88] sm:$0xff]
        %v3027 = vld [vmem:[%s2528 + $0xf90] sm:$0xff]
        %v3028 = vld [vmem:[%s2528 + $0xf98] sm:$0xff]
        %v3029 = vld [vmem:[%s2528 + $0xfa0] sm:$0xff]
        %v3030 = vld [vmem:[%s2528 + $0xfa8] sm:$0xff]
        %v3031 = vld [vmem:[%s2528 + $0xfb0] sm:$0xff]
        %v3032 = vld [vmem:[%s2528 + $0xfb8] sm:$0xff]
        %v3033 = vld [vmem:[%s2528 + $0xfc0] sm:$0xff]
        %v3034 = vld [vmem:[%s2528 + $0xfc8] sm:$0xff]
        %v3035 = vld [vmem:[%s2528 + $0xfd0] sm:$0xff]
        %v3036 = vld [vmem:[%s2528 + $0xfd8] sm:$0xff]
        %v3037 = vld [vmem:[%s2528 + $0xfe0] sm:$0xff]
        %v3038 = vld [vmem:[%s2528 + $0xfe8] sm:$0xff]
        %v3039 = vld [vmem:[%s2528 + $0xff0] sm:$0xff]
        %v3040 = vld [vmem:[%s2528 + $0xff8] sm:$0xff]
        %3041 = vmatpush.msra.mxu0 %v3009
        %3042 = vmatpush.msra.mxu0 %v2977
        %3043 = vmatpush.msra.mxu0 %v2945
        %3044 = vmatpush.msra.mxu0 %v2913
        %3045 = vmatpush.msra.mxu0 %v2881
        %3046 = vmatpush.msra.mxu0 %v2849
        %3047 = vmatpush.msra.mxu0 %v2817
        %3048 = vmatpush.msra.mxu0 %v2785
        %3049 = vmatpush.msra.mxu0 %v2753
        %3050 = vmatpush.msra.mxu0 %v2721
        %3051 = vmatpush.msra.mxu0 %v2689
        %3052 = vmatpush.msra.mxu0 %v2657
        %3053 = vmatpush.msra.mxu0 %v2625
        %3054 = vmatpush.msra.mxu0 %v2593
        %3055 = vmatpush.msra.mxu0 %v2561
        %3056 = vmatpush.msra.mxu0 %v2529
        %3057 = vmatmul.f32.gmra.mxu0 %v2527
        %v3058 = vpop.f32.mrf.mxu0
        %v3059 = vadd.f32 0.0, %v3058
        %3060 = vdwg.mxu0
        %3061 = vmatpush.msra.mxu0 %v3010
        %3062 = vmatpush.msra.mxu0 %v2978
        %3063 = vmatpush.msra.mxu0 %v2946
        %3064 = vmatpush.msra.mxu0 %v2914
        %3065 = vmatpush.msra.mxu0 %v2882
        %3066 = vmatpush.msra.mxu0 %v2850
        %3067 = vmatpush.msra.mxu0 %v2818
        %3068 = vmatpush.msra.mxu0 %v2786
        %3069 = vmatpush.msra.mxu0 %v2754
        %3070 = vmatpush.msra.mxu0 %v2722
        %3071 = vmatpush.msra.mxu0 %v2690
        %3072 = vmatpush.msra.mxu0 %v2658
        %3073 = vmatpush.msra.mxu0 %v2626
        %3074 = vmatpush.msra.mxu0 %v2594
        %3075 = vmatpush.msra.mxu0 %v2562
        %3076 = vmatpush.msra.mxu0 %v2530
        %3077 = vmatmul.f32.gmra.mxu0 %v2527
        %v3078 = vpop.f32.mrf.mxu0
        %v3079 = vadd.f32 0.0, %v3078
        %3080 = vdwg.mxu0
        %3081 = vmatpush.msra.mxu0 %v3011
        %3082 = vmatpush.msra.mxu0 %v2979
        %3083 = vmatpush.msra.mxu0 %v2947
        %3084 = vmatpush.msra.mxu0 %v2915
        %3085 = vmatpush.msra.mxu0 %v2883
        %3086 = vmatpush.msra.mxu0 %v2851
        %3087 = vmatpush.msra.mxu0 %v2819
        %3088 = vmatpush.msra.mxu0 %v2787
        %3089 = vmatpush.msra.mxu0 %v2755
        %3090 = vmatpush.msra.mxu0 %v2723
        %3091 = vmatpush.msra.mxu0 %v2691
        %3092 = vmatpush.msra.mxu0 %v2659
        %3093 = vmatpush.msra.mxu0 %v2627
        %3094 = vmatpush.msra.mxu0 %v2595
        %3095 = vmatpush.msra.mxu0 %v2563
        %3096 = vmatpush.msra.mxu0 %v2531
        %3097 = vmatmul.f32.gmra.mxu0 %v2527
        %v3098 = vpop.f32.mrf.mxu0
        %v3099 = vadd.f32 0.0, %v3098
        %3100 = vdwg.mxu0
        %3101 = vmatpush.msra.mxu0 %v3012
        %3102 = vmatpush.msra.mxu0 %v2980
        %3103 = vmatpush.msra.mxu0 %v2948
        %3104 = vmatpush.msra.mxu0 %v2916
        %3105 = vmatpush.msra.mxu0 %v2884
        %3106 = vmatpush.msra.mxu0 %v2852
        %3107 = vmatpush.msra.mxu0 %v2820
        %3108 = vmatpush.msra.mxu0 %v2788
        %3109 = vmatpush.msra.mxu0 %v2756
        %3110 = vmatpush.msra.mxu0 %v2724
        %3111 = vmatpush.msra.mxu0 %v2692
        %3112 = vmatpush.msra.mxu0 %v2660
        %3113 = vmatpush.msra.mxu0 %v2628
        %3114 = vmatpush.msra.mxu0 %v2596
        %3115 = vmatpush.msra.mxu0 %v2564
        %3116 = vmatpush.msra.mxu0 %v2532
        %3117 = vmatmul.f32.gmra.mxu0 %v2527
        %v3118 = vpop.f32.mrf.mxu0
        %v3119 = vadd.f32 0.0, %v3118
        %3120 = vdwg.mxu0
        %3121 = vmatpush.msra.mxu0 %v3013
        %3122 = vmatpush.msra.mxu0 %v2981
        %3123 = vmatpush.msra.mxu0 %v2949
        %3124 = vmatpush.msra.mxu0 %v2917
        %3125 = vmatpush.msra.mxu0 %v2885
        %3126 = vmatpush.msra.mxu0 %v2853
        %3127 = vmatpush.msra.mxu0 %v2821
        %3128 = vmatpush.msra.mxu0 %v2789
        %3129 = vmatpush.msra.mxu0 %v2757
        %3130 = vmatpush.msra.mxu0 %v2725
        %3131 = vmatpush.msra.mxu0 %v2693
        %3132 = vmatpush.msra.mxu0 %v2661
        %3133 = vmatpush.msra.mxu0 %v2629
        %3134 = vmatpush.msra.mxu0 %v2597
        %3135 = vmatpush.msra.mxu0 %v2565
        %3136 = vmatpush.msra.mxu0 %v2533
        %3137 = vmatmul.f32.gmra.mxu0 %v2527
        %v3138 = vpop.f32.mrf.mxu0
        %v3139 = vadd.f32 0.0, %v3138
        %3140 = vdwg.mxu0
        %3141 = vmatpush.msra.mxu0 %v3014
        %3142 = vmatpush.msra.mxu0 %v2982
        %3143 = vmatpush.msra.mxu0 %v2950
        %3144 = vmatpush.msra.mxu0 %v2918
        %3145 = vmatpush.msra.mxu0 %v2886
        %3146 = vmatpush.msra.mxu0 %v2854
        %3147 = vmatpush.msra.mxu0 %v2822
        %3148 = vmatpush.msra.mxu0 %v2790
        %3149 = vmatpush.msra.mxu0 %v2758
        %3150 = vmatpush.msra.mxu0 %v2726
        %3151 = vmatpush.msra.mxu0 %v2694
        %3152 = vmatpush.msra.mxu0 %v2662
        %3153 = vmatpush.msra.mxu0 %v2630
        %3154 = vmatpush.msra.mxu0 %v2598
        %3155 = vmatpush.msra.mxu0 %v2566
        %3156 = vmatpush.msra.mxu0 %v2534
        %3157 = vmatmul.f32.gmra.mxu0 %v2527
        %v3158 = vpop.f32.mrf.mxu0
        %v3159 = vadd.f32 0.0, %v3158
        %3160 = vdwg.mxu0
        %3161 = vmatpush.msra.mxu0 %v3015
        %3162 = vmatpush.msra.mxu0 %v2983
        %3163 = vmatpush.msra.mxu0 %v2951
        %3164 = vmatpush.msra.mxu0 %v2919
        %3165 = vmatpush.msra.mxu0 %v2887
        %3166 = vmatpush.msra.mxu0 %v2855
        %3167 = vmatpush.msra.mxu0 %v2823
        %3168 = vmatpush.msra.mxu0 %v2791
        %3169 = vmatpush.msra.mxu0 %v2759
        %3170 = vmatpush.msra.mxu0 %v2727
        %3171 = vmatpush.msra.mxu0 %v2695
        %3172 = vmatpush.msra.mxu0 %v2663
        %3173 = vmatpush.msra.mxu0 %v2631
        %3174 = vmatpush.msra.mxu0 %v2599
        %3175 = vmatpush.msra.mxu0 %v2567
        %3176 = vmatpush.msra.mxu0 %v2535
        %3177 = vmatmul.f32.gmra.mxu0 %v2527
        %v3178 = vpop.f32.mrf.mxu0
        %v3179 = vadd.f32 0.0, %v3178
        %3180 = vdwg.mxu0
        %3181 = vmatpush.msra.mxu0 %v3016
        %3182 = vmatpush.msra.mxu0 %v2984
        %3183 = vmatpush.msra.mxu0 %v2952
        %3184 = vmatpush.msra.mxu0 %v2920
        %3185 = vmatpush.msra.mxu0 %v2888
        %3186 = vmatpush.msra.mxu0 %v2856
        %3187 = vmatpush.msra.mxu0 %v2824
        %3188 = vmatpush.msra.mxu0 %v2792
        %3189 = vmatpush.msra.mxu0 %v2760
        %3190 = vmatpush.msra.mxu0 %v2728
        %3191 = vmatpush.msra.mxu0 %v2696
        %3192 = vmatpush.msra.mxu0 %v2664
        %3193 = vmatpush.msra.mxu0 %v2632
        %3194 = vmatpush.msra.mxu0 %v2600
        %3195 = vmatpush.msra.mxu0 %v2568
        %3196 = vmatpush.msra.mxu0 %v2536
        %3197 = vmatmul.f32.gmra.mxu0 %v2527
        %v3198 = vpop.f32.mrf.mxu0
        %v3199 = vadd.f32 0.0, %v3198
        %3200 = vdwg.mxu0
        %3201 = vmatpush.msra.mxu0 %v3017
        %3202 = vmatpush.msra.mxu0 %v2985
        %3203 = vmatpush.msra.mxu0 %v2953
        %3204 = vmatpush.msra.mxu0 %v2921
        %3205 = vmatpush.msra.mxu0 %v2889
        %3206 = vmatpush.msra.mxu0 %v2857
        %3207 = vmatpush.msra.mxu0 %v2825
        %3208 = vmatpush.msra.mxu0 %v2793
        %3209 = vmatpush.msra.mxu0 %v2761
        %3210 = vmatpush.msra.mxu0 %v2729
        %3211 = vmatpush.msra.mxu0 %v2697
        %3212 = vmatpush.msra.mxu0 %v2665
        %3213 = vmatpush.msra.mxu0 %v2633
        %3214 = vmatpush.msra.mxu0 %v2601
        %3215 = vmatpush.msra.mxu0 %v2569
        %3216 = vmatpush.msra.mxu0 %v2537
        %3217 = vmatmul.f32.gmra.mxu0 %v2527
        %v3218 = vpop.f32.mrf.mxu0
        %v3219 = vadd.f32 0.0, %v3218
        %3220 = vdwg.mxu0
        %3221 = vmatpush.msra.mxu0 %v3018
        %3222 = vmatpush.msra.mxu0 %v2986
        %3223 = vmatpush.msra.mxu0 %v2954
        %3224 = vmatpush.msra.mxu0 %v2922
        %3225 = vmatpush.msra.mxu0 %v2890
        %3226 = vmatpush.msra.mxu0 %v2858
        %3227 = vmatpush.msra.mxu0 %v2826
        %3228 = vmatpush.msra.mxu0 %v2794
        %3229 = vmatpush.msra.mxu0 %v2762
        %3230 = vmatpush.msra.mxu0 %v2730
        %3231 = vmatpush.msra.mxu0 %v2698
        %3232 = vmatpush.msra.mxu0 %v2666
        %3233 = vmatpush.msra.mxu0 %v2634
        %3234 = vmatpush.msra.mxu0 %v2602
        %3235 = vmatpush.msra.mxu0 %v2570
        %3236 = vmatpush.msra.mxu0 %v2538
        %3237 = vmatmul.f32.gmra.mxu0 %v2527
        %v3238 = vpop.f32.mrf.mxu0
        %v3239 = vadd.f32 0.0, %v3238
        %3240 = vdwg.mxu0
        %3241 = vmatpush.msra.mxu0 %v3019
        %3242 = vmatpush.msra.mxu0 %v2987
        %3243 = vmatpush.msra.mxu0 %v2955
        %3244 = vmatpush.msra.mxu0 %v2923
        %3245 = vmatpush.msra.mxu0 %v2891
        %3246 = vmatpush.msra.mxu0 %v2859
        %3247 = vmatpush.msra.mxu0 %v2827
        %3248 = vmatpush.msra.mxu0 %v2795
        %3249 = vmatpush.msra.mxu0 %v2763
        %3250 = vmatpush.msra.mxu0 %v2731
        %3251 = vmatpush.msra.mxu0 %v2699
        %3252 = vmatpush.msra.mxu0 %v2667
        %3253 = vmatpush.msra.mxu0 %v2635
        %3254 = vmatpush.msra.mxu0 %v2603
        %3255 = vmatpush.msra.mxu0 %v2571
        %3256 = vmatpush.msra.mxu0 %v2539
        %3257 = vmatmul.f32.gmra.mxu0 %v2527
        %v3258 = vpop.f32.mrf.mxu0
        %v3259 = vadd.f32 0.0, %v3258
        %3260 = vdwg.mxu0
        %3261 = vmatpush.msra.mxu0 %v3020
        %3262 = vmatpush.msra.mxu0 %v2988
        %3263 = vmatpush.msra.mxu0 %v2956
        %3264 = vmatpush.msra.mxu0 %v2924
        %3265 = vmatpush.msra.mxu0 %v2892
        %3266 = vmatpush.msra.mxu0 %v2860
        %3267 = vmatpush.msra.mxu0 %v2828
        %3268 = vmatpush.msra.mxu0 %v2796
        %3269 = vmatpush.msra.mxu0 %v2764
        %3270 = vmatpush.msra.mxu0 %v2732
        %3271 = vmatpush.msra.mxu0 %v2700
        %3272 = vmatpush.msra.mxu0 %v2668
        %3273 = vmatpush.msra.mxu0 %v2636
        %3274 = vmatpush.msra.mxu0 %v2604
        %3275 = vmatpush.msra.mxu0 %v2572
        %3276 = vmatpush.msra.mxu0 %v2540
        %3277 = vmatmul.f32.gmra.mxu0 %v2527
        %v3278 = vpop.f32.mrf.mxu0
        %v3279 = vadd.f32 0.0, %v3278
        %3280 = vdwg.mxu0
        %3281 = vmatpush.msra.mxu0 %v3021
        %3282 = vmatpush.msra.mxu0 %v2989
        %3283 = vmatpush.msra.mxu0 %v2957
        %3284 = vmatpush.msra.mxu0 %v2925
        %3285 = vmatpush.msra.mxu0 %v2893
        %3286 = vmatpush.msra.mxu0 %v2861
        %3287 = vmatpush.msra.mxu0 %v2829
        %3288 = vmatpush.msra.mxu0 %v2797
        %3289 = vmatpush.msra.mxu0 %v2765
        %3290 = vmatpush.msra.mxu0 %v2733
        %3291 = vmatpush.msra.mxu0 %v2701
        %3292 = vmatpush.msra.mxu0 %v2669
        %3293 = vmatpush.msra.mxu0 %v2637
        %3294 = vmatpush.msra.mxu0 %v2605
        %3295 = vmatpush.msra.mxu0 %v2573
        %3296 = vmatpush.msra.mxu0 %v2541
        %3297 = vmatmul.f32.gmra.mxu0 %v2527
        %v3298 = vpop.f32.mrf.mxu0
        %v3299 = vadd.f32 0.0, %v3298
        %3300 = vdwg.mxu0
        %3301 = vmatpush.msra.mxu0 %v3022
        %3302 = vmatpush.msra.mxu0 %v2990
        %3303 = vmatpush.msra.mxu0 %v2958
        %3304 = vmatpush.msra.mxu0 %v2926
        %3305 = vmatpush.msra.mxu0 %v2894
        %3306 = vmatpush.msra.mxu0 %v2862
        %3307 = vmatpush.msra.mxu0 %v2830
        %3308 = vmatpush.msra.mxu0 %v2798
        %3309 = vmatpush.msra.mxu0 %v2766
        %3310 = vmatpush.msra.mxu0 %v2734
        %3311 = vmatpush.msra.mxu0 %v2702
        %3312 = vmatpush.msra.mxu0 %v2670
        %3313 = vmatpush.msra.mxu0 %v2638
        %3314 = vmatpush.msra.mxu0 %v2606
        %3315 = vmatpush.msra.mxu0 %v2574
        %3316 = vmatpush.msra.mxu0 %v2542
        %3317 = vmatmul.f32.gmra.mxu0 %v2527
        %v3318 = vpop.f32.mrf.mxu0
        %v3319 = vadd.f32 0.0, %v3318
        %3320 = vdwg.mxu0
        %3321 = vmatpush.msra.mxu0 %v3023
        %3322 = vmatpush.msra.mxu0 %v2991
        %3323 = vmatpush.msra.mxu0 %v2959
        %3324 = vmatpush.msra.mxu0 %v2927
        %3325 = vmatpush.msra.mxu0 %v2895
        %3326 = vmatpush.msra.mxu0 %v2863
        %3327 = vmatpush.msra.mxu0 %v2831
        %3328 = vmatpush.msra.mxu0 %v2799
        %3329 = vmatpush.msra.mxu0 %v2767
        %3330 = vmatpush.msra.mxu0 %v2735
        %3331 = vmatpush.msra.mxu0 %v2703
        %3332 = vmatpush.msra.mxu0 %v2671
        %3333 = vmatpush.msra.mxu0 %v2639
        %3334 = vmatpush.msra.mxu0 %v2607
        %3335 = vmatpush.msra.mxu0 %v2575
        %3336 = vmatpush.msra.mxu0 %v2543
        %3337 = vmatmul.f32.gmra.mxu0 %v2527
        %v3338 = vpop.f32.mrf.mxu0
        %v3339 = vadd.f32 0.0, %v3338
        %3340 = vdwg.mxu0
        %3341 = vmatpush.msra.mxu0 %v3024
        %3342 = vmatpush.msra.mxu0 %v2992
        %3343 = vmatpush.msra.mxu0 %v2960
        %3344 = vmatpush.msra.mxu0 %v2928
        %3345 = vmatpush.msra.mxu0 %v2896
        %3346 = vmatpush.msra.mxu0 %v2864
        %3347 = vmatpush.msra.mxu0 %v2832
        %3348 = vmatpush.msra.mxu0 %v2800
        %3349 = vmatpush.msra.mxu0 %v2768
        %3350 = vmatpush.msra.mxu0 %v2736
        %3351 = vmatpush.msra.mxu0 %v2704
        %3352 = vmatpush.msra.mxu0 %v2672
        %3353 = vmatpush.msra.mxu0 %v2640
        %3354 = vmatpush.msra.mxu0 %v2608
        %3355 = vmatpush.msra.mxu0 %v2576
        %3356 = vmatpush.msra.mxu0 %v2544
        %3357 = vmatmul.f32.gmra.mxu0 %v2527
        %v3358 = vpop.f32.mrf.mxu0
        %v3359 = vadd.f32 0.0, %v3358
        %3360 = vdwg.mxu0
        %3361 = vmatpush.msra.mxu0 %v3025
        %3362 = vmatpush.msra.mxu0 %v2993
        %3363 = vmatpush.msra.mxu0 %v2961
        %3364 = vmatpush.msra.mxu0 %v2929
        %3365 = vmatpush.msra.mxu0 %v2897
        %3366 = vmatpush.msra.mxu0 %v2865
        %3367 = vmatpush.msra.mxu0 %v2833
        %3368 = vmatpush.msra.mxu0 %v2801
        %3369 = vmatpush.msra.mxu0 %v2769
        %3370 = vmatpush.msra.mxu0 %v2737
        %3371 = vmatpush.msra.mxu0 %v2705
        %3372 = vmatpush.msra.mxu0 %v2673
        %3373 = vmatpush.msra.mxu0 %v2641
        %3374 = vmatpush.msra.mxu0 %v2609
        %3375 = vmatpush.msra.mxu0 %v2577
        %3376 = vmatpush.msra.mxu0 %v2545
        %3377 = vmatmul.f32.gmra.mxu0 %v2527
        %v3378 = vpop.f32.mrf.mxu0
        %v3379 = vadd.f32 0.0, %v3378
        %3380 = vdwg.mxu0
        %3381 = vmatpush.msra.mxu0 %v3026
        %3382 = vmatpush.msra.mxu0 %v2994
        %3383 = vmatpush.msra.mxu0 %v2962
        %3384 = vmatpush.msra.mxu0 %v2930
        %3385 = vmatpush.msra.mxu0 %v2898
        %3386 = vmatpush.msra.mxu0 %v2866
        %3387 = vmatpush.msra.mxu0 %v2834
        %3388 = vmatpush.msra.mxu0 %v2802
        %3389 = vmatpush.msra.mxu0 %v2770
        %3390 = vmatpush.msra.mxu0 %v2738
        %3391 = vmatpush.msra.mxu0 %v2706
        %3392 = vmatpush.msra.mxu0 %v2674
        %3393 = vmatpush.msra.mxu0 %v2642
        %3394 = vmatpush.msra.mxu0 %v2610
        %3395 = vmatpush.msra.mxu0 %v2578
        %3396 = vmatpush.msra.mxu0 %v2546
        %3397 = vmatmul.f32.gmra.mxu0 %v2527
        %v3398 = vpop.f32.mrf.mxu0
        %v3399 = vadd.f32 0.0, %v3398
        %3400 = vdwg.mxu0
        %3401 = vmatpush.msra.mxu0 %v3027
        %3402 = vmatpush.msra.mxu0 %v2995
        %3403 = vmatpush.msra.mxu0 %v2963
        %3404 = vmatpush.msra.mxu0 %v2931
        %3405 = vmatpush.msra.mxu0 %v2899
        %3406 = vmatpush.msra.mxu0 %v2867
        %3407 = vmatpush.msra.mxu0 %v2835
        %3408 = vmatpush.msra.mxu0 %v2803
        %3409 = vmatpush.msra.mxu0 %v2771
        %3410 = vmatpush.msra.mxu0 %v2739
        %3411 = vmatpush.msra.mxu0 %v2707
        %3412 = vmatpush.msra.mxu0 %v2675
        %3413 = vmatpush.msra.mxu0 %v2643
        %3414 = vmatpush.msra.mxu0 %v2611
        %3415 = vmatpush.msra.mxu0 %v2579
        %3416 = vmatpush.msra.mxu0 %v2547
        %3417 = vmatmul.f32.gmra.mxu0 %v2527
        %v3418 = vpop.f32.mrf.mxu0
        %v3419 = vadd.f32 0.0, %v3418
        %3420 = vdwg.mxu0
        %3421 = vmatpush.msra.mxu0 %v3028
        %3422 = vmatpush.msra.mxu0 %v2996
        %3423 = vmatpush.msra.mxu0 %v2964
        %3424 = vmatpush.msra.mxu0 %v2932
        %3425 = vmatpush.msra.mxu0 %v2900
        %3426 = vmatpush.msra.mxu0 %v2868
        %3427 = vmatpush.msra.mxu0 %v2836
        %3428 = vmatpush.msra.mxu0 %v2804
        %3429 = vmatpush.msra.mxu0 %v2772
        %3430 = vmatpush.msra.mxu0 %v2740
        %3431 = vmatpush.msra.mxu0 %v2708
        %3432 = vmatpush.msra.mxu0 %v2676
        %3433 = vmatpush.msra.mxu0 %v2644
        %3434 = vmatpush.msra.mxu0 %v2612
        %3435 = vmatpush.msra.mxu0 %v2580
        %3436 = vmatpush.msra.mxu0 %v2548
        %3437 = vmatmul.f32.gmra.mxu0 %v2527
        %v3438 = vpop.f32.mrf.mxu0
        %v3439 = vadd.f32 0.0, %v3438
        %3440 = vdwg.mxu0
        %3441 = vmatpush.msra.mxu0 %v3029
        %3442 = vmatpush.msra.mxu0 %v2997
        %3443 = vmatpush.msra.mxu0 %v2965
        %3444 = vmatpush.msra.mxu0 %v2933
        %3445 = vmatpush.msra.mxu0 %v2901
        %3446 = vmatpush.msra.mxu0 %v2869
        %3447 = vmatpush.msra.mxu0 %v2837
        %3448 = vmatpush.msra.mxu0 %v2805
        %3449 = vmatpush.msra.mxu0 %v2773
        %3450 = vmatpush.msra.mxu0 %v2741
        %3451 = vmatpush.msra.mxu0 %v2709
        %3452 = vmatpush.msra.mxu0 %v2677
        %3453 = vmatpush.msra.mxu0 %v2645
        %3454 = vmatpush.msra.mxu0 %v2613
        %3455 = vmatpush.msra.mxu0 %v2581
        %3456 = vmatpush.msra.mxu0 %v2549
        %3457 = vmatmul.f32.gmra.mxu0 %v2527
        %v3458 = vpop.f32.mrf.mxu0
        %v3459 = vadd.f32 0.0, %v3458
        %3460 = vdwg.mxu0
        %3461 = vmatpush.msra.mxu0 %v3030
        %3462 = vmatpush.msra.mxu0 %v2998
        %3463 = vmatpush.msra.mxu0 %v2966
        %3464 = vmatpush.msra.mxu0 %v2934
        %3465 = vmatpush.msra.mxu0 %v2902
        %3466 = vmatpush.msra.mxu0 %v2870
        %3467 = vmatpush.msra.mxu0 %v2838
        %3468 = vmatpush.msra.mxu0 %v2806
        %3469 = vmatpush.msra.mxu0 %v2774
        %3470 = vmatpush.msra.mxu0 %v2742
        %3471 = vmatpush.msra.mxu0 %v2710
        %3472 = vmatpush.msra.mxu0 %v2678
        %3473 = vmatpush.msra.mxu0 %v2646
        %3474 = vmatpush.msra.mxu0 %v2614
        %3475 = vmatpush.msra.mxu0 %v2582
        %3476 = vmatpush.msra.mxu0 %v2550
        %3477 = vmatmul.f32.gmra.mxu0 %v2527
        %v3478 = vpop.f32.mrf.mxu0
        %v3479 = vadd.f32 0.0, %v3478
        %3480 = vdwg.mxu0
        %3481 = vmatpush.msra.mxu0 %v3031
        %3482 = vmatpush.msra.mxu0 %v2999
        %3483 = vmatpush.msra.mxu0 %v2967
        %3484 = vmatpush.msra.mxu0 %v2935
        %3485 = vmatpush.msra.mxu0 %v2903
        %3486 = vmatpush.msra.mxu0 %v2871
        %3487 = vmatpush.msra.mxu0 %v2839
        %3488 = vmatpush.msra.mxu0 %v2807
        %3489 = vmatpush.msra.mxu0 %v2775
        %3490 = vmatpush.msra.mxu0 %v2743
        %3491 = vmatpush.msra.mxu0 %v2711
        %3492 = vmatpush.msra.mxu0 %v2679
        %3493 = vmatpush.msra.mxu0 %v2647
        %3494 = vmatpush.msra.mxu0 %v2615
        %3495 = vmatpush.msra.mxu0 %v2583
        %3496 = vmatpush.msra.mxu0 %v2551
        %3497 = vmatmul.f32.gmra.mxu0 %v2527
        %v3498 = vpop.f32.mrf.mxu0
        %v3499 = vadd.f32 0.0, %v3498
        %3500 = vdwg.mxu0
        %3501 = vmatpush.msra.mxu0 %v3032
        %3502 = vmatpush.msra.mxu0 %v3000
        %3503 = vmatpush.msra.mxu0 %v2968
        %3504 = vmatpush.msra.mxu0 %v2936
        %3505 = vmatpush.msra.mxu0 %v2904
        %3506 = vmatpush.msra.mxu0 %v2872
        %3507 = vmatpush.msra.mxu0 %v2840
        %3508 = vmatpush.msra.mxu0 %v2808
        %3509 = vmatpush.msra.mxu0 %v2776
        %3510 = vmatpush.msra.mxu0 %v2744
        %3511 = vmatpush.msra.mxu0 %v2712
        %3512 = vmatpush.msra.mxu0 %v2680
        %3513 = vmatpush.msra.mxu0 %v2648
        %3514 = vmatpush.msra.mxu0 %v2616
        %3515 = vmatpush.msra.mxu0 %v2584
        %3516 = vmatpush.msra.mxu0 %v2552
        %3517 = vmatmul.f32.gmra.mxu0 %v2527
        %v3518 = vpop.f32.mrf.mxu0
        %v3519 = vadd.f32 0.0, %v3518
        %3520 = vdwg.mxu0
        %3521 = vmatpush.msra.mxu0 %v3033
        %3522 = vmatpush.msra.mxu0 %v3001
        %3523 = vmatpush.msra.mxu0 %v2969
        %3524 = vmatpush.msra.mxu0 %v2937
        %3525 = vmatpush.msra.mxu0 %v2905
        %3526 = vmatpush.msra.mxu0 %v2873
        %3527 = vmatpush.msra.mxu0 %v2841
        %3528 = vmatpush.msra.mxu0 %v2809
        %3529 = vmatpush.msra.mxu0 %v2777
        %3530 = vmatpush.msra.mxu0 %v2745
        %3531 = vmatpush.msra.mxu0 %v2713
        %3532 = vmatpush.msra.mxu0 %v2681
        %3533 = vmatpush.msra.mxu0 %v2649
        %3534 = vmatpush.msra.mxu0 %v2617
        %3535 = vmatpush.msra.mxu0 %v2585
        %3536 = vmatpush.msra.mxu0 %v2553
        %3537 = vmatmul.f32.gmra.mxu0 %v2527
        %v3538 = vpop.f32.mrf.mxu0
        %v3539 = vadd.f32 0.0, %v3538
        %3540 = vdwg.mxu0
        %3541 = vmatpush.msra.mxu0 %v3034
        %3542 = vmatpush.msra.mxu0 %v3002
        %3543 = vmatpush.msra.mxu0 %v2970
        %3544 = vmatpush.msra.mxu0 %v2938
        %3545 = vmatpush.msra.mxu0 %v2906
        %3546 = vmatpush.msra.mxu0 %v2874
        %3547 = vmatpush.msra.mxu0 %v2842
        %3548 = vmatpush.msra.mxu0 %v2810
        %3549 = vmatpush.msra.mxu0 %v2778
        %3550 = vmatpush.msra.mxu0 %v2746
        %3551 = vmatpush.msra.mxu0 %v2714
        %3552 = vmatpush.msra.mxu0 %v2682
        %3553 = vmatpush.msra.mxu0 %v2650
        %3554 = vmatpush.msra.mxu0 %v2618
        %3555 = vmatpush.msra.mxu0 %v2586
        %3556 = vmatpush.msra.mxu0 %v2554
        %3557 = vmatmul.f32.gmra.mxu0 %v2527
        %v3558 = vpop.f32.mrf.mxu0
        %v3559 = vadd.f32 0.0, %v3558
        %3560 = vdwg.mxu0
        %3561 = vmatpush.msra.mxu0 %v3035
        %3562 = vmatpush.msra.mxu0 %v3003
        %3563 = vmatpush.msra.mxu0 %v2971
        %3564 = vmatpush.msra.mxu0 %v2939
        %3565 = vmatpush.msra.mxu0 %v2907
        %3566 = vmatpush.msra.mxu0 %v2875
        %3567 = vmatpush.msra.mxu0 %v2843
        %3568 = vmatpush.msra.mxu0 %v2811
        %3569 = vmatpush.msra.mxu0 %v2779
        %3570 = vmatpush.msra.mxu0 %v2747
        %3571 = vmatpush.msra.mxu0 %v2715
        %3572 = vmatpush.msra.mxu0 %v2683
        %3573 = vmatpush.msra.mxu0 %v2651
        %3574 = vmatpush.msra.mxu0 %v2619
        %3575 = vmatpush.msra.mxu0 %v2587
        %3576 = vmatpush.msra.mxu0 %v2555
        %3577 = vmatmul.f32.gmra.mxu0 %v2527
        %v3578 = vpop.f32.mrf.mxu0
        %v3579 = vadd.f32 0.0, %v3578
        %3580 = vdwg.mxu0
        %3581 = vmatpush.msra.mxu0 %v3036
        %3582 = vmatpush.msra.mxu0 %v3004
        %3583 = vmatpush.msra.mxu0 %v2972
        %3584 = vmatpush.msra.mxu0 %v2940
        %3585 = vmatpush.msra.mxu0 %v2908
        %3586 = vmatpush.msra.mxu0 %v2876
        %3587 = vmatpush.msra.mxu0 %v2844
        %3588 = vmatpush.msra.mxu0 %v2812
        %3589 = vmatpush.msra.mxu0 %v2780
        %3590 = vmatpush.msra.mxu0 %v2748
        %3591 = vmatpush.msra.mxu0 %v2716
        %3592 = vmatpush.msra.mxu0 %v2684
        %3593 = vmatpush.msra.mxu0 %v2652
        %3594 = vmatpush.msra.mxu0 %v2620
        %3595 = vmatpush.msra.mxu0 %v2588
        %3596 = vmatpush.msra.mxu0 %v2556
        %3597 = vmatmul.f32.gmra.mxu0 %v2527
        %v3598 = vpop.f32.mrf.mxu0
        %v3599 = vadd.f32 0.0, %v3598
        %3600 = vdwg.mxu0
        %3601 = vmatpush.msra.mxu0 %v3037
        %3602 = vmatpush.msra.mxu0 %v3005
        %3603 = vmatpush.msra.mxu0 %v2973
        %3604 = vmatpush.msra.mxu0 %v2941
        %3605 = vmatpush.msra.mxu0 %v2909
        %3606 = vmatpush.msra.mxu0 %v2877
        %3607 = vmatpush.msra.mxu0 %v2845
        %3608 = vmatpush.msra.mxu0 %v2813
        %3609 = vmatpush.msra.mxu0 %v2781
        %3610 = vmatpush.msra.mxu0 %v2749
        %3611 = vmatpush.msra.mxu0 %v2717
        %3612 = vmatpush.msra.mxu0 %v2685
        %3613 = vmatpush.msra.mxu0 %v2653
        %3614 = vmatpush.msra.mxu0 %v2621
        %3615 = vmatpush.msra.mxu0 %v2589
        %3616 = vmatpush.msra.mxu0 %v2557
        %3617 = vmatmul.f32.gmra.mxu0 %v2527
        %v3618 = vpop.f32.mrf.mxu0
        %v3619 = vadd.f32 0.0, %v3618
        %3620 = vdwg.mxu0
        %3621 = vmatpush.msra.mxu0 %v3038
        %3622 = vmatpush.msra.mxu0 %v3006
        %3623 = vmatpush.msra.mxu0 %v2974
        %3624 = vmatpush.msra.mxu0 %v2942
        %3625 = vmatpush.msra.mxu0 %v2910
        %3626 = vmatpush.msra.mxu0 %v2878
        %3627 = vmatpush.msra.mxu0 %v2846
        %3628 = vmatpush.msra.mxu0 %v2814
        %3629 = vmatpush.msra.mxu0 %v2782
        %3630 = vmatpush.msra.mxu0 %v2750
        %3631 = vmatpush.msra.mxu0 %v2718
        %3632 = vmatpush.msra.mxu0 %v2686
        %3633 = vmatpush.msra.mxu0 %v2654
        %3634 = vmatpush.msra.mxu0 %v2622
        %3635 = vmatpush.msra.mxu0 %v2590
        %3636 = vmatpush.msra.mxu0 %v2558
        %3637 = vmatmul.f32.gmra.mxu0 %v2527
        %v3638 = vpop.f32.mrf.mxu0
        %v3639 = vadd.f32 0.0, %v3638
        %3640 = vdwg.mxu0
        %3641 = vmatpush.msra.mxu0 %v3039
        %3642 = vmatpush.msra.mxu0 %v3007
        %3643 = vmatpush.msra.mxu0 %v2975
        %3644 = vmatpush.msra.mxu0 %v2943
        %3645 = vmatpush.msra.mxu0 %v2911
        %3646 = vmatpush.msra.mxu0 %v2879
        %3647 = vmatpush.msra.mxu0 %v2847
        %3648 = vmatpush.msra.mxu0 %v2815
        %3649 = vmatpush.msra.mxu0 %v2783
        %3650 = vmatpush.msra.mxu0 %v2751
        %3651 = vmatpush.msra.mxu0 %v2719
        %3652 = vmatpush.msra.mxu0 %v2687
        %3653 = vmatpush.msra.mxu0 %v2655
        %3654 = vmatpush.msra.mxu0 %v2623
        %3655 = vmatpush.msra.mxu0 %v2591
        %3656 = vmatpush.msra.mxu0 %v2559
        %3657 = vmatmul.f32.gmra.mxu0 %v2527
        %v3658 = vpop.f32.mrf.mxu0
        %v3659 = vadd.f32 0.0, %v3658
        %3660 = vdwg.mxu0
        %3661 = vmatpush.msra.mxu0 %v3040
        %3662 = vmatpush.msra.mxu0 %v3008
        %3663 = vmatpush.msra.mxu0 %v2976
        %3664 = vmatpush.msra.mxu0 %v2944
        %3665 = vmatpush.msra.mxu0 %v2912
        %3666 = vmatpush.msra.mxu0 %v2880
        %3667 = vmatpush.msra.mxu0 %v2848
        %3668 = vmatpush.msra.mxu0 %v2816
        %3669 = vmatpush.msra.mxu0 %v2784
        %3670 = vmatpush.msra.mxu0 %v2752
        %3671 = vmatpush.msra.mxu0 %v2720
        %3672 = vmatpush.msra.mxu0 %v2688
        %3673 = vmatpush.msra.mxu0 %v2656
        %3674 = vmatpush.msra.mxu0 %v2624
        %3675 = vmatpush.msra.mxu0 %v2592
        %3676 = vmatpush.msra.mxu0 %v2560
        %3677 = vmatmul.f32.gmra.mxu0 %v2527
        %v3678 = vpop.f32.mrf.mxu0
        %v3679 = vadd.f32 0.0, %v3678
        %3680 = vdwg.mxu0
        %v3681 = vadd.f32 %v1904, %v3059
        %v3682 = vadd.f32 %v1924, %v3079
        %v3683 = vadd.f32 %v1944, %v3099
        %v3684 = vadd.f32 %v1964, %v3119
        %v3685 = vadd.f32 %v1984, %v3139
        %v3686 = vadd.f32 %v2004, %v3159
        %v3687 = vadd.f32 %v2024, %v3179
        %v3688 = vadd.f32 %v2044, %v3199
        %v3689 = vadd.f32 %v2064, %v3219
        %v3690 = vadd.f32 %v2084, %v3239
        %v3691 = vadd.f32 %v2104, %v3259
        %v3692 = vadd.f32 %v2124, %v3279
        %v3693 = vadd.f32 %v2144, %v3299
        %v3694 = vadd.f32 %v2164, %v3319
        %v3695 = vadd.f32 %v2184, %v3339
        %v3696 = vadd.f32 %v2204, %v3359
        %v3697 = vadd.f32 %v2224, %v3379
        %v3698 = vadd.f32 %v2244, %v3399
        %v3699 = vadd.f32 %v2264, %v3419
        %v3700 = vadd.f32 %v2284, %v3439
        %v3701 = vadd.f32 %v2304, %v3459
        %v3702 = vadd.f32 %v2324, %v3479
        %v3703 = vadd.f32 %v2344, %v3499
        %v3704 = vadd.f32 %v2364, %v3519
        %v3705 = vadd.f32 %v2384, %v3539
        %v3706 = vadd.f32 %v2404, %v3559
        %v3707 = vadd.f32 %v2424, %v3579
        %v3708 = vadd.f32 %v2444, %v3599
        %v3709 = vadd.f32 %v2464, %v3619
        %v3710 = vadd.f32 %v2484, %v3639
        %v3711 = vadd.f32 %v2504, %v3659
        %v3712 = vadd.f32 %v2524, %v3679
        %s3713 = scalar_lea.vmem %s208, 6
        %v3714 = vld [vmem:[%s3713] sm:$0x3]
        %s3715 = scalar_lea.vmem %s1, 12288
        %v3716 = vld [vmem:[%s3715] sm:$0xff]
        %v3717 = vld [vmem:[%s3715 + $0x8] sm:$0xff]
        %v3718 = vld [vmem:[%s3715 + $0x10] sm:$0xff]
        %v3719 = vld [vmem:[%s3715 + $0x18] sm:$0xff]
        %v3720 = vld [vmem:[%s3715 + $0x20] sm:$0xff]
        %v3721 = vld [vmem:[%s3715 + $0x28] sm:$0xff]
        %v3722 = vld [vmem:[%s3715 + $0x30] sm:$0xff]
        %v3723 = vld [vmem:[%s3715 + $0x38] sm:$0xff]
        %v3724 = vld [vmem:[%s3715 + $0x40] sm:$0xff]
        %v3725 = vld [vmem:[%s3715 + $0x48] sm:$0xff]
        %v3726 = vld [vmem:[%s3715 + $0x50] sm:$0xff]
        %v3727 = vld [vmem:[%s3715 + $0x58] sm:$0xff]
        %v3728 = vld [vmem:[%s3715 + $0x60] sm:$0xff]
        %v3729 = vld [vmem:[%s3715 + $0x68] sm:$0xff]
        %v3730 = vld [vmem:[%s3715 + $0x70] sm:$0xff]
        %v3731 = vld [vmem:[%s3715 + $0x78] sm:$0xff]
        %v3732 = vld [vmem:[%s3715 + $0x80] sm:$0xff]
        %v3733 = vld [vmem:[%s3715 + $0x88] sm:$0xff]
        %v3734 = vld [vmem:[%s3715 + $0x90] sm:$0xff]
        %v3735 = vld [vmem:[%s3715 + $0x98] sm:$0xff]
        %v3736 = vld [vmem:[%s3715 + $0xa0] sm:$0xff]
        %v3737 = vld [vmem:[%s3715 + $0xa8] sm:$0xff]
        %v3738 = vld [vmem:[%s3715 + $0xb0] sm:$0xff]
        %v3739 = vld [vmem:[%s3715 + $0xb8] sm:$0xff]
        %v3740 = vld [vmem:[%s3715 + $0xc0] sm:$0xff]
        %v3741 = vld [vmem:[%s3715 + $0xc8] sm:$0xff]
        %v3742 = vld [vmem:[%s3715 + $0xd0] sm:$0xff]
        %v3743 = vld [vmem:[%s3715 + $0xd8] sm:$0xff]
        %v3744 = vld [vmem:[%s3715 + $0xe0] sm:$0xff]
        %v3745 = vld [vmem:[%s3715 + $0xe8] sm:$0xff]
        %v3746 = vld [vmem:[%s3715 + $0xf0] sm:$0xff]
        %v3747 = vld [vmem:[%s3715 + $0xf8] sm:$0xff]
        %v3748 = vld [vmem:[%s3715 + $0x100] sm:$0xff]
        %v3749 = vld [vmem:[%s3715 + $0x108] sm:$0xff]
        %v3750 = vld [vmem:[%s3715 + $0x110] sm:$0xff]
        %v3751 = vld [vmem:[%s3715 + $0x118] sm:$0xff]
        %v3752 = vld [vmem:[%s3715 + $0x120] sm:$0xff]
        %v3753 = vld [vmem:[%s3715 + $0x128] sm:$0xff]
        %v3754 = vld [vmem:[%s3715 + $0x130] sm:$0xff]
        %v3755 = vld [vmem:[%s3715 + $0x138] sm:$0xff]
        %v3756 = vld [vmem:[%s3715 + $0x140] sm:$0xff]
        %v3757 = vld [vmem:[%s3715 + $0x148] sm:$0xff]
        %v3758 = vld [vmem:[%s3715 + $0x150] sm:$0xff]
        %v3759 = vld [vmem:[%s3715 + $0x158] sm:$0xff]
        %v3760 = vld [vmem:[%s3715 + $0x160] sm:$0xff]
        %v3761 = vld [vmem:[%s3715 + $0x168] sm:$0xff]
        %v3762 = vld [vmem:[%s3715 + $0x170] sm:$0xff]
        %v3763 = vld [vmem:[%s3715 + $0x178] sm:$0xff]
        %v3764 = vld [vmem:[%s3715 + $0x180] sm:$0xff]
        %v3765 = vld [vmem:[%s3715 + $0x188] sm:$0xff]
        %v3766 = vld [vmem:[%s3715 + $0x190] sm:$0xff]
        %v3767 = vld [vmem:[%s3715 + $0x198] sm:$0xff]
        %v3768 = vld [vmem:[%s3715 + $0x1a0] sm:$0xff]
        %v3769 = vld [vmem:[%s3715 + $0x1a8] sm:$0xff]
        %v3770 = vld [vmem:[%s3715 + $0x1b0] sm:$0xff]
        %v3771 = vld [vmem:[%s3715 + $0x1b8] sm:$0xff]
        %v3772 = vld [vmem:[%s3715 + $0x1c0] sm:$0xff]
        %v3773 = vld [vmem:[%s3715 + $0x1c8] sm:$0xff]
        %v3774 = vld [vmem:[%s3715 + $0x1d0] sm:$0xff]
        %v3775 = vld [vmem:[%s3715 + $0x1d8] sm:$0xff]
        %v3776 = vld [vmem:[%s3715 + $0x1e0] sm:$0xff]
        %v3777 = vld [vmem:[%s3715 + $0x1e8] sm:$0xff]
        %v3778 = vld [vmem:[%s3715 + $0x1f0] sm:$0xff]
        %v3779 = vld [vmem:[%s3715 + $0x1f8] sm:$0xff]
        %v3780 = vld [vmem:[%s3715 + $0x200] sm:$0xff]
        %v3781 = vld [vmem:[%s3715 + $0x208] sm:$0xff]
        %v3782 = vld [vmem:[%s3715 + $0x210] sm:$0xff]
        %v3783 = vld [vmem:[%s3715 + $0x218] sm:$0xff]
        %v3784 = vld [vmem:[%s3715 + $0x220] sm:$0xff]
        %v3785 = vld [vmem:[%s3715 + $0x228] sm:$0xff]
        %v3786 = vld [vmem:[%s3715 + $0x230] sm:$0xff]
        %v3787 = vld [vmem:[%s3715 + $0x238] sm:$0xff]
        %v3788 = vld [vmem:[%s3715 + $0x240] sm:$0xff]
        %v3789 = vld [vmem:[%s3715 + $0x248] sm:$0xff]
        %v3790 = vld [vmem:[%s3715 + $0x250] sm:$0xff]
        %v3791 = vld [vmem:[%s3715 + $0x258] sm:$0xff]
        %v3792 = vld [vmem:[%s3715 + $0x260] sm:$0xff]
        %v3793 = vld [vmem:[%s3715 + $0x268] sm:$0xff]
        %v3794 = vld [vmem:[%s3715 + $0x270] sm:$0xff]
        %v3795 = vld [vmem:[%s3715 + $0x278] sm:$0xff]
        %v3796 = vld [vmem:[%s3715 + $0x280] sm:$0xff]
        %v3797 = vld [vmem:[%s3715 + $0x288] sm:$0xff]
        %v3798 = vld [vmem:[%s3715 + $0x290] sm:$0xff]
        %v3799 = vld [vmem:[%s3715 + $0x298] sm:$0xff]
        %v3800 = vld [vmem:[%s3715 + $0x2a0] sm:$0xff]
        %v3801 = vld [vmem:[%s3715 + $0x2a8] sm:$0xff]
        %v3802 = vld [vmem:[%s3715 + $0x2b0] sm:$0xff]
        %v3803 = vld [vmem:[%s3715 + $0x2b8] sm:$0xff]
        %v3804 = vld [vmem:[%s3715 + $0x2c0] sm:$0xff]
        %v3805 = vld [vmem:[%s3715 + $0x2c8] sm:$0xff]
        %v3806 = vld [vmem:[%s3715 + $0x2d0] sm:$0xff]
        %v3807 = vld [vmem:[%s3715 + $0x2d8] sm:$0xff]
        %v3808 = vld [vmem:[%s3715 + $0x2e0] sm:$0xff]
        %v3809 = vld [vmem:[%s3715 + $0x2e8] sm:$0xff]
        %v3810 = vld [vmem:[%s3715 + $0x2f0] sm:$0xff]
        %v3811 = vld [vmem:[%s3715 + $0x2f8] sm:$0xff]
        %v3812 = vld [vmem:[%s3715 + $0x300] sm:$0xff]
        %v3813 = vld [vmem:[%s3715 + $0x308] sm:$0xff]
        %v3814 = vld [vmem:[%s3715 + $0x310] sm:$0xff]
        %v3815 = vld [vmem:[%s3715 + $0x318] sm:$0xff]
        %v3816 = vld [vmem:[%s3715 + $0x320] sm:$0xff]
        %v3817 = vld [vmem:[%s3715 + $0x328] sm:$0xff]
        %v3818 = vld [vmem:[%s3715 + $0x330] sm:$0xff]
        %v3819 = vld [vmem:[%s3715 + $0x338] sm:$0xff]
        %v3820 = vld [vmem:[%s3715 + $0x340] sm:$0xff]
        %v3821 = vld [vmem:[%s3715 + $0x348] sm:$0xff]
        %v3822 = vld [vmem:[%s3715 + $0x350] sm:$0xff]
        %v3823 = vld [vmem:[%s3715 + $0x358] sm:$0xff]
        %v3824 = vld [vmem:[%s3715 + $0x360] sm:$0xff]
        %v3825 = vld [vmem:[%s3715 + $0x368] sm:$0xff]
        %v3826 = vld [vmem:[%s3715 + $0x370] sm:$0xff]
        %v3827 = vld [vmem:[%s3715 + $0x378] sm:$0xff]
        %v3828 = vld [vmem:[%s3715 + $0x380] sm:$0xff]
        %v3829 = vld [vmem:[%s3715 + $0x388] sm:$0xff]
        %v3830 = vld [vmem:[%s3715 + $0x390] sm:$0xff]
        %v3831 = vld [vmem:[%s3715 + $0x398] sm:$0xff]
        %v3832 = vld [vmem:[%s3715 + $0x3a0] sm:$0xff]
        %v3833 = vld [vmem:[%s3715 + $0x3a8] sm:$0xff]
        %v3834 = vld [vmem:[%s3715 + $0x3b0] sm:$0xff]
        %v3835 = vld [vmem:[%s3715 + $0x3b8] sm:$0xff]
        %v3836 = vld [vmem:[%s3715 + $0x3c0] sm:$0xff]
        %v3837 = vld [vmem:[%s3715 + $0x3c8] sm:$0xff]
        %v3838 = vld [vmem:[%s3715 + $0x3d0] sm:$0xff]
        %v3839 = vld [vmem:[%s3715 + $0x3d8] sm:$0xff]
        %v3840 = vld [vmem:[%s3715 + $0x3e0] sm:$0xff]
        %v3841 = vld [vmem:[%s3715 + $0x3e8] sm:$0xff]
        %v3842 = vld [vmem:[%s3715 + $0x3f0] sm:$0xff]
        %v3843 = vld [vmem:[%s3715 + $0x3f8] sm:$0xff]
        %v3844 = vld [vmem:[%s3715 + $0x400] sm:$0xff]
        %v3845 = vld [vmem:[%s3715 + $0x408] sm:$0xff]
        %v3846 = vld [vmem:[%s3715 + $0x410] sm:$0xff]
        %v3847 = vld [vmem:[%s3715 + $0x418] sm:$0xff]
        %v3848 = vld [vmem:[%s3715 + $0x420] sm:$0xff]
        %v3849 = vld [vmem:[%s3715 + $0x428] sm:$0xff]
        %v3850 = vld [vmem:[%s3715 + $0x430] sm:$0xff]
        %v3851 = vld [vmem:[%s3715 + $0x438] sm:$0xff]
        %v3852 = vld [vmem:[%s3715 + $0x440] sm:$0xff]
        %v3853 = vld [vmem:[%s3715 + $0x448] sm:$0xff]
        %v3854 = vld [vmem:[%s3715 + $0x450] sm:$0xff]
        %v3855 = vld [vmem:[%s3715 + $0x458] sm:$0xff]
        %v3856 = vld [vmem:[%s3715 + $0x460] sm:$0xff]
        %v3857 = vld [vmem:[%s3715 + $0x468] sm:$0xff]
        %v3858 = vld [vmem:[%s3715 + $0x470] sm:$0xff]
        %v3859 = vld [vmem:[%s3715 + $0x478] sm:$0xff]
        %v3860 = vld [vmem:[%s3715 + $0x480] sm:$0xff]
        %v3861 = vld [vmem:[%s3715 + $0x488] sm:$0xff]
        %v3862 = vld [vmem:[%s3715 + $0x490] sm:$0xff]
        %v3863 = vld [vmem:[%s3715 + $0x498] sm:$0xff]
        %v3864 = vld [vmem:[%s3715 + $0x4a0] sm:$0xff]
        %v3865 = vld [vmem:[%s3715 + $0x4a8] sm:$0xff]
        %v3866 = vld [vmem:[%s3715 + $0x4b0] sm:$0xff]
        %v3867 = vld [vmem:[%s3715 + $0x4b8] sm:$0xff]
        %v3868 = vld [vmem:[%s3715 + $0x4c0] sm:$0xff]
        %v3869 = vld [vmem:[%s3715 + $0x4c8] sm:$0xff]
        %v3870 = vld [vmem:[%s3715 + $0x4d0] sm:$0xff]
        %v3871 = vld [vmem:[%s3715 + $0x4d8] sm:$0xff]
        %v3872 = vld [vmem:[%s3715 + $0x4e0] sm:$0xff]
        %v3873 = vld [vmem:[%s3715 + $0x4e8] sm:$0xff]
        %v3874 = vld [vmem:[%s3715 + $0x4f0] sm:$0xff]
        %v3875 = vld [vmem:[%s3715 + $0x4f8] sm:$0xff]
        %v3876 = vld [vmem:[%s3715 + $0x500] sm:$0xff]
        %v3877 = vld [vmem:[%s3715 + $0x508] sm:$0xff]
        %v3878 = vld [vmem:[%s3715 + $0x510] sm:$0xff]
        %v3879 = vld [vmem:[%s3715 + $0x518] sm:$0xff]
        %v3880 = vld [vmem:[%s3715 + $0x520] sm:$0xff]
        %v3881 = vld [vmem:[%s3715 + $0x528] sm:$0xff]
        %v3882 = vld [vmem:[%s3715 + $0x530] sm:$0xff]
        %v3883 = vld [vmem:[%s3715 + $0x538] sm:$0xff]
        %v3884 = vld [vmem:[%s3715 + $0x540] sm:$0xff]
        %v3885 = vld [vmem:[%s3715 + $0x548] sm:$0xff]
        %v3886 = vld [vmem:[%s3715 + $0x550] sm:$0xff]
        %v3887 = vld [vmem:[%s3715 + $0x558] sm:$0xff]
        %v3888 = vld [vmem:[%s3715 + $0x560] sm:$0xff]
        %v3889 = vld [vmem:[%s3715 + $0x568] sm:$0xff]
        %v3890 = vld [vmem:[%s3715 + $0x570] sm:$0xff]
        %v3891 = vld [vmem:[%s3715 + $0x578] sm:$0xff]
        %v3892 = vld [vmem:[%s3715 + $0x580] sm:$0xff]
        %v3893 = vld [vmem:[%s3715 + $0x588] sm:$0xff]
        %v3894 = vld [vmem:[%s3715 + $0x590] sm:$0xff]
        %v3895 = vld [vmem:[%s3715 + $0x598] sm:$0xff]
        %v3896 = vld [vmem:[%s3715 + $0x5a0] sm:$0xff]
        %v3897 = vld [vmem:[%s3715 + $0x5a8] sm:$0xff]
        %v3898 = vld [vmem:[%s3715 + $0x5b0] sm:$0xff]
        %v3899 = vld [vmem:[%s3715 + $0x5b8] sm:$0xff]
        %v3900 = vld [vmem:[%s3715 + $0x5c0] sm:$0xff]
        %v3901 = vld [vmem:[%s3715 + $0x5c8] sm:$0xff]
        %v3902 = vld [vmem:[%s3715 + $0x5d0] sm:$0xff]
        %v3903 = vld [vmem:[%s3715 + $0x5d8] sm:$0xff]
        %v3904 = vld [vmem:[%s3715 + $0x5e0] sm:$0xff]
        %v3905 = vld [vmem:[%s3715 + $0x5e8] sm:$0xff]
        %v3906 = vld [vmem:[%s3715 + $0x5f0] sm:$0xff]
        %v3907 = vld [vmem:[%s3715 + $0x5f8] sm:$0xff]
        %v3908 = vld [vmem:[%s3715 + $0x600] sm:$0xff]
        %v3909 = vld [vmem:[%s3715 + $0x608] sm:$0xff]
        %v3910 = vld [vmem:[%s3715 + $0x610] sm:$0xff]
        %v3911 = vld [vmem:[%s3715 + $0x618] sm:$0xff]
        %v3912 = vld [vmem:[%s3715 + $0x620] sm:$0xff]
        %v3913 = vld [vmem:[%s3715 + $0x628] sm:$0xff]
        %v3914 = vld [vmem:[%s3715 + $0x630] sm:$0xff]
        %v3915 = vld [vmem:[%s3715 + $0x638] sm:$0xff]
        %v3916 = vld [vmem:[%s3715 + $0x640] sm:$0xff]
        %v3917 = vld [vmem:[%s3715 + $0x648] sm:$0xff]
        %v3918 = vld [vmem:[%s3715 + $0x650] sm:$0xff]
        %v3919 = vld [vmem:[%s3715 + $0x658] sm:$0xff]
        %v3920 = vld [vmem:[%s3715 + $0x660] sm:$0xff]
        %v3921 = vld [vmem:[%s3715 + $0x668] sm:$0xff]
        %v3922 = vld [vmem:[%s3715 + $0x670] sm:$0xff]
        %v3923 = vld [vmem:[%s3715 + $0x678] sm:$0xff]
        %v3924 = vld [vmem:[%s3715 + $0x680] sm:$0xff]
        %v3925 = vld [vmem:[%s3715 + $0x688] sm:$0xff]
        %v3926 = vld [vmem:[%s3715 + $0x690] sm:$0xff]
        %v3927 = vld [vmem:[%s3715 + $0x698] sm:$0xff]
        %v3928 = vld [vmem:[%s3715 + $0x6a0] sm:$0xff]
        %v3929 = vld [vmem:[%s3715 + $0x6a8] sm:$0xff]
        %v3930 = vld [vmem:[%s3715 + $0x6b0] sm:$0xff]
        %v3931 = vld [vmem:[%s3715 + $0x6b8] sm:$0xff]
        %v3932 = vld [vmem:[%s3715 + $0x6c0] sm:$0xff]
        %v3933 = vld [vmem:[%s3715 + $0x6c8] sm:$0xff]
        %v3934 = vld [vmem:[%s3715 + $0x6d0] sm:$0xff]
        %v3935 = vld [vmem:[%s3715 + $0x6d8] sm:$0xff]
        %v3936 = vld [vmem:[%s3715 + $0x6e0] sm:$0xff]
        %v3937 = vld [vmem:[%s3715 + $0x6e8] sm:$0xff]
        %v3938 = vld [vmem:[%s3715 + $0x6f0] sm:$0xff]
        %v3939 = vld [vmem:[%s3715 + $0x6f8] sm:$0xff]
        %v3940 = vld [vmem:[%s3715 + $0x700] sm:$0xff]
        %v3941 = vld [vmem:[%s3715 + $0x708] sm:$0xff]
        %v3942 = vld [vmem:[%s3715 + $0x710] sm:$0xff]
        %v3943 = vld [vmem:[%s3715 + $0x718] sm:$0xff]
        %v3944 = vld [vmem:[%s3715 + $0x720] sm:$0xff]
        %v3945 = vld [vmem:[%s3715 + $0x728] sm:$0xff]
        %v3946 = vld [vmem:[%s3715 + $0x730] sm:$0xff]
        %v3947 = vld [vmem:[%s3715 + $0x738] sm:$0xff]
        %v3948 = vld [vmem:[%s3715 + $0x740] sm:$0xff]
        %v3949 = vld [vmem:[%s3715 + $0x748] sm:$0xff]
        %v3950 = vld [vmem:[%s3715 + $0x750] sm:$0xff]
        %v3951 = vld [vmem:[%s3715 + $0x758] sm:$0xff]
        %v3952 = vld [vmem:[%s3715 + $0x760] sm:$0xff]
        %v3953 = vld [vmem:[%s3715 + $0x768] sm:$0xff]
        %v3954 = vld [vmem:[%s3715 + $0x770] sm:$0xff]
        %v3955 = vld [vmem:[%s3715 + $0x778] sm:$0xff]
        %v3956 = vld [vmem:[%s3715 + $0x780] sm:$0xff]
        %v3957 = vld [vmem:[%s3715 + $0x788] sm:$0xff]
        %v3958 = vld [vmem:[%s3715 + $0x790] sm:$0xff]
        %v3959 = vld [vmem:[%s3715 + $0x798] sm:$0xff]
        %v3960 = vld [vmem:[%s3715 + $0x7a0] sm:$0xff]
        %v3961 = vld [vmem:[%s3715 + $0x7a8] sm:$0xff]
        %v3962 = vld [vmem:[%s3715 + $0x7b0] sm:$0xff]
        %v3963 = vld [vmem:[%s3715 + $0x7b8] sm:$0xff]
        %v3964 = vld [vmem:[%s3715 + $0x7c0] sm:$0xff]
        %v3965 = vld [vmem:[%s3715 + $0x7c8] sm:$0xff]
        %v3966 = vld [vmem:[%s3715 + $0x7d0] sm:$0xff]
        %v3967 = vld [vmem:[%s3715 + $0x7d8] sm:$0xff]
        %v3968 = vld [vmem:[%s3715 + $0x7e0] sm:$0xff]
        %v3969 = vld [vmem:[%s3715 + $0x7e8] sm:$0xff]
        %v3970 = vld [vmem:[%s3715 + $0x7f0] sm:$0xff]
        %v3971 = vld [vmem:[%s3715 + $0x7f8] sm:$0xff]
        %v3972 = vld [vmem:[%s3715 + $0x800] sm:$0xff]
        %v3973 = vld [vmem:[%s3715 + $0x808] sm:$0xff]
        %v3974 = vld [vmem:[%s3715 + $0x810] sm:$0xff]
        %v3975 = vld [vmem:[%s3715 + $0x818] sm:$0xff]
        %v3976 = vld [vmem:[%s3715 + $0x820] sm:$0xff]
        %v3977 = vld [vmem:[%s3715 + $0x828] sm:$0xff]
        %v3978 = vld [vmem:[%s3715 + $0x830] sm:$0xff]
        %v3979 = vld [vmem:[%s3715 + $0x838] sm:$0xff]
        %v3980 = vld [vmem:[%s3715 + $0x840] sm:$0xff]
        %v3981 = vld [vmem:[%s3715 + $0x848] sm:$0xff]
        %v3982 = vld [vmem:[%s3715 + $0x850] sm:$0xff]
        %v3983 = vld [vmem:[%s3715 + $0x858] sm:$0xff]
        %v3984 = vld [vmem:[%s3715 + $0x860] sm:$0xff]
        %v3985 = vld [vmem:[%s3715 + $0x868] sm:$0xff]
        %v3986 = vld [vmem:[%s3715 + $0x870] sm:$0xff]
        %v3987 = vld [vmem:[%s3715 + $0x878] sm:$0xff]
        %v3988 = vld [vmem:[%s3715 + $0x880] sm:$0xff]
        %v3989 = vld [vmem:[%s3715 + $0x888] sm:$0xff]
        %v3990 = vld [vmem:[%s3715 + $0x890] sm:$0xff]
        %v3991 = vld [vmem:[%s3715 + $0x898] sm:$0xff]
        %v3992 = vld [vmem:[%s3715 + $0x8a0] sm:$0xff]
        %v3993 = vld [vmem:[%s3715 + $0x8a8] sm:$0xff]
        %v3994 = vld [vmem:[%s3715 + $0x8b0] sm:$0xff]
        %v3995 = vld [vmem:[%s3715 + $0x8b8] sm:$0xff]
        %v3996 = vld [vmem:[%s3715 + $0x8c0] sm:$0xff]
        %v3997 = vld [vmem:[%s3715 + $0x8c8] sm:$0xff]
        %v3998 = vld [vmem:[%s3715 + $0x8d0] sm:$0xff]
        %v3999 = vld [vmem:[%s3715 + $0x8d8] sm:$0xff]
        %v4000 = vld [vmem:[%s3715 + $0x8e0] sm:$0xff]
        %v4001 = vld [vmem:[%s3715 + $0x8e8] sm:$0xff]
        %v4002 = vld [vmem:[%s3715 + $0x8f0] sm:$0xff]
        %v4003 = vld [vmem:[%s3715 + $0x8f8] sm:$0xff]
        %v4004 = vld [vmem:[%s3715 + $0x900] sm:$0xff]
        %v4005 = vld [vmem:[%s3715 + $0x908] sm:$0xff]
        %v4006 = vld [vmem:[%s3715 + $0x910] sm:$0xff]
        %v4007 = vld [vmem:[%s3715 + $0x918] sm:$0xff]
        %v4008 = vld [vmem:[%s3715 + $0x920] sm:$0xff]
        %v4009 = vld [vmem:[%s3715 + $0x928] sm:$0xff]
        %v4010 = vld [vmem:[%s3715 + $0x930] sm:$0xff]
        %v4011 = vld [vmem:[%s3715 + $0x938] sm:$0xff]
        %v4012 = vld [vmem:[%s3715 + $0x940] sm:$0xff]
        %v4013 = vld [vmem:[%s3715 + $0x948] sm:$0xff]
        %v4014 = vld [vmem:[%s3715 + $0x950] sm:$0xff]
        %v4015 = vld [vmem:[%s3715 + $0x958] sm:$0xff]
        %v4016 = vld [vmem:[%s3715 + $0x960] sm:$0xff]
        %v4017 = vld [vmem:[%s3715 + $0x968] sm:$0xff]
        %v4018 = vld [vmem:[%s3715 + $0x970] sm:$0xff]
        %v4019 = vld [vmem:[%s3715 + $0x978] sm:$0xff]
        %v4020 = vld [vmem:[%s3715 + $0x980] sm:$0xff]
        %v4021 = vld [vmem:[%s3715 + $0x988] sm:$0xff]
        %v4022 = vld [vmem:[%s3715 + $0x990] sm:$0xff]
        %v4023 = vld [vmem:[%s3715 + $0x998] sm:$0xff]
        %v4024 = vld [vmem:[%s3715 + $0x9a0] sm:$0xff]
        %v4025 = vld [vmem:[%s3715 + $0x9a8] sm:$0xff]
        %v4026 = vld [vmem:[%s3715 + $0x9b0] sm:$0xff]
        %v4027 = vld [vmem:[%s3715 + $0x9b8] sm:$0xff]
        %v4028 = vld [vmem:[%s3715 + $0x9c0] sm:$0xff]
        %v4029 = vld [vmem:[%s3715 + $0x9c8] sm:$0xff]
        %v4030 = vld [vmem:[%s3715 + $0x9d0] sm:$0xff]
        %v4031 = vld [vmem:[%s3715 + $0x9d8] sm:$0xff]
        %v4032 = vld [vmem:[%s3715 + $0x9e0] sm:$0xff]
        %v4033 = vld [vmem:[%s3715 + $0x9e8] sm:$0xff]
        %v4034 = vld [vmem:[%s3715 + $0x9f0] sm:$0xff]
        %v4035 = vld [vmem:[%s3715 + $0x9f8] sm:$0xff]
        %v4036 = vld [vmem:[%s3715 + $0xa00] sm:$0xff]
        %v4037 = vld [vmem:[%s3715 + $0xa08] sm:$0xff]
        %v4038 = vld [vmem:[%s3715 + $0xa10] sm:$0xff]
        %v4039 = vld [vmem:[%s3715 + $0xa18] sm:$0xff]
        %v4040 = vld [vmem:[%s3715 + $0xa20] sm:$0xff]
        %v4041 = vld [vmem:[%s3715 + $0xa28] sm:$0xff]
        %v4042 = vld [vmem:[%s3715 + $0xa30] sm:$0xff]
        %v4043 = vld [vmem:[%s3715 + $0xa38] sm:$0xff]
        %v4044 = vld [vmem:[%s3715 + $0xa40] sm:$0xff]
        %v4045 = vld [vmem:[%s3715 + $0xa48] sm:$0xff]
        %v4046 = vld [vmem:[%s3715 + $0xa50] sm:$0xff]
        %v4047 = vld [vmem:[%s3715 + $0xa58] sm:$0xff]
        %v4048 = vld [vmem:[%s3715 + $0xa60] sm:$0xff]
        %v4049 = vld [vmem:[%s3715 + $0xa68] sm:$0xff]
        %v4050 = vld [vmem:[%s3715 + $0xa70] sm:$0xff]
        %v4051 = vld [vmem:[%s3715 + $0xa78] sm:$0xff]
        %v4052 = vld [vmem:[%s3715 + $0xa80] sm:$0xff]
        %v4053 = vld [vmem:[%s3715 + $0xa88] sm:$0xff]
        %v4054 = vld [vmem:[%s3715 + $0xa90] sm:$0xff]
        %v4055 = vld [vmem:[%s3715 + $0xa98] sm:$0xff]
        %v4056 = vld [vmem:[%s3715 + $0xaa0] sm:$0xff]
        %v4057 = vld [vmem:[%s3715 + $0xaa8] sm:$0xff]
        %v4058 = vld [vmem:[%s3715 + $0xab0] sm:$0xff]
        %v4059 = vld [vmem:[%s3715 + $0xab8] sm:$0xff]
        %v4060 = vld [vmem:[%s3715 + $0xac0] sm:$0xff]
        %v4061 = vld [vmem:[%s3715 + $0xac8] sm:$0xff]
        %v4062 = vld [vmem:[%s3715 + $0xad0] sm:$0xff]
        %v4063 = vld [vmem:[%s3715 + $0xad8] sm:$0xff]
        %v4064 = vld [vmem:[%s3715 + $0xae0] sm:$0xff]
        %v4065 = vld [vmem:[%s3715 + $0xae8] sm:$0xff]
        %v4066 = vld [vmem:[%s3715 + $0xaf0] sm:$0xff]
        %v4067 = vld [vmem:[%s3715 + $0xaf8] sm:$0xff]
        %v4068 = vld [vmem:[%s3715 + $0xb00] sm:$0xff]
        %v4069 = vld [vmem:[%s3715 + $0xb08] sm:$0xff]
        %v4070 = vld [vmem:[%s3715 + $0xb10] sm:$0xff]
        %v4071 = vld [vmem:[%s3715 + $0xb18] sm:$0xff]
        %v4072 = vld [vmem:[%s3715 + $0xb20] sm:$0xff]
        %v4073 = vld [vmem:[%s3715 + $0xb28] sm:$0xff]
        %v4074 = vld [vmem:[%s3715 + $0xb30] sm:$0xff]
        %v4075 = vld [vmem:[%s3715 + $0xb38] sm:$0xff]
        %v4076 = vld [vmem:[%s3715 + $0xb40] sm:$0xff]
        %v4077 = vld [vmem:[%s3715 + $0xb48] sm:$0xff]
        %v4078 = vld [vmem:[%s3715 + $0xb50] sm:$0xff]
        %v4079 = vld [vmem:[%s3715 + $0xb58] sm:$0xff]
        %v4080 = vld [vmem:[%s3715 + $0xb60] sm:$0xff]
        %v4081 = vld [vmem:[%s3715 + $0xb68] sm:$0xff]
        %v4082 = vld [vmem:[%s3715 + $0xb70] sm:$0xff]
        %v4083 = vld [vmem:[%s3715 + $0xb78] sm:$0xff]
        %v4084 = vld [vmem:[%s3715 + $0xb80] sm:$0xff]
        %v4085 = vld [vmem:[%s3715 + $0xb88] sm:$0xff]
        %v4086 = vld [vmem:[%s3715 + $0xb90] sm:$0xff]
        %v4087 = vld [vmem:[%s3715 + $0xb98] sm:$0xff]
        %v4088 = vld [vmem:[%s3715 + $0xba0] sm:$0xff]
        %v4089 = vld [vmem:[%s3715 + $0xba8] sm:$0xff]
        %v4090 = vld [vmem:[%s3715 + $0xbb0] sm:$0xff]
        %v4091 = vld [vmem:[%s3715 + $0xbb8] sm:$0xff]
        %v4092 = vld [vmem:[%s3715 + $0xbc0] sm:$0xff]
        %v4093 = vld [vmem:[%s3715 + $0xbc8] sm:$0xff]
        %v4094 = vld [vmem:[%s3715 + $0xbd0] sm:$0xff]
        %v4095 = vld [vmem:[%s3715 + $0xbd8] sm:$0xff]
        %v4096 = vld [vmem:[%s3715 + $0xbe0] sm:$0xff]
        %v4097 = vld [vmem:[%s3715 + $0xbe8] sm:$0xff]
        %v4098 = vld [vmem:[%s3715 + $0xbf0] sm:$0xff]
        %v4099 = vld [vmem:[%s3715 + $0xbf8] sm:$0xff]
        %v4100 = vld [vmem:[%s3715 + $0xc00] sm:$0xff]
        %v4101 = vld [vmem:[%s3715 + $0xc08] sm:$0xff]
        %v4102 = vld [vmem:[%s3715 + $0xc10] sm:$0xff]
        %v4103 = vld [vmem:[%s3715 + $0xc18] sm:$0xff]
        %v4104 = vld [vmem:[%s3715 + $0xc20] sm:$0xff]
        %v4105 = vld [vmem:[%s3715 + $0xc28] sm:$0xff]
        %v4106 = vld [vmem:[%s3715 + $0xc30] sm:$0xff]
        %v4107 = vld [vmem:[%s3715 + $0xc38] sm:$0xff]
        %v4108 = vld [vmem:[%s3715 + $0xc40] sm:$0xff]
        %v4109 = vld [vmem:[%s3715 + $0xc48] sm:$0xff]
        %v4110 = vld [vmem:[%s3715 + $0xc50] sm:$0xff]
        %v4111 = vld [vmem:[%s3715 + $0xc58] sm:$0xff]
        %v4112 = vld [vmem:[%s3715 + $0xc60] sm:$0xff]
        %v4113 = vld [vmem:[%s3715 + $0xc68] sm:$0xff]
        %v4114 = vld [vmem:[%s3715 + $0xc70] sm:$0xff]
        %v4115 = vld [vmem:[%s3715 + $0xc78] sm:$0xff]
        %v4116 = vld [vmem:[%s3715 + $0xc80] sm:$0xff]
        %v4117 = vld [vmem:[%s3715 + $0xc88] sm:$0xff]
        %v4118 = vld [vmem:[%s3715 + $0xc90] sm:$0xff]
        %v4119 = vld [vmem:[%s3715 + $0xc98] sm:$0xff]
        %v4120 = vld [vmem:[%s3715 + $0xca0] sm:$0xff]
        %v4121 = vld [vmem:[%s3715 + $0xca8] sm:$0xff]
        %v4122 = vld [vmem:[%s3715 + $0xcb0] sm:$0xff]
        %v4123 = vld [vmem:[%s3715 + $0xcb8] sm:$0xff]
        %v4124 = vld [vmem:[%s3715 + $0xcc0] sm:$0xff]
        %v4125 = vld [vmem:[%s3715 + $0xcc8] sm:$0xff]
        %v4126 = vld [vmem:[%s3715 + $0xcd0] sm:$0xff]
        %v4127 = vld [vmem:[%s3715 + $0xcd8] sm:$0xff]
        %v4128 = vld [vmem:[%s3715 + $0xce0] sm:$0xff]
        %v4129 = vld [vmem:[%s3715 + $0xce8] sm:$0xff]
        %v4130 = vld [vmem:[%s3715 + $0xcf0] sm:$0xff]
        %v4131 = vld [vmem:[%s3715 + $0xcf8] sm:$0xff]
        %v4132 = vld [vmem:[%s3715 + $0xd00] sm:$0xff]
        %v4133 = vld [vmem:[%s3715 + $0xd08] sm:$0xff]
        %v4134 = vld [vmem:[%s3715 + $0xd10] sm:$0xff]
        %v4135 = vld [vmem:[%s3715 + $0xd18] sm:$0xff]
        %v4136 = vld [vmem:[%s3715 + $0xd20] sm:$0xff]
        %v4137 = vld [vmem:[%s3715 + $0xd28] sm:$0xff]
        %v4138 = vld [vmem:[%s3715 + $0xd30] sm:$0xff]
        %v4139 = vld [vmem:[%s3715 + $0xd38] sm:$0xff]
        %v4140 = vld [vmem:[%s3715 + $0xd40] sm:$0xff]
        %v4141 = vld [vmem:[%s3715 + $0xd48] sm:$0xff]
        %v4142 = vld [vmem:[%s3715 + $0xd50] sm:$0xff]
        %v4143 = vld [vmem:[%s3715 + $0xd58] sm:$0xff]
        %v4144 = vld [vmem:[%s3715 + $0xd60] sm:$0xff]
        %v4145 = vld [vmem:[%s3715 + $0xd68] sm:$0xff]
        %v4146 = vld [vmem:[%s3715 + $0xd70] sm:$0xff]
        %v4147 = vld [vmem:[%s3715 + $0xd78] sm:$0xff]
        %v4148 = vld [vmem:[%s3715 + $0xd80] sm:$0xff]
        %v4149 = vld [vmem:[%s3715 + $0xd88] sm:$0xff]
        %v4150 = vld [vmem:[%s3715 + $0xd90] sm:$0xff]
        %v4151 = vld [vmem:[%s3715 + $0xd98] sm:$0xff]
        %v4152 = vld [vmem:[%s3715 + $0xda0] sm:$0xff]
        %v4153 = vld [vmem:[%s3715 + $0xda8] sm:$0xff]
        %v4154 = vld [vmem:[%s3715 + $0xdb0] sm:$0xff]
        %v4155 = vld [vmem:[%s3715 + $0xdb8] sm:$0xff]
        %v4156 = vld [vmem:[%s3715 + $0xdc0] sm:$0xff]
        %v4157 = vld [vmem:[%s3715 + $0xdc8] sm:$0xff]
        %v4158 = vld [vmem:[%s3715 + $0xdd0] sm:$0xff]
        %v4159 = vld [vmem:[%s3715 + $0xdd8] sm:$0xff]
        %v4160 = vld [vmem:[%s3715 + $0xde0] sm:$0xff]
        %v4161 = vld [vmem:[%s3715 + $0xde8] sm:$0xff]
        %v4162 = vld [vmem:[%s3715 + $0xdf0] sm:$0xff]
        %v4163 = vld [vmem:[%s3715 + $0xdf8] sm:$0xff]
        %v4164 = vld [vmem:[%s3715 + $0xe00] sm:$0xff]
        %v4165 = vld [vmem:[%s3715 + $0xe08] sm:$0xff]
        %v4166 = vld [vmem:[%s3715 + $0xe10] sm:$0xff]
        %v4167 = vld [vmem:[%s3715 + $0xe18] sm:$0xff]
        %v4168 = vld [vmem:[%s3715 + $0xe20] sm:$0xff]
        %v4169 = vld [vmem:[%s3715 + $0xe28] sm:$0xff]
        %v4170 = vld [vmem:[%s3715 + $0xe30] sm:$0xff]
        %v4171 = vld [vmem:[%s3715 + $0xe38] sm:$0xff]
        %v4172 = vld [vmem:[%s3715 + $0xe40] sm:$0xff]
        %v4173 = vld [vmem:[%s3715 + $0xe48] sm:$0xff]
        %v4174 = vld [vmem:[%s3715 + $0xe50] sm:$0xff]
        %v4175 = vld [vmem:[%s3715 + $0xe58] sm:$0xff]
        %v4176 = vld [vmem:[%s3715 + $0xe60] sm:$0xff]
        %v4177 = vld [vmem:[%s3715 + $0xe68] sm:$0xff]
        %v4178 = vld [vmem:[%s3715 + $0xe70] sm:$0xff]
        %v4179 = vld [vmem:[%s3715 + $0xe78] sm:$0xff]
        %v4180 = vld [vmem:[%s3715 + $0xe80] sm:$0xff]
        %v4181 = vld [vmem:[%s3715 + $0xe88] sm:$0xff]
        %v4182 = vld [vmem:[%s3715 + $0xe90] sm:$0xff]
        %v4183 = vld [vmem:[%s3715 + $0xe98] sm:$0xff]
        %v4184 = vld [vmem:[%s3715 + $0xea0] sm:$0xff]
        %v4185 = vld [vmem:[%s3715 + $0xea8] sm:$0xff]
        %v4186 = vld [vmem:[%s3715 + $0xeb0] sm:$0xff]
        %v4187 = vld [vmem:[%s3715 + $0xeb8] sm:$0xff]
        %v4188 = vld [vmem:[%s3715 + $0xec0] sm:$0xff]
        %v4189 = vld [vmem:[%s3715 + $0xec8] sm:$0xff]
        %v4190 = vld [vmem:[%s3715 + $0xed0] sm:$0xff]
        %v4191 = vld [vmem:[%s3715 + $0xed8] sm:$0xff]
        %v4192 = vld [vmem:[%s3715 + $0xee0] sm:$0xff]
        %v4193 = vld [vmem:[%s3715 + $0xee8] sm:$0xff]
        %v4194 = vld [vmem:[%s3715 + $0xef0] sm:$0xff]
        %v4195 = vld [vmem:[%s3715 + $0xef8] sm:$0xff]
        %v4196 = vld [vmem:[%s3715 + $0xf00] sm:$0xff]
        %v4197 = vld [vmem:[%s3715 + $0xf08] sm:$0xff]
        %v4198 = vld [vmem:[%s3715 + $0xf10] sm:$0xff]
        %v4199 = vld [vmem:[%s3715 + $0xf18] sm:$0xff]
        %v4200 = vld [vmem:[%s3715 + $0xf20] sm:$0xff]
        %v4201 = vld [vmem:[%s3715 + $0xf28] sm:$0xff]
        %v4202 = vld [vmem:[%s3715 + $0xf30] sm:$0xff]
        %v4203 = vld [vmem:[%s3715 + $0xf38] sm:$0xff]
        %v4204 = vld [vmem:[%s3715 + $0xf40] sm:$0xff]
        %v4205 = vld [vmem:[%s3715 + $0xf48] sm:$0xff]
        %v4206 = vld [vmem:[%s3715 + $0xf50] sm:$0xff]
        %v4207 = vld [vmem:[%s3715 + $0xf58] sm:$0xff]
        %v4208 = vld [vmem:[%s3715 + $0xf60] sm:$0xff]
        %v4209 = vld [vmem:[%s3715 + $0xf68] sm:$0xff]
        %v4210 = vld [vmem:[%s3715 + $0xf70] sm:$0xff]
        %v4211 = vld [vmem:[%s3715 + $0xf78] sm:$0xff]
        %v4212 = vld [vmem:[%s3715 + $0xf80] sm:$0xff]
        %v4213 = vld [vmem:[%s3715 + $0xf88] sm:$0xff]
        %v4214 = vld [vmem:[%s3715 + $0xf90] sm:$0xff]
        %v4215 = vld [vmem:[%s3715 + $0xf98] sm:$0xff]
        %v4216 = vld [vmem:[%s3715 + $0xfa0] sm:$0xff]
        %v4217 = vld [vmem:[%s3715 + $0xfa8] sm:$0xff]
        %v4218 = vld [vmem:[%s3715 + $0xfb0] sm:$0xff]
        %v4219 = vld [vmem:[%s3715 + $0xfb8] sm:$0xff]
        %v4220 = vld [vmem:[%s3715 + $0xfc0] sm:$0xff]
        %v4221 = vld [vmem:[%s3715 + $0xfc8] sm:$0xff]
        %v4222 = vld [vmem:[%s3715 + $0xfd0] sm:$0xff]
        %v4223 = vld [vmem:[%s3715 + $0xfd8] sm:$0xff]
        %v4224 = vld [vmem:[%s3715 + $0xfe0] sm:$0xff]
        %v4225 = vld [vmem:[%s3715 + $0xfe8] sm:$0xff]
        %v4226 = vld [vmem:[%s3715 + $0xff0] sm:$0xff]
        %v4227 = vld [vmem:[%s3715 + $0xff8] sm:$0xff]
        %4228 = vmatpush.msra.mxu0 %v4196
        %4229 = vmatpush.msra.mxu0 %v4164
        %4230 = vmatpush.msra.mxu0 %v4132
        %4231 = vmatpush.msra.mxu0 %v4100
        %4232 = vmatpush.msra.mxu0 %v4068
        %4233 = vmatpush.msra.mxu0 %v4036
        %4234 = vmatpush.msra.mxu0 %v4004
        %4235 = vmatpush.msra.mxu0 %v3972
        %4236 = vmatpush.msra.mxu0 %v3940
        %4237 = vmatpush.msra.mxu0 %v3908
        %4238 = vmatpush.msra.mxu0 %v3876
        %4239 = vmatpush.msra.mxu0 %v3844
        %4240 = vmatpush.msra.mxu0 %v3812
        %4241 = vmatpush.msra.mxu0 %v3780
        %4242 = vmatpush.msra.mxu0 %v3748
        %4243 = vmatpush.msra.mxu0 %v3716
        %4244 = vmatmul.f32.gmra.mxu0 %v3714
        %v4245 = vpop.f32.mrf.mxu0
        %v4246 = vadd.f32 0.0, %v4245
        %4247 = vdwg.mxu0
        %4248 = vmatpush.msra.mxu0 %v4197
        %4249 = vmatpush.msra.mxu0 %v4165
        %4250 = vmatpush.msra.mxu0 %v4133
        %4251 = vmatpush.msra.mxu0 %v4101
        %4252 = vmatpush.msra.mxu0 %v4069
        %4253 = vmatpush.msra.mxu0 %v4037
        %4254 = vmatpush.msra.mxu0 %v4005
        %4255 = vmatpush.msra.mxu0 %v3973
        %4256 = vmatpush.msra.mxu0 %v3941
        %4257 = vmatpush.msra.mxu0 %v3909
        %4258 = vmatpush.msra.mxu0 %v3877
        %4259 = vmatpush.msra.mxu0 %v3845
        %4260 = vmatpush.msra.mxu0 %v3813
        %4261 = vmatpush.msra.mxu0 %v3781
        %4262 = vmatpush.msra.mxu0 %v3749
        %4263 = vmatpush.msra.mxu0 %v3717
        %4264 = vmatmul.f32.gmra.mxu0 %v3714
        %v4265 = vpop.f32.mrf.mxu0
        %v4266 = vadd.f32 0.0, %v4265
        %4267 = vdwg.mxu0
        %4268 = vmatpush.msra.mxu0 %v4198
        %4269 = vmatpush.msra.mxu0 %v4166
        %4270 = vmatpush.msra.mxu0 %v4134
        %4271 = vmatpush.msra.mxu0 %v4102
        %4272 = vmatpush.msra.mxu0 %v4070
        %4273 = vmatpush.msra.mxu0 %v4038
        %4274 = vmatpush.msra.mxu0 %v4006
        %4275 = vmatpush.msra.mxu0 %v3974
        %4276 = vmatpush.msra.mxu0 %v3942
        %4277 = vmatpush.msra.mxu0 %v3910
        %4278 = vmatpush.msra.mxu0 %v3878
        %4279 = vmatpush.msra.mxu0 %v3846
        %4280 = vmatpush.msra.mxu0 %v3814
        %4281 = vmatpush.msra.mxu0 %v3782
        %4282 = vmatpush.msra.mxu0 %v3750
        %4283 = vmatpush.msra.mxu0 %v3718
        %4284 = vmatmul.f32.gmra.mxu0 %v3714
        %v4285 = vpop.f32.mrf.mxu0
        %v4286 = vadd.f32 0.0, %v4285
        %4287 = vdwg.mxu0
        %4288 = vmatpush.msra.mxu0 %v4199
        %4289 = vmatpush.msra.mxu0 %v4167
        %4290 = vmatpush.msra.mxu0 %v4135
        %4291 = vmatpush.msra.mxu0 %v4103
        %4292 = vmatpush.msra.mxu0 %v4071
        %4293 = vmatpush.msra.mxu0 %v4039
        %4294 = vmatpush.msra.mxu0 %v4007
        %4295 = vmatpush.msra.mxu0 %v3975
        %4296 = vmatpush.msra.mxu0 %v3943
        %4297 = vmatpush.msra.mxu0 %v3911
        %4298 = vmatpush.msra.mxu0 %v3879
        %4299 = vmatpush.msra.mxu0 %v3847
        %4300 = vmatpush.msra.mxu0 %v3815
        %4301 = vmatpush.msra.mxu0 %v3783
        %4302 = vmatpush.msra.mxu0 %v3751
        %4303 = vmatpush.msra.mxu0 %v3719
        %4304 = vmatmul.f32.gmra.mxu0 %v3714
        %v4305 = vpop.f32.mrf.mxu0
        %v4306 = vadd.f32 0.0, %v4305
        %4307 = vdwg.mxu0
        %4308 = vmatpush.msra.mxu0 %v4200
        %4309 = vmatpush.msra.mxu0 %v4168
        %4310 = vmatpush.msra.mxu0 %v4136
        %4311 = vmatpush.msra.mxu0 %v4104
        %4312 = vmatpush.msra.mxu0 %v4072
        %4313 = vmatpush.msra.mxu0 %v4040
        %4314 = vmatpush.msra.mxu0 %v4008
        %4315 = vmatpush.msra.mxu0 %v3976
        %4316 = vmatpush.msra.mxu0 %v3944
        %4317 = vmatpush.msra.mxu0 %v3912
        %4318 = vmatpush.msra.mxu0 %v3880
        %4319 = vmatpush.msra.mxu0 %v3848
        %4320 = vmatpush.msra.mxu0 %v3816
        %4321 = vmatpush.msra.mxu0 %v3784
        %4322 = vmatpush.msra.mxu0 %v3752
        %4323 = vmatpush.msra.mxu0 %v3720
        %4324 = vmatmul.f32.gmra.mxu0 %v3714
        %v4325 = vpop.f32.mrf.mxu0
        %v4326 = vadd.f32 0.0, %v4325
        %4327 = vdwg.mxu0
        %4328 = vmatpush.msra.mxu0 %v4201
        %4329 = vmatpush.msra.mxu0 %v4169
        %4330 = vmatpush.msra.mxu0 %v4137
        %4331 = vmatpush.msra.mxu0 %v4105
        %4332 = vmatpush.msra.mxu0 %v4073
        %4333 = vmatpush.msra.mxu0 %v4041
        %4334 = vmatpush.msra.mxu0 %v4009
        %4335 = vmatpush.msra.mxu0 %v3977
        %4336 = vmatpush.msra.mxu0 %v3945
        %4337 = vmatpush.msra.mxu0 %v3913
        %4338 = vmatpush.msra.mxu0 %v3881
        %4339 = vmatpush.msra.mxu0 %v3849
        %4340 = vmatpush.msra.mxu0 %v3817
        %4341 = vmatpush.msra.mxu0 %v3785
        %4342 = vmatpush.msra.mxu0 %v3753
        %4343 = vmatpush.msra.mxu0 %v3721
        %4344 = vmatmul.f32.gmra.mxu0 %v3714
        %v4345 = vpop.f32.mrf.mxu0
        %v4346 = vadd.f32 0.0, %v4345
        %4347 = vdwg.mxu0
        %4348 = vmatpush.msra.mxu0 %v4202
        %4349 = vmatpush.msra.mxu0 %v4170
        %4350 = vmatpush.msra.mxu0 %v4138
        %4351 = vmatpush.msra.mxu0 %v4106
        %4352 = vmatpush.msra.mxu0 %v4074
        %4353 = vmatpush.msra.mxu0 %v4042
        %4354 = vmatpush.msra.mxu0 %v4010
        %4355 = vmatpush.msra.mxu0 %v3978
        %4356 = vmatpush.msra.mxu0 %v3946
        %4357 = vmatpush.msra.mxu0 %v3914
        %4358 = vmatpush.msra.mxu0 %v3882
        %4359 = vmatpush.msra.mxu0 %v3850
        %4360 = vmatpush.msra.mxu0 %v3818
        %4361 = vmatpush.msra.mxu0 %v3786
        %4362 = vmatpush.msra.mxu0 %v3754
        %4363 = vmatpush.msra.mxu0 %v3722
        %4364 = vmatmul.f32.gmra.mxu0 %v3714
        %v4365 = vpop.f32.mrf.mxu0
        %v4366 = vadd.f32 0.0, %v4365
        %4367 = vdwg.mxu0
        %4368 = vmatpush.msra.mxu0 %v4203
        %4369 = vmatpush.msra.mxu0 %v4171
        %4370 = vmatpush.msra.mxu0 %v4139
        %4371 = vmatpush.msra.mxu0 %v4107
        %4372 = vmatpush.msra.mxu0 %v4075
        %4373 = vmatpush.msra.mxu0 %v4043
        %4374 = vmatpush.msra.mxu0 %v4011
        %4375 = vmatpush.msra.mxu0 %v3979
        %4376 = vmatpush.msra.mxu0 %v3947
        %4377 = vmatpush.msra.mxu0 %v3915
        %4378 = vmatpush.msra.mxu0 %v3883
        %4379 = vmatpush.msra.mxu0 %v3851
        %4380 = vmatpush.msra.mxu0 %v3819
        %4381 = vmatpush.msra.mxu0 %v3787
        %4382 = vmatpush.msra.mxu0 %v3755
        %4383 = vmatpush.msra.mxu0 %v3723
        %4384 = vmatmul.f32.gmra.mxu0 %v3714
        %v4385 = vpop.f32.mrf.mxu0
        %v4386 = vadd.f32 0.0, %v4385
        %4387 = vdwg.mxu0
        %4388 = vmatpush.msra.mxu0 %v4204
        %4389 = vmatpush.msra.mxu0 %v4172
        %4390 = vmatpush.msra.mxu0 %v4140
        %4391 = vmatpush.msra.mxu0 %v4108
        %4392 = vmatpush.msra.mxu0 %v4076
        %4393 = vmatpush.msra.mxu0 %v4044
        %4394 = vmatpush.msra.mxu0 %v4012
        %4395 = vmatpush.msra.mxu0 %v3980
        %4396 = vmatpush.msra.mxu0 %v3948
        %4397 = vmatpush.msra.mxu0 %v3916
        %4398 = vmatpush.msra.mxu0 %v3884
        %4399 = vmatpush.msra.mxu0 %v3852
        %4400 = vmatpush.msra.mxu0 %v3820
        %4401 = vmatpush.msra.mxu0 %v3788
        %4402 = vmatpush.msra.mxu0 %v3756
        %4403 = vmatpush.msra.mxu0 %v3724
        %4404 = vmatmul.f32.gmra.mxu0 %v3714
        %v4405 = vpop.f32.mrf.mxu0
        %v4406 = vadd.f32 0.0, %v4405
        %4407 = vdwg.mxu0
        %4408 = vmatpush.msra.mxu0 %v4205
        %4409 = vmatpush.msra.mxu0 %v4173
        %4410 = vmatpush.msra.mxu0 %v4141
        %4411 = vmatpush.msra.mxu0 %v4109
        %4412 = vmatpush.msra.mxu0 %v4077
        %4413 = vmatpush.msra.mxu0 %v4045
        %4414 = vmatpush.msra.mxu0 %v4013
        %4415 = vmatpush.msra.mxu0 %v3981
        %4416 = vmatpush.msra.mxu0 %v3949
        %4417 = vmatpush.msra.mxu0 %v3917
        %4418 = vmatpush.msra.mxu0 %v3885
        %4419 = vmatpush.msra.mxu0 %v3853
        %4420 = vmatpush.msra.mxu0 %v3821
        %4421 = vmatpush.msra.mxu0 %v3789
        %4422 = vmatpush.msra.mxu0 %v3757
        %4423 = vmatpush.msra.mxu0 %v3725
        %4424 = vmatmul.f32.gmra.mxu0 %v3714
        %v4425 = vpop.f32.mrf.mxu0
        %v4426 = vadd.f32 0.0, %v4425
        %4427 = vdwg.mxu0
        %4428 = vmatpush.msra.mxu0 %v4206
        %4429 = vmatpush.msra.mxu0 %v4174
        %4430 = vmatpush.msra.mxu0 %v4142
        %4431 = vmatpush.msra.mxu0 %v4110
        %4432 = vmatpush.msra.mxu0 %v4078
        %4433 = vmatpush.msra.mxu0 %v4046
        %4434 = vmatpush.msra.mxu0 %v4014
        %4435 = vmatpush.msra.mxu0 %v3982
        %4436 = vmatpush.msra.mxu0 %v3950
        %4437 = vmatpush.msra.mxu0 %v3918
        %4438 = vmatpush.msra.mxu0 %v3886
        %4439 = vmatpush.msra.mxu0 %v3854
        %4440 = vmatpush.msra.mxu0 %v3822
        %4441 = vmatpush.msra.mxu0 %v3790
        %4442 = vmatpush.msra.mxu0 %v3758
        %4443 = vmatpush.msra.mxu0 %v3726
        %4444 = vmatmul.f32.gmra.mxu0 %v3714
        %v4445 = vpop.f32.mrf.mxu0
        %v4446 = vadd.f32 0.0, %v4445
        %4447 = vdwg.mxu0
        %4448 = vmatpush.msra.mxu0 %v4207
        %4449 = vmatpush.msra.mxu0 %v4175
        %4450 = vmatpush.msra.mxu0 %v4143
        %4451 = vmatpush.msra.mxu0 %v4111
        %4452 = vmatpush.msra.mxu0 %v4079
        %4453 = vmatpush.msra.mxu0 %v4047
        %4454 = vmatpush.msra.mxu0 %v4015
        %4455 = vmatpush.msra.mxu0 %v3983
        %4456 = vmatpush.msra.mxu0 %v3951
        %4457 = vmatpush.msra.mxu0 %v3919
        %4458 = vmatpush.msra.mxu0 %v3887
        %4459 = vmatpush.msra.mxu0 %v3855
        %4460 = vmatpush.msra.mxu0 %v3823
        %4461 = vmatpush.msra.mxu0 %v3791
        %4462 = vmatpush.msra.mxu0 %v3759
        %4463 = vmatpush.msra.mxu0 %v3727
        %4464 = vmatmul.f32.gmra.mxu0 %v3714
        %v4465 = vpop.f32.mrf.mxu0
        %v4466 = vadd.f32 0.0, %v4465
        %4467 = vdwg.mxu0
        %4468 = vmatpush.msra.mxu0 %v4208
        %4469 = vmatpush.msra.mxu0 %v4176
        %4470 = vmatpush.msra.mxu0 %v4144
        %4471 = vmatpush.msra.mxu0 %v4112
        %4472 = vmatpush.msra.mxu0 %v4080
        %4473 = vmatpush.msra.mxu0 %v4048
        %4474 = vmatpush.msra.mxu0 %v4016
        %4475 = vmatpush.msra.mxu0 %v3984
        %4476 = vmatpush.msra.mxu0 %v3952
        %4477 = vmatpush.msra.mxu0 %v3920
        %4478 = vmatpush.msra.mxu0 %v3888
        %4479 = vmatpush.msra.mxu0 %v3856
        %4480 = vmatpush.msra.mxu0 %v3824
        %4481 = vmatpush.msra.mxu0 %v3792
        %4482 = vmatpush.msra.mxu0 %v3760
        %4483 = vmatpush.msra.mxu0 %v3728
        %4484 = vmatmul.f32.gmra.mxu0 %v3714
        %v4485 = vpop.f32.mrf.mxu0
        %v4486 = vadd.f32 0.0, %v4485
        %4487 = vdwg.mxu0
        %4488 = vmatpush.msra.mxu0 %v4209
        %4489 = vmatpush.msra.mxu0 %v4177
        %4490 = vmatpush.msra.mxu0 %v4145
        %4491 = vmatpush.msra.mxu0 %v4113
        %4492 = vmatpush.msra.mxu0 %v4081
        %4493 = vmatpush.msra.mxu0 %v4049
        %4494 = vmatpush.msra.mxu0 %v4017
        %4495 = vmatpush.msra.mxu0 %v3985
        %4496 = vmatpush.msra.mxu0 %v3953
        %4497 = vmatpush.msra.mxu0 %v3921
        %4498 = vmatpush.msra.mxu0 %v3889
        %4499 = vmatpush.msra.mxu0 %v3857
        %4500 = vmatpush.msra.mxu0 %v3825
        %4501 = vmatpush.msra.mxu0 %v3793
        %4502 = vmatpush.msra.mxu0 %v3761
        %4503 = vmatpush.msra.mxu0 %v3729
        %4504 = vmatmul.f32.gmra.mxu0 %v3714
        %v4505 = vpop.f32.mrf.mxu0
        %v4506 = vadd.f32 0.0, %v4505
        %4507 = vdwg.mxu0
        %4508 = vmatpush.msra.mxu0 %v4210
        %4509 = vmatpush.msra.mxu0 %v4178
        %4510 = vmatpush.msra.mxu0 %v4146
        %4511 = vmatpush.msra.mxu0 %v4114
        %4512 = vmatpush.msra.mxu0 %v4082
        %4513 = vmatpush.msra.mxu0 %v4050
        %4514 = vmatpush.msra.mxu0 %v4018
        %4515 = vmatpush.msra.mxu0 %v3986
        %4516 = vmatpush.msra.mxu0 %v3954
        %4517 = vmatpush.msra.mxu0 %v3922
        %4518 = vmatpush.msra.mxu0 %v3890
        %4519 = vmatpush.msra.mxu0 %v3858
        %4520 = vmatpush.msra.mxu0 %v3826
        %4521 = vmatpush.msra.mxu0 %v3794
        %4522 = vmatpush.msra.mxu0 %v3762
        %4523 = vmatpush.msra.mxu0 %v3730
        %4524 = vmatmul.f32.gmra.mxu0 %v3714
        %v4525 = vpop.f32.mrf.mxu0
        %v4526 = vadd.f32 0.0, %v4525
        %4527 = vdwg.mxu0
        %4528 = vmatpush.msra.mxu0 %v4211
        %4529 = vmatpush.msra.mxu0 %v4179
        %4530 = vmatpush.msra.mxu0 %v4147
        %4531 = vmatpush.msra.mxu0 %v4115
        %4532 = vmatpush.msra.mxu0 %v4083
        %4533 = vmatpush.msra.mxu0 %v4051
        %4534 = vmatpush.msra.mxu0 %v4019
        %4535 = vmatpush.msra.mxu0 %v3987
        %4536 = vmatpush.msra.mxu0 %v3955
        %4537 = vmatpush.msra.mxu0 %v3923
        %4538 = vmatpush.msra.mxu0 %v3891
        %4539 = vmatpush.msra.mxu0 %v3859
        %4540 = vmatpush.msra.mxu0 %v3827
        %4541 = vmatpush.msra.mxu0 %v3795
        %4542 = vmatpush.msra.mxu0 %v3763
        %4543 = vmatpush.msra.mxu0 %v3731
        %4544 = vmatmul.f32.gmra.mxu0 %v3714
        %v4545 = vpop.f32.mrf.mxu0
        %v4546 = vadd.f32 0.0, %v4545
        %4547 = vdwg.mxu0
        %4548 = vmatpush.msra.mxu0 %v4212
        %4549 = vmatpush.msra.mxu0 %v4180
        %4550 = vmatpush.msra.mxu0 %v4148
        %4551 = vmatpush.msra.mxu0 %v4116
        %4552 = vmatpush.msra.mxu0 %v4084
        %4553 = vmatpush.msra.mxu0 %v4052
        %4554 = vmatpush.msra.mxu0 %v4020
        %4555 = vmatpush.msra.mxu0 %v3988
        %4556 = vmatpush.msra.mxu0 %v3956
        %4557 = vmatpush.msra.mxu0 %v3924
        %4558 = vmatpush.msra.mxu0 %v3892
        %4559 = vmatpush.msra.mxu0 %v3860
        %4560 = vmatpush.msra.mxu0 %v3828
        %4561 = vmatpush.msra.mxu0 %v3796
        %4562 = vmatpush.msra.mxu0 %v3764
        %4563 = vmatpush.msra.mxu0 %v3732
        %4564 = vmatmul.f32.gmra.mxu0 %v3714
        %v4565 = vpop.f32.mrf.mxu0
        %v4566 = vadd.f32 0.0, %v4565
        %4567 = vdwg.mxu0
        %4568 = vmatpush.msra.mxu0 %v4213
        %4569 = vmatpush.msra.mxu0 %v4181
        %4570 = vmatpush.msra.mxu0 %v4149
        %4571 = vmatpush.msra.mxu0 %v4117
        %4572 = vmatpush.msra.mxu0 %v4085
        %4573 = vmatpush.msra.mxu0 %v4053
        %4574 = vmatpush.msra.mxu0 %v4021
        %4575 = vmatpush.msra.mxu0 %v3989
        %4576 = vmatpush.msra.mxu0 %v3957
        %4577 = vmatpush.msra.mxu0 %v3925
        %4578 = vmatpush.msra.mxu0 %v3893
        %4579 = vmatpush.msra.mxu0 %v3861
        %4580 = vmatpush.msra.mxu0 %v3829
        %4581 = vmatpush.msra.mxu0 %v3797
        %4582 = vmatpush.msra.mxu0 %v3765
        %4583 = vmatpush.msra.mxu0 %v3733
        %4584 = vmatmul.f32.gmra.mxu0 %v3714
        %v4585 = vpop.f32.mrf.mxu0
        %v4586 = vadd.f32 0.0, %v4585
        %4587 = vdwg.mxu0
        %4588 = vmatpush.msra.mxu0 %v4214
        %4589 = vmatpush.msra.mxu0 %v4182
        %4590 = vmatpush.msra.mxu0 %v4150
        %4591 = vmatpush.msra.mxu0 %v4118
        %4592 = vmatpush.msra.mxu0 %v4086
        %4593 = vmatpush.msra.mxu0 %v4054
        %4594 = vmatpush.msra.mxu0 %v4022
        %4595 = vmatpush.msra.mxu0 %v3990
        %4596 = vmatpush.msra.mxu0 %v3958
        %4597 = vmatpush.msra.mxu0 %v3926
        %4598 = vmatpush.msra.mxu0 %v3894
        %4599 = vmatpush.msra.mxu0 %v3862
        %4600 = vmatpush.msra.mxu0 %v3830
        %4601 = vmatpush.msra.mxu0 %v3798
        %4602 = vmatpush.msra.mxu0 %v3766
        %4603 = vmatpush.msra.mxu0 %v3734
        %4604 = vmatmul.f32.gmra.mxu0 %v3714
        %v4605 = vpop.f32.mrf.mxu0
        %v4606 = vadd.f32 0.0, %v4605
        %4607 = vdwg.mxu0
        %4608 = vmatpush.msra.mxu0 %v4215
        %4609 = vmatpush.msra.mxu0 %v4183
        %4610 = vmatpush.msra.mxu0 %v4151
        %4611 = vmatpush.msra.mxu0 %v4119
        %4612 = vmatpush.msra.mxu0 %v4087
        %4613 = vmatpush.msra.mxu0 %v4055
        %4614 = vmatpush.msra.mxu0 %v4023
        %4615 = vmatpush.msra.mxu0 %v3991
        %4616 = vmatpush.msra.mxu0 %v3959
        %4617 = vmatpush.msra.mxu0 %v3927
        %4618 = vmatpush.msra.mxu0 %v3895
        %4619 = vmatpush.msra.mxu0 %v3863
        %4620 = vmatpush.msra.mxu0 %v3831
        %4621 = vmatpush.msra.mxu0 %v3799
        %4622 = vmatpush.msra.mxu0 %v3767
        %4623 = vmatpush.msra.mxu0 %v3735
        %4624 = vmatmul.f32.gmra.mxu0 %v3714
        %v4625 = vpop.f32.mrf.mxu0
        %v4626 = vadd.f32 0.0, %v4625
        %4627 = vdwg.mxu0
        %4628 = vmatpush.msra.mxu0 %v4216
        %4629 = vmatpush.msra.mxu0 %v4184
        %4630 = vmatpush.msra.mxu0 %v4152
        %4631 = vmatpush.msra.mxu0 %v4120
        %4632 = vmatpush.msra.mxu0 %v4088
        %4633 = vmatpush.msra.mxu0 %v4056
        %4634 = vmatpush.msra.mxu0 %v4024
        %4635 = vmatpush.msra.mxu0 %v3992
        %4636 = vmatpush.msra.mxu0 %v3960
        %4637 = vmatpush.msra.mxu0 %v3928
        %4638 = vmatpush.msra.mxu0 %v3896
        %4639 = vmatpush.msra.mxu0 %v3864
        %4640 = vmatpush.msra.mxu0 %v3832
        %4641 = vmatpush.msra.mxu0 %v3800
        %4642 = vmatpush.msra.mxu0 %v3768
        %4643 = vmatpush.msra.mxu0 %v3736
        %4644 = vmatmul.f32.gmra.mxu0 %v3714
        %v4645 = vpop.f32.mrf.mxu0
        %v4646 = vadd.f32 0.0, %v4645
        %4647 = vdwg.mxu0
        %4648 = vmatpush.msra.mxu0 %v4217
        %4649 = vmatpush.msra.mxu0 %v4185
        %4650 = vmatpush.msra.mxu0 %v4153
        %4651 = vmatpush.msra.mxu0 %v4121
        %4652 = vmatpush.msra.mxu0 %v4089
        %4653 = vmatpush.msra.mxu0 %v4057
        %4654 = vmatpush.msra.mxu0 %v4025
        %4655 = vmatpush.msra.mxu0 %v3993
        %4656 = vmatpush.msra.mxu0 %v3961
        %4657 = vmatpush.msra.mxu0 %v3929
        %4658 = vmatpush.msra.mxu0 %v3897
        %4659 = vmatpush.msra.mxu0 %v3865
        %4660 = vmatpush.msra.mxu0 %v3833
        %4661 = vmatpush.msra.mxu0 %v3801
        %4662 = vmatpush.msra.mxu0 %v3769
        %4663 = vmatpush.msra.mxu0 %v3737
        %4664 = vmatmul.f32.gmra.mxu0 %v3714
        %v4665 = vpop.f32.mrf.mxu0
        %v4666 = vadd.f32 0.0, %v4665
        %4667 = vdwg.mxu0
        %4668 = vmatpush.msra.mxu0 %v4218
        %4669 = vmatpush.msra.mxu0 %v4186
        %4670 = vmatpush.msra.mxu0 %v4154
        %4671 = vmatpush.msra.mxu0 %v4122
        %4672 = vmatpush.msra.mxu0 %v4090
        %4673 = vmatpush.msra.mxu0 %v4058
        %4674 = vmatpush.msra.mxu0 %v4026
        %4675 = vmatpush.msra.mxu0 %v3994
        %4676 = vmatpush.msra.mxu0 %v3962
        %4677 = vmatpush.msra.mxu0 %v3930
        %4678 = vmatpush.msra.mxu0 %v3898
        %4679 = vmatpush.msra.mxu0 %v3866
        %4680 = vmatpush.msra.mxu0 %v3834
        %4681 = vmatpush.msra.mxu0 %v3802
        %4682 = vmatpush.msra.mxu0 %v3770
        %4683 = vmatpush.msra.mxu0 %v3738
        %4684 = vmatmul.f32.gmra.mxu0 %v3714
        %v4685 = vpop.f32.mrf.mxu0
        %v4686 = vadd.f32 0.0, %v4685
        %4687 = vdwg.mxu0
        %4688 = vmatpush.msra.mxu0 %v4219
        %4689 = vmatpush.msra.mxu0 %v4187
        %4690 = vmatpush.msra.mxu0 %v4155
        %4691 = vmatpush.msra.mxu0 %v4123
        %4692 = vmatpush.msra.mxu0 %v4091
        %4693 = vmatpush.msra.mxu0 %v4059
        %4694 = vmatpush.msra.mxu0 %v4027
        %4695 = vmatpush.msra.mxu0 %v3995
        %4696 = vmatpush.msra.mxu0 %v3963
        %4697 = vmatpush.msra.mxu0 %v3931
        %4698 = vmatpush.msra.mxu0 %v3899
        %4699 = vmatpush.msra.mxu0 %v3867
        %4700 = vmatpush.msra.mxu0 %v3835
        %4701 = vmatpush.msra.mxu0 %v3803
        %4702 = vmatpush.msra.mxu0 %v3771
        %4703 = vmatpush.msra.mxu0 %v3739
        %4704 = vmatmul.f32.gmra.mxu0 %v3714
        %v4705 = vpop.f32.mrf.mxu0
        %v4706 = vadd.f32 0.0, %v4705
        %4707 = vdwg.mxu0
        %4708 = vmatpush.msra.mxu0 %v4220
        %4709 = vmatpush.msra.mxu0 %v4188
        %4710 = vmatpush.msra.mxu0 %v4156
        %4711 = vmatpush.msra.mxu0 %v4124
        %4712 = vmatpush.msra.mxu0 %v4092
        %4713 = vmatpush.msra.mxu0 %v4060
        %4714 = vmatpush.msra.mxu0 %v4028
        %4715 = vmatpush.msra.mxu0 %v3996
        %4716 = vmatpush.msra.mxu0 %v3964
        %4717 = vmatpush.msra.mxu0 %v3932
        %4718 = vmatpush.msra.mxu0 %v3900
        %4719 = vmatpush.msra.mxu0 %v3868
        %4720 = vmatpush.msra.mxu0 %v3836
        %4721 = vmatpush.msra.mxu0 %v3804
        %4722 = vmatpush.msra.mxu0 %v3772
        %4723 = vmatpush.msra.mxu0 %v3740
        %4724 = vmatmul.f32.gmra.mxu0 %v3714
        %v4725 = vpop.f32.mrf.mxu0
        %v4726 = vadd.f32 0.0, %v4725
        %4727 = vdwg.mxu0
        %4728 = vmatpush.msra.mxu0 %v4221
        %4729 = vmatpush.msra.mxu0 %v4189
        %4730 = vmatpush.msra.mxu0 %v4157
        %4731 = vmatpush.msra.mxu0 %v4125
        %4732 = vmatpush.msra.mxu0 %v4093
        %4733 = vmatpush.msra.mxu0 %v4061
        %4734 = vmatpush.msra.mxu0 %v4029
        %4735 = vmatpush.msra.mxu0 %v3997
        %4736 = vmatpush.msra.mxu0 %v3965
        %4737 = vmatpush.msra.mxu0 %v3933
        %4738 = vmatpush.msra.mxu0 %v3901
        %4739 = vmatpush.msra.mxu0 %v3869
        %4740 = vmatpush.msra.mxu0 %v3837
        %4741 = vmatpush.msra.mxu0 %v3805
        %4742 = vmatpush.msra.mxu0 %v3773
        %4743 = vmatpush.msra.mxu0 %v3741
        %4744 = vmatmul.f32.gmra.mxu0 %v3714
        %v4745 = vpop.f32.mrf.mxu0
        %v4746 = vadd.f32 0.0, %v4745
        %4747 = vdwg.mxu0
        %4748 = vmatpush.msra.mxu0 %v4222
        %4749 = vmatpush.msra.mxu0 %v4190
        %4750 = vmatpush.msra.mxu0 %v4158
        %4751 = vmatpush.msra.mxu0 %v4126
        %4752 = vmatpush.msra.mxu0 %v4094
        %4753 = vmatpush.msra.mxu0 %v4062
        %4754 = vmatpush.msra.mxu0 %v4030
        %4755 = vmatpush.msra.mxu0 %v3998
        %4756 = vmatpush.msra.mxu0 %v3966
        %4757 = vmatpush.msra.mxu0 %v3934
        %4758 = vmatpush.msra.mxu0 %v3902
        %4759 = vmatpush.msra.mxu0 %v3870
        %4760 = vmatpush.msra.mxu0 %v3838
        %4761 = vmatpush.msra.mxu0 %v3806
        %4762 = vmatpush.msra.mxu0 %v3774
        %4763 = vmatpush.msra.mxu0 %v3742
        %4764 = vmatmul.f32.gmra.mxu0 %v3714
        %v4765 = vpop.f32.mrf.mxu0
        %v4766 = vadd.f32 0.0, %v4765
        %4767 = vdwg.mxu0
        %4768 = vmatpush.msra.mxu0 %v4223
        %4769 = vmatpush.msra.mxu0 %v4191
        %4770 = vmatpush.msra.mxu0 %v4159
        %4771 = vmatpush.msra.mxu0 %v4127
        %4772 = vmatpush.msra.mxu0 %v4095
        %4773 = vmatpush.msra.mxu0 %v4063
        %4774 = vmatpush.msra.mxu0 %v4031
        %4775 = vmatpush.msra.mxu0 %v3999
        %4776 = vmatpush.msra.mxu0 %v3967
        %4777 = vmatpush.msra.mxu0 %v3935
        %4778 = vmatpush.msra.mxu0 %v3903
        %4779 = vmatpush.msra.mxu0 %v3871
        %4780 = vmatpush.msra.mxu0 %v3839
        %4781 = vmatpush.msra.mxu0 %v3807
        %4782 = vmatpush.msra.mxu0 %v3775
        %4783 = vmatpush.msra.mxu0 %v3743
        %4784 = vmatmul.f32.gmra.mxu0 %v3714
        %v4785 = vpop.f32.mrf.mxu0
        %v4786 = vadd.f32 0.0, %v4785
        %4787 = vdwg.mxu0
        %4788 = vmatpush.msra.mxu0 %v4224
        %4789 = vmatpush.msra.mxu0 %v4192
        %4790 = vmatpush.msra.mxu0 %v4160
        %4791 = vmatpush.msra.mxu0 %v4128
        %4792 = vmatpush.msra.mxu0 %v4096
        %4793 = vmatpush.msra.mxu0 %v4064
        %4794 = vmatpush.msra.mxu0 %v4032
        %4795 = vmatpush.msra.mxu0 %v4000
        %4796 = vmatpush.msra.mxu0 %v3968
        %4797 = vmatpush.msra.mxu0 %v3936
        %4798 = vmatpush.msra.mxu0 %v3904
        %4799 = vmatpush.msra.mxu0 %v3872
        %4800 = vmatpush.msra.mxu0 %v3840
        %4801 = vmatpush.msra.mxu0 %v3808
        %4802 = vmatpush.msra.mxu0 %v3776
        %4803 = vmatpush.msra.mxu0 %v3744
        %4804 = vmatmul.f32.gmra.mxu0 %v3714
        %v4805 = vpop.f32.mrf.mxu0
        %v4806 = vadd.f32 0.0, %v4805
        %4807 = vdwg.mxu0
        %4808 = vmatpush.msra.mxu0 %v4225
        %4809 = vmatpush.msra.mxu0 %v4193
        %4810 = vmatpush.msra.mxu0 %v4161
        %4811 = vmatpush.msra.mxu0 %v4129
        %4812 = vmatpush.msra.mxu0 %v4097
        %4813 = vmatpush.msra.mxu0 %v4065
        %4814 = vmatpush.msra.mxu0 %v4033
        %4815 = vmatpush.msra.mxu0 %v4001
        %4816 = vmatpush.msra.mxu0 %v3969
        %4817 = vmatpush.msra.mxu0 %v3937
        %4818 = vmatpush.msra.mxu0 %v3905
        %4819 = vmatpush.msra.mxu0 %v3873
        %4820 = vmatpush.msra.mxu0 %v3841
        %4821 = vmatpush.msra.mxu0 %v3809
        %4822 = vmatpush.msra.mxu0 %v3777
        %4823 = vmatpush.msra.mxu0 %v3745
        %4824 = vmatmul.f32.gmra.mxu0 %v3714
        %v4825 = vpop.f32.mrf.mxu0
        %v4826 = vadd.f32 0.0, %v4825
        %4827 = vdwg.mxu0
        %4828 = vmatpush.msra.mxu0 %v4226
        %4829 = vmatpush.msra.mxu0 %v4194
        %4830 = vmatpush.msra.mxu0 %v4162
        %4831 = vmatpush.msra.mxu0 %v4130
        %4832 = vmatpush.msra.mxu0 %v4098
        %4833 = vmatpush.msra.mxu0 %v4066
        %4834 = vmatpush.msra.mxu0 %v4034
        %4835 = vmatpush.msra.mxu0 %v4002
        %4836 = vmatpush.msra.mxu0 %v3970
        %4837 = vmatpush.msra.mxu0 %v3938
        %4838 = vmatpush.msra.mxu0 %v3906
        %4839 = vmatpush.msra.mxu0 %v3874
        %4840 = vmatpush.msra.mxu0 %v3842
        %4841 = vmatpush.msra.mxu0 %v3810
        %4842 = vmatpush.msra.mxu0 %v3778
        %4843 = vmatpush.msra.mxu0 %v3746
        %4844 = vmatmul.f32.gmra.mxu0 %v3714
        %v4845 = vpop.f32.mrf.mxu0
        %v4846 = vadd.f32 0.0, %v4845
        %4847 = vdwg.mxu0
        %4848 = vmatpush.msra.mxu0 %v4227
        %4849 = vmatpush.msra.mxu0 %v4195
        %4850 = vmatpush.msra.mxu0 %v4163
        %4851 = vmatpush.msra.mxu0 %v4131
        %4852 = vmatpush.msra.mxu0 %v4099
        %4853 = vmatpush.msra.mxu0 %v4067
        %4854 = vmatpush.msra.mxu0 %v4035
        %4855 = vmatpush.msra.mxu0 %v4003
        %4856 = vmatpush.msra.mxu0 %v3971
        %4857 = vmatpush.msra.mxu0 %v3939
        %4858 = vmatpush.msra.mxu0 %v3907
        %4859 = vmatpush.msra.mxu0 %v3875
        %4860 = vmatpush.msra.mxu0 %v3843
        %4861 = vmatpush.msra.mxu0 %v3811
        %4862 = vmatpush.msra.mxu0 %v3779
        %4863 = vmatpush.msra.mxu0 %v3747
        %4864 = vmatmul.f32.gmra.mxu0 %v3714
        %v4865 = vpop.f32.mrf.mxu0
        %v4866 = vadd.f32 0.0, %v4865
        %4867 = vdwg.mxu0
        %v4868 = vadd.f32 %v3681, %v4246
        %v4869 = vadd.f32 %v3682, %v4266
        %v4870 = vadd.f32 %v3683, %v4286
        %v4871 = vadd.f32 %v3684, %v4306
        %v4872 = vadd.f32 %v3685, %v4326
        %v4873 = vadd.f32 %v3686, %v4346
        %v4874 = vadd.f32 %v3687, %v4366
        %v4875 = vadd.f32 %v3688, %v4386
        %v4876 = vadd.f32 %v3689, %v4406
        %v4877 = vadd.f32 %v3690, %v4426
        %v4878 = vadd.f32 %v3691, %v4446
        %v4879 = vadd.f32 %v3692, %v4466
        %v4880 = vadd.f32 %v3693, %v4486
        %v4881 = vadd.f32 %v3694, %v4506
        %v4882 = vadd.f32 %v3695, %v4526
        %v4883 = vadd.f32 %v3696, %v4546
        %v4884 = vadd.f32 %v3697, %v4566
        %v4885 = vadd.f32 %v3698, %v4586
        %v4886 = vadd.f32 %v3699, %v4606
        %v4887 = vadd.f32 %v3700, %v4626
        %v4888 = vadd.f32 %v3701, %v4646
        %v4889 = vadd.f32 %v3702, %v4666
        %v4890 = vadd.f32 %v3703, %v4686
        %v4891 = vadd.f32 %v3704, %v4706
        %v4892 = vadd.f32 %v3705, %v4726
        %v4893 = vadd.f32 %v3706, %v4746
        %v4894 = vadd.f32 %v3707, %v4766
        %v4895 = vadd.f32 %v3708, %v4786
        %v4896 = vadd.f32 %v3709, %v4806
        %v4897 = vadd.f32 %v3710, %v4826
        %v4898 = vadd.f32 %v3711, %v4846
        %v4899 = vadd.f32 %v3712, %v4866
        %s4900 = sld [smem:[#allocation2]]
        %v4901 = vstv %s4900
        %v4902 = vadd.f32 %v4868, %v4901
        %v4903 = vadd.f32 %v4869, %v4901
        %v4904 = vadd.f32 %v4870, %v4901
        %v4905 = vadd.f32 %v4871, %v4901
        %v4910 = vrot.slane %v4903, 6
        %v4911 = vrot.slane %v4904, 4
        %v4912 = vrot.slane %v4905, 2
        %vm4913 = vcmask 1041408
        %v4914 = vsel %vm4913, %v4902, %v4910
        %vm4915 = vcmask 1045508
        %v4916 = vsel %vm4915, %v4911, %v4912
        %vm4917 = vcmask 1043456
        %v4918 = vsel %vm4917, %v4914, %v4916
        %4920 = vst [vmem:[%s217] sm:$0xff] %v4918
        %s4921 = sld [smem:[#allocation2 + $0x1]]
        %v4922 = vstv %s4921
        %v4923 = vadd.f32 %v4872, %v4922
        %v4924 = vadd.f32 %v4873, %v4922
        %v4925 = vadd.f32 %v4874, %v4922
        %v4926 = vadd.f32 %v4875, %v4922
        %v4931 = vrot.slane %v4924, 6
        %v4932 = vrot.slane %v4925, 4
        %v4933 = vrot.slane %v4926, 2
        %v4934 = vsel %vm4913, %v4923, %v4931
        %v4935 = vsel %vm4915, %v4932, %v4933
        %v4936 = vsel %vm4917, %v4934, %v4935
        %s4938 = scalar_lea.vmem %s217, 8
        %4939 = vst [vmem:[%s4938] sm:$0xff] %v4936
        %s4940 = sld [smem:[#allocation2 + $0x2]]
        %v4941 = vstv %s4940
        %v4942 = vadd.f32 %v4876, %v4941
        %v4943 = vadd.f32 %v4877, %v4941
        %v4944 = vadd.f32 %v4878, %v4941
        %v4945 = vadd.f32 %v4879, %v4941
        %v4950 = vrot.slane %v4943, 6
        %v4951 = vrot.slane %v4944, 4
        %v4952 = vrot.slane %v4945, 2
        %v4953 = vsel %vm4913, %v4942, %v4950
        %v4954 = vsel %vm4915, %v4951, %v4952
        %v4955 = vsel %vm4917, %v4953, %v4954
        %s4957 = scalar_lea.vmem %s217, 16
        %4958 = vst [vmem:[%s4957] sm:$0xff] %v4955
        %s4959 = sld [smem:[#allocation2 + $0x3]]
        %v4960 = vstv %s4959
        %v4961 = vadd.f32 %v4880, %v4960
        %v4962 = vadd.f32 %v4881, %v4960
        %v4963 = vadd.f32 %v4882, %v4960
        %v4964 = vadd.f32 %v4883, %v4960
        %v4969 = vrot.slane %v4962, 6
        %v4970 = vrot.slane %v4963, 4
        %v4971 = vrot.slane %v4964, 2
        %v4972 = vsel %vm4913, %v4961, %v4969
        %v4973 = vsel %vm4915, %v4970, %v4971
        %v4974 = vsel %vm4917, %v4972, %v4973
        %s4976 = scalar_lea.vmem %s217, 24
        %4977 = vst [vmem:[%s4976] sm:$0xff] %v4974
        %s4978 = sld [smem:[#allocation2 + $0x4]]
        %v4979 = vstv %s4978
        %v4980 = vadd.f32 %v4884, %v4979
        %v4981 = vadd.f32 %v4885, %v4979
        %v4982 = vadd.f32 %v4886, %v4979
        %v4983 = vadd.f32 %v4887, %v4979
        %v4988 = vrot.slane %v4981, 6
        %v4989 = vrot.slane %v4982, 4
        %v4990 = vrot.slane %v4983, 2
        %v4991 = vsel %vm4913, %v4980, %v4988
        %v4992 = vsel %vm4915, %v4989, %v4990
        %v4993 = vsel %vm4917, %v4991, %v4992
        %s4995 = scalar_lea.vmem %s217, 32
        %4996 = vst [vmem:[%s4995] sm:$0xff] %v4993
        %s4997 = sld [smem:[#allocation2 + $0x5]]
        %v4998 = vstv %s4997
        %v4999 = vadd.f32 %v4888, %v4998
        %v5000 = vadd.f32 %v4889, %v4998
        %v5001 = vadd.f32 %v4890, %v4998
        %v5002 = vadd.f32 %v4891, %v4998
        %v5007 = vrot.slane %v5000, 6
        %v5008 = vrot.slane %v5001, 4
        %v5009 = vrot.slane %v5002, 2
        %v5010 = vsel %vm4913, %v4999, %v5007
        %v5011 = vsel %vm4915, %v5008, %v5009
        %v5012 = vsel %vm4917, %v5010, %v5011
        %s5014 = scalar_lea.vmem %s217, 40
        %5015 = vst [vmem:[%s5014] sm:$0xff] %v5012
        %s5016 = sld [smem:[#allocation2 + $0x6]]
        %v5017 = vstv %s5016
        %v5018 = vadd.f32 %v4892, %v5017
        %v5019 = vadd.f32 %v4893, %v5017
        %v5020 = vadd.f32 %v4894, %v5017
        %v5021 = vadd.f32 %v4895, %v5017
        %v5026 = vrot.slane %v5019, 6
        %v5027 = vrot.slane %v5020, 4
        %v5028 = vrot.slane %v5021, 2
        %v5029 = vsel %vm4913, %v5018, %v5026
        %v5030 = vsel %vm4915, %v5027, %v5028
        %v5031 = vsel %vm4917, %v5029, %v5030
        %s5033 = scalar_lea.vmem %s217, 48
        %5034 = vst [vmem:[%s5033] sm:$0xff] %v5031
        %s5035 = sld [smem:[#allocation2 + $0x7]]
        %v5036 = vstv %s5035
        %v5037 = vadd.f32 %v4896, %v5036
        %v5038 = vadd.f32 %v4897, %v5036
        %v5039 = vadd.f32 %v4898, %v5036
        %v5040 = vadd.f32 %v4899, %v5036
        %v5045 = vrot.slane %v5038, 6
        %v5046 = vrot.slane %v5039, 4
        %v5047 = vrot.slane %v5040, 2
        %v5048 = vsel %vm4913, %v5037, %v5045
        %v5049 = vsel %vm4915, %v5046, %v5047
        %v5050 = vsel %vm4917, %v5048, %v5049
        %s5052 = scalar_lea.vmem %s217, 56
        %5053 = vst [vmem:[%s5052] sm:$0xff] %v5050
        %p5054 = scmp.lt.s32.totalorder %s19, 1
        %s5055 = scalar_select %p5054, %s19, 1
        %p5056 = scmp.lt.s32.totalorder %s20, 0
        %s5057 = scalar_select %p5056, %s20, 0
        %s5058 = smul.addr %s5057, 4
        %s5059 = smul.addr %s5055, 32
        %s5060 = sadd.s32 %s5058, %s5059
        %s5061 = smul.addr %s5060, 2
        %s5062 = scalar_lea.vmem %s3, %s5061
        // Predicated region
        $region37: #{single_deconv2d_block.1} parent=31 // pred_check
          %p5063 = pneg %p117
        $region38: #{single_deconv2d_block.1} parent=31 // pred_check_branch
          %5065 = sbr.rel (%p5063) target = $region40
        $region39: #{single_deconv2d_block.1} parent=31 // pred_region
          _
        $region40: #{single_deconv2d_block.1} parent=31 // pred_fallthru
          _
      $region32: #{single_deconv2d_block.1} parent=5 // pred_fallthru
        _
      %p5066 = scmp.le.s32.totalorder 2, %s10
      // Predicated region
      $region41: #{single_deconv2d_block.1} parent=5 // pred_check
        %p5067 = pneg %p5066
      $region42: #{single_deconv2d_block.1} parent=5 // pred_check_branch
        %5069 = sbr.rel (%p5067) target = $region44
      $region43: #{single_deconv2d_block.1} parent=5 // pred_region
        %s5070 = ssub.s32 %s10, 2
        // Predicated region
        $region45: #{single_deconv2d_block.1} parent=43 // pred_check
          %p5071 = pneg %p123
        $region46: #{single_deconv2d_block.1} parent=43 // pred_check_branch
          %5073 = sbr.rel (%p5071) target = $region48
        $region47: #{single_deconv2d_block.1} parent=43 // pred_region
          %p5074 = scmp.lt.s32.totalorder %s21, 1
          %s5075 = scalar_select %p5074, %s21, 1
          %p5076 = scmp.lt.s32.totalorder %s22, 0
          %s5077 = scalar_select %p5076, %s22, 0
          %s5078 = smul.addr %s5077, 4
          %s5079 = smul.addr %s5075, 32
          %s5080 = sadd.s32 %s5078, %s5079
          %s5081 = smul.addr %s5080, 2
          %s5082 = scalar_lea.vmem %s3, %s5081
        $region48: #{single_deconv2d_block.1} parent=43 // pred_fallthru
          _
      $region44: #{single_deconv2d_block.1} parent=5 // pred_fallthru
        _
    $region6: #{single_deconv2d_block.1} parent=1 // loop_footer
      %s14 = sadd.s32 1, %s10
    $region7: #{single_deconv2d_block.1} parent=1 // loop_footer_branch
      %9 = sbr.rel target = $region3
    $region8: #{single_deconv2d_block.1} parent=1 // loop_exit
      _
    %5083 = vsyncpa [#allocation3], 1
    %s5084 = scalar_lea.sflag [#allocation3], 1
    %5085 = vsyncpa %s5084, 1

</llo_original>
